<compile_context>
chip_gen: v7x
topology: tpu7x:2x2x1
jax: 0.10.0
libtpu: 0.0.40
codegen_flags: <defaults>
</compile_context>

<pallas_src>
import jax
import jax.numpy as jnp
from jax.experimental import pallas as pl
from jax.experimental.pallas import tpu as pltpu

# ---- model sizes (scaled-down but structure-identical to TinyModel) ----
D = 128          # img_feat_size == txt_feat_size
K = 8            # fusion K (pooling window)
O = 128          # fusion O (output feature size of fusion)
KO = K * O       # projection width inside fusion
H = 128          # linear2 output
C = 2            # linear3 output (num classes)
CLS_PAD = 128    # lane-dense padded width for the cls output
P = 768          # proj output

TB = 256         # default batch-tile rows per grid step (safe on v5e; 512 ok on v6e/v7x)


def tiny_model_kernel(x_ref, y_ref,
                      wi_ref, bi_ref, wt_ref, bt_ref,
                      w23_ref, b23_ref, wp_ref, bp_ref,
                      cls_ref, proj_ref):
    # fusion.proj_i / proj_t: bf16 x bf16 MXU matmuls with f32 accumulation.
    xb = x_ref[...].astype(jnp.bfloat16)
    yb = y_ref[...].astype(jnp.bfloat16)
    img = jnp.dot(xb, wi_ref[...], preferred_element_type=jnp.float32) + bi_ref[...]
    txt = jnp.dot(yb, wt_ref[...], preferred_element_type=jnp.float32) + bt_ref[...]

    # Elementwise bilinear interaction fused with the sum-pool.
    # TODO(synk): nn.Dropout is identity in eval/inference mode; no RNG applied here.
    # AvgPool1d(K, stride=K) * K == sum over pool groups. Weight columns were
    # pre-permuted offline to layout j = k*O + o, so each group member is one
    # contiguous 128-lane block: no (TB, KO) temporary, just VPU mul/add per block.
    z = img[:, 0:O] * txt[:, 0:O]
    for k in range(1, K):
        z = z + img[:, k * O:(k + 1) * O] * txt[:, k * O:(k + 1) * O]

    # F.normalize (L2 over feature dim, eps=1e-12): rsqrt runs on the EUP slot.
    ss = jnp.sum(z * z, axis=-1, keepdims=True)
    m_ = z * jax.lax.rsqrt(jnp.maximum(ss, 1e-24))

    # Cast the small activations to bf16 so the tail matmuls use the bf16 MXU path
    # against the resident bf16 weights (f32 accumulation kept).
    m_b = m_.astype(jnp.bfloat16)                       # for proj
    m_relu_b = jnp.maximum(m_, 0.0).astype(jnp.bfloat16)  # ReLU, for fused linear2∘linear3

    # (linear3 ∘ linear2) folded offline into w23/b23, padded to 128 lanes so the cls
    # store is lane-dense; the wrapper slices [:, :C]. (Outputs kept f32; a bf16 cls
    # slab would halve its HBM write if a consumer tolerates the rounding.)
    cls_ref[...] = jnp.dot(m_relu_b, w23_ref[...],
                           preferred_element_type=jnp.float32) + b23_ref[...]

    # proj(m_)
    proj_ref[...] = jnp.dot(m_b, wp_ref[...],
                            preferred_element_type=jnp.float32) + bp_ref[...]


def make_params(key):
    """Canonical (PyTorch-layout) parameters. Weights stored (in, out) in bf16,
    biases as (1, out) f32 rows."""
    ks = jax.random.split(key, 5)

    def lin(k, fan_in, fan_out):
        kw, kb = jax.random.split(k)
        bound = 1.0 / jnp.sqrt(fan_in)
        w = jax.random.uniform(kw, (fan_in, fan_out), jnp.float32, -bound, bound)
        b = jax.random.uniform(kb, (1, fan_out), jnp.float32, -bound, bound)
        return w.astype(jnp.bfloat16), b

    wi, bi = lin(ks[0], D, KO)   # fusion.proj_i
    wt, bt = lin(ks[1], D, KO)   # fusion.proj_t
    w2, b2 = lin(ks[2], O, H)    # linear2
    w3, b3 = lin(ks[3], H, C)    # linear3
    wp, bp = lin(ks[4], O, P)    # proj
    return dict(wi=wi, bi=bi, wt=wt, bt=bt, w2=w2, b2=b2,
                w3=w3, b3=b3, wp=wp, bp=bp)


def prepare_kernel_params(params):
    """One-time offline prep for the kernel:
    - permute fusion columns from o*K + k (AvgPool-consecutive layout) to k*O + o so
      pooling is a sum of K contiguous 128-lane blocks,
    - compose linear2 ∘ linear3 (no nonlinearity between them) into a single bf16
      weight padded to a lane-dense 128-wide output; extra columns/bias are zero.
    TODO(synk): on v7x, wi/wt/wp could additionally be stored in fp8 with
    per-output-channel scales (v5e/v6e MXUs do not take fp8)."""
    HP = jax.lax.Precision.HIGHEST
    perm = (jnp.arange(KO) % O) * K + (jnp.arange(KO) // O)
    wi = params["wi"][:, perm]
    bi = params["bi"][:, perm]
    wt = params["wt"][:, perm]
    bt = params["bt"][:, perm]

    w3p = jnp.zeros((H, CLS_PAD), jnp.float32).at[:, :C].set(
        params["w3"].astype(jnp.float32))
    b3p = jnp.zeros((1, CLS_PAD), jnp.float32).at[:, :C].set(params["b3"])
    w23 = jnp.dot(params["w2"].astype(jnp.float32), w3p,
                  precision=HP).astype(jnp.bfloat16)
    b23 = jnp.dot(params["b2"], w3p, precision=HP) + b3p

    return (wi, bi, wt, bt, w23, b23, params["wp"], params["bp"])


def _round_up(n, m):
    return ((n + m - 1) // m) * m


def tiny_model_forward(x, y, kparams, *, tb=None):
    """x, y: (B, D) float32. Returns (cls (B, C), proj (B, P)) in float32.

    tb=None picks a tile automatically:
      * small batches are padded only to a multiple of 8 (not a full default tile),
      * batches that fit one default tile are split into two tiles so the
        ("parallel",) grid can shard across both v7x TensorCores,
      * otherwise TB (=256) rows per tile; pass tb=512 on v6e/v7x for more DMA
        amortization (v5e's 16 MiB default scoped VMEM prefers <=256)."""
    b = x.shape[0]
    if tb is None:
        bp8 = _round_up(b, 8)
        if bp8 <= 8:
            tb = 8
        elif bp8 <= TB:
            tb = _round_up((bp8 + 1) // 2, 8)
        else:
            tb = TB
    bpad = _round_up(b, tb)
    if bpad != b:
        x = jnp.pad(x, ((0, bpad - b), (0, 0)))
        y = jnp.pad(y, ((0, bpad - b), (0, 0)))
    wi, bi, wt, bt, w23, b23, wp, bp = kparams

    row_spec = pl.BlockSpec((tb, D), lambda i: (i, 0))

    def const(a):  # weights/biases: same block every grid step -> fetched once, resident
        return pl.BlockSpec(a.shape, lambda i: (0, 0))

    cls_pad, proj = pl.pallas_call(
        tiny_model_kernel,
        grid=(bpad // tb,),
        out_shape=(jax.ShapeDtypeStruct((bpad, CLS_PAD), jnp.float32),
                   jax.ShapeDtypeStruct((bpad, P), jnp.float32)),
        in_specs=[row_spec, row_spec,
                  const(wi), const(bi), const(wt), const(bt),
                  const(w23), const(b23), const(wp), const(bp)],
        out_specs=(pl.BlockSpec((tb, CLS_PAD), lambda i: (i, 0)),
                   pl.BlockSpec((tb, P), lambda i: (i, 0))),
        compiler_params=pltpu.CompilerParams(
            dimension_semantics=("parallel",)),
    )(x, y, wi, bi, wt, bt, w23, b23, wp, bp)

    return cls_pad[:b, :C], proj[:b]


def reference_forward(x, y, params):
    """Pure-JAX reference mirroring the PyTorch graph (canonical column layout,
    separate linear2/linear3). Uses the same bf16-quantized weights and bf16-rounded
    MXU inputs (x, y, m, m_) as the kernel so the comparison isolates kernel
    correctness; the only remaining deltas are the offline W2·W3 composition rounding
    and accumulation order (both << 1e-3)."""
    HP = jax.lax.Precision.HIGHEST
    f32 = jnp.float32
    q = lambda a: a.astype(jnp.bfloat16).astype(f32)   # bf16 rounding at MXU inputs
    wi, wt = params["wi"].astype(f32), params["wt"].astype(f32)
    w2, w3, wp = (params["w2"].astype(f32), params["w3"].astype(f32),
                  params["wp"].astype(f32))
    bi, bt, b2, b3, bp = (params["bi"], params["bt"], params["b2"],
                          params["b3"], params["bp"])

    img = jnp.dot(q(x), wi, precision=HP) + bi
    txt = jnp.dot(q(y), wt, precision=HP) + bt
    ex = img * txt
    z = ex.reshape(x.shape[0], O, K).sum(axis=-1)        # AvgPool1d(K) * K
    nrm = jnp.sqrt(jnp.sum(z * z, axis=-1, keepdims=True))
    m_ = z / jnp.maximum(nrm, 1e-12)                     # F.normalize
    m = jnp.maximum(m_, 0.0)
    cls = jnp.dot(jnp.dot(q(m), w2, precision=HP) + b2, w3, precision=HP) + b3
    proj = jnp.dot(q(m_), wp, precision=HP) + bp
    return cls, proj


if __name__ == "__main__":
    key = jax.random.PRNGKey(0)
    kx, ky, kp = jax.random.split(key, 3)

    params = make_params(kp)
    kparams = prepare_kernel_params(params)

    Btot = 256   # auto tb -> 128-row tiles, grid of 2 (both TCs on v7x get work)
    x = jax.random.normal(kx, (Btot, D), jnp.float32)
    y = jax.random.normal(ky, (Btot, D), jnp.float32)

    cls_out, proj_out = tiny_model_forward(x, y, kparams)
    jax.block_until_ready((cls_out, proj_out))

    cls_ref, proj_ref = reference_forward(x, y, params)
    assert cls_out.shape == (Btot, C) and proj_out.shape == (Btot, P)
    assert jnp.allclose(cls_out, cls_ref, atol=1e-3, rtol=1e-3)
    assert jnp.allclose(proj_out, proj_ref, atol=1e-3, rtol=1e-3)

    # Original module batch size (4): small-batch path pads to an 8-row tile
    # (not a full 128/256-row tile), cutting wasted compute/DMA ~16-32x.
    cls4, proj4 = tiny_model_forward(x[:4], y[:4], kparams)
    jax.block_until_ready((cls4, proj4))
    assert cls4.shape == (4, C) and proj4.shape == (4, P)
    assert jnp.allclose(cls4, cls_ref[:4], atol=1e-3, rtol=1e-3)
    assert jnp.allclose(proj4, proj_ref[:4], atol=1e-3, rtol=1e-3)

    print("KERNEL_OK")
</pallas_src>

<mosaic_0001>
module attributes {stable_mosaic.version = 11 : i64} {
  func.func @tiny_model_kernel(%arg0: i32, %arg1: memref<128x128xf32, #tpu.memory_space<vmem>>, %arg2: memref<128x128xf32, #tpu.memory_space<vmem>>, %arg3: memref<128x1024xbf16, #tpu.memory_space<vmem>>, %arg4: memref<1x1024xf32, #tpu.memory_space<vmem>>, %arg5: memref<128x1024xbf16, #tpu.memory_space<vmem>>, %arg6: memref<1x1024xf32, #tpu.memory_space<vmem>>, %arg7: memref<128x128xbf16, #tpu.memory_space<vmem>>, %arg8: memref<1x128xf32, #tpu.memory_space<vmem>>, %arg9: memref<128x768xbf16, #tpu.memory_space<vmem>>, %arg10: memref<1x768xf32, #tpu.memory_space<vmem>>, %arg11: memref<128x128xf32, #tpu.memory_space<vmem>>, %arg12: memref<128x768xf32, #tpu.memory_space<vmem>>) attributes {dimension_semantics = [#tpu.dimension_semantics<parallel>], iteration_bounds = array<i64: 2>, scalar_prefetch = 0 : i64, scratch_operands = 0 : i64, tpu.core_type = #tpu.core_type<tc>, window_params = [{transform_indices = @transform_0, window_bounds = array<i64: 128, 128>}, {transform_indices = @transform_1, window_bounds = array<i64: 128, 128>}, {pipeline_mode = #tpu.pipeline_mode<synchronous>, transform_indices = @transform_2, window_bounds = array<i64: 128, 1024>}, {pipeline_mode = #tpu.pipeline_mode<synchronous>, transform_indices = @transform_3, window_bounds = array<i64: 1, 1024>}, {pipeline_mode = #tpu.pipeline_mode<synchronous>, transform_indices = @transform_4, window_bounds = array<i64: 128, 1024>}, {pipeline_mode = #tpu.pipeline_mode<synchronous>, transform_indices = @transform_5, window_bounds = array<i64: 1, 1024>}, {pipeline_mode = #tpu.pipeline_mode<synchronous>, transform_indices = @transform_6, window_bounds = array<i64: 128, 128>}, {pipeline_mode = #tpu.pipeline_mode<synchronous>, transform_indices = @transform_7, window_bounds = array<i64: 1, 128>}, {pipeline_mode = #tpu.pipeline_mode<synchronous>, transform_indices = @transform_8, window_bounds = array<i64: 128, 768>}, {pipeline_mode = #tpu.pipeline_mode<synchronous>, transform_indices = @transform_9, window_bounds = array<i64: 1, 768>}, {transform_indices = @transform_10, window_bounds = array<i64: 128, 128>}, {transform_indices = @transform_11, window_bounds = array<i64: 128, 768>}]} {
    %c0 = arith.constant 0 : index
    %c0_0 = arith.constant 0 : index
    %0 = vector.load %arg1[%c0, %c0_0] : memref<128x128xf32, #tpu.memory_space<vmem>>, vector<128x128xf32>
    %1 = arith.truncf %0 : vector<128x128xf32> to vector<128x128xbf16>
    %c0_1 = arith.constant 0 : index
    %c0_2 = arith.constant 0 : index
    %2 = vector.load %arg2[%c0_1, %c0_2] : memref<128x128xf32, #tpu.memory_space<vmem>>, vector<128x128xf32>
    %3 = arith.truncf %2 : vector<128x128xf32> to vector<128x128xbf16>
    %c0_3 = arith.constant 0 : index
    %c0_4 = arith.constant 0 : index
    %4 = vector.load %arg3[%c0_3, %c0_4] : memref<128x1024xbf16, #tpu.memory_space<vmem>>, vector<128x1024xbf16>
    %cst = arith.constant dense<0.000000e+00> : vector<128x1024xf32>
    %5 = tpu.matmul %1, %4, %cst {dimension_numbers = #tpu.dot_dimension_numbers<[1], [0], [0], [1], [0, 0, 1, 1], [], []>} : vector<128x128xbf16>, vector<128x1024xbf16>, vector<128x1024xf32> -> vector<128x1024xf32>
    %c0_5 = arith.constant 0 : index
    %c0_6 = arith.constant 0 : index
    %6 = vector.load %arg4[%c0_5, %c0_6] : memref<1x1024xf32, #tpu.memory_space<vmem>>, vector<1x1024xf32>
    %7 = vector.broadcast %6 : vector<1x1024xf32> to vector<128x1024xf32>
    %8 = arith.addf %5, %7 : vector<128x1024xf32>
    %c0_7 = arith.constant 0 : index
    %c0_8 = arith.constant 0 : index
    %9 = vector.load %arg5[%c0_7, %c0_8] : memref<128x1024xbf16, #tpu.memory_space<vmem>>, vector<128x1024xbf16>
    %cst_9 = arith.constant dense<0.000000e+00> : vector<128x1024xf32>
    %10 = tpu.matmul %3, %9, %cst_9 {dimension_numbers = #tpu.dot_dimension_numbers<[1], [0], [0], [1], [0, 0, 1, 1], [], []>} : vector<128x128xbf16>, vector<128x1024xbf16>, vector<128x1024xf32> -> vector<128x1024xf32>
    %c0_10 = arith.constant 0 : index
    %c0_11 = arith.constant 0 : index
    %11 = vector.load %arg6[%c0_10, %c0_11] : memref<1x1024xf32, #tpu.memory_space<vmem>>, vector<1x1024xf32>
    %12 = vector.broadcast %11 : vector<1x1024xf32> to vector<128x1024xf32>
    %13 = arith.addf %10, %12 : vector<128x1024xf32>
    %14 = vector.extract_strided_slice %8 {offsets = [0, 0], sizes = [128, 128], strides = [1, 1]} : vector<128x1024xf32> to vector<128x128xf32>
    %15 = vector.extract_strided_slice %13 {offsets = [0, 0], sizes = [128, 128], strides = [1, 1]} : vector<128x1024xf32> to vector<128x128xf32>
    %16 = arith.mulf %14, %15 : vector<128x128xf32>
    %17 = vector.extract_strided_slice %8 {offsets = [0, 128], sizes = [128, 128], strides = [1, 1]} : vector<128x1024xf32> to vector<128x128xf32>
    %18 = vector.extract_strided_slice %13 {offsets = [0, 128], sizes = [128, 128], strides = [1, 1]} : vector<128x1024xf32> to vector<128x128xf32>
    %19 = arith.mulf %17, %18 : vector<128x128xf32>
    %20 = arith.addf %16, %19 : vector<128x128xf32>
    %21 = vector.extract_strided_slice %8 {offsets = [0, 256], sizes = [128, 128], strides = [1, 1]} : vector<128x1024xf32> to vector<128x128xf32>
    %22 = vector.extract_strided_slice %13 {offsets = [0, 256], sizes = [128, 128], strides = [1, 1]} : vector<128x1024xf32> to vector<128x128xf32>
    %23 = arith.mulf %21, %22 : vector<128x128xf32>
    %24 = arith.addf %20, %23 : vector<128x128xf32>
    %25 = vector.extract_strided_slice %8 {offsets = [0, 384], sizes = [128, 128], strides = [1, 1]} : vector<128x1024xf32> to vector<128x128xf32>
    %26 = vector.extract_strided_slice %13 {offsets = [0, 384], sizes = [128, 128], strides = [1, 1]} : vector<128x1024xf32> to vector<128x128xf32>
    %27 = arith.mulf %25, %26 : vector<128x128xf32>
    %28 = arith.addf %24, %27 : vector<128x128xf32>
    %29 = vector.extract_strided_slice %8 {offsets = [0, 512], sizes = [128, 128], strides = [1, 1]} : vector<128x1024xf32> to vector<128x128xf32>
    %30 = vector.extract_strided_slice %13 {offsets = [0, 512], sizes = [128, 128], strides = [1, 1]} : vector<128x1024xf32> to vector<128x128xf32>
    %31 = arith.mulf %29, %30 : vector<128x128xf32>
    %32 = arith.addf %28, %31 : vector<128x128xf32>
    %33 = vector.extract_strided_slice %8 {offsets = [0, 640], sizes = [128, 128], strides = [1, 1]} : vector<128x1024xf32> to vector<128x128xf32>
    %34 = vector.extract_strided_slice %13 {offsets = [0, 640], sizes = [128, 128], strides = [1, 1]} : vector<128x1024xf32> to vector<128x128xf32>
    %35 = arith.mulf %33, %34 : vector<128x128xf32>
    %36 = arith.addf %32, %35 : vector<128x128xf32>
    %37 = vector.extract_strided_slice %8 {offsets = [0, 768], sizes = [128, 128], strides = [1, 1]} : vector<128x1024xf32> to vector<128x128xf32>
    %38 = vector.extract_strided_slice %13 {offsets = [0, 768], sizes = [128, 128], strides = [1, 1]} : vector<128x1024xf32> to vector<128x128xf32>
    %39 = arith.mulf %37, %38 : vector<128x128xf32>
    %40 = arith.addf %36, %39 : vector<128x128xf32>
    %41 = vector.extract_strided_slice %8 {offsets = [0, 896], sizes = [128, 128], strides = [1, 1]} : vector<128x1024xf32> to vector<128x128xf32>
    %42 = vector.extract_strided_slice %13 {offsets = [0, 896], sizes = [128, 128], strides = [1, 1]} : vector<128x1024xf32> to vector<128x128xf32>
    %43 = arith.mulf %41, %42 : vector<128x128xf32>
    %44 = arith.addf %40, %43 : vector<128x128xf32>
    %45 = arith.mulf %44, %44 : vector<128x128xf32>
    %cst_12 = arith.constant dense<0.000000e+00> : vector<128xf32>
    %46 = vector.multi_reduction <add>, %45, %cst_12 [1] : vector<128x128xf32> to vector<128xf32>
    %47 = vector.shape_cast %46 : vector<128xf32> to vector<128x1xf32>
    %cst_13 = arith.constant 1.000000e-24 : f32
    %48 = vector.broadcast %cst_13 : f32 to vector<128x1xf32>
    %49 = arith.maximumf %47, %48 : vector<128x1xf32>
    %50 = math.rsqrt %49 : vector<128x1xf32>
    %51 = vector.broadcast %50 : vector<128x1xf32> to vector<128x128xf32>
    %52 = arith.mulf %44, %51 : vector<128x128xf32>
    %53 = arith.truncf %52 : vector<128x128xf32> to vector<128x128xbf16>
    %cst_14 = arith.constant 0.000000e+00 : f32
    %54 = vector.broadcast %cst_14 : f32 to vector<128x128xf32>
    %55 = arith.maximumf %52, %54 : vector<128x128xf32>
    %56 = arith.truncf %55 : vector<128x128xf32> to vector<128x128xbf16>
    %c0_15 = arith.constant 0 : index
    %c0_16 = arith.constant 0 : index
    %57 = vector.load %arg7[%c0_15, %c0_16] : memref<128x128xbf16, #tpu.memory_space<vmem>>, vector<128x128xbf16>
    %cst_17 = arith.constant dense<0.000000e+00> : vector<128x128xf32>
    %58 = tpu.matmul %56, %57, %cst_17 {dimension_numbers = #tpu.dot_dimension_numbers<[1], [0], [0], [1], [0, 0, 1, 1], [], []>} : vector<128x128xbf16>, vector<128x128xbf16>, vector<128x128xf32> -> vector<128x128xf32>
    %c0_18 = arith.constant 0 : index
    %c0_19 = arith.constant 0 : index
    %59 = vector.load %arg8[%c0_18, %c0_19] : memref<1x128xf32, #tpu.memory_space<vmem>>, vector<1x128xf32>
    %60 = vector.broadcast %59 : vector<1x128xf32> to vector<128x128xf32>
    %61 = arith.addf %58, %60 : vector<128x128xf32>
    %c0_20 = arith.constant 0 : index
    %c0_21 = arith.constant 0 : index
    %62 = vector.load %arg11[%c0_20, %c0_21] : memref<128x128xf32, #tpu.memory_space<vmem>>, vector<128x128xf32>
    tpu.vector_store %arg11[%c0_20, %c0_21], %61 {strides = array<i32>} : memref<128x128xf32, #tpu.memory_space<vmem>>, vector<128x128xf32>,
    %c0_22 = arith.constant 0 : index
    %c0_23 = arith.constant 0 : index
    %63 = vector.load %arg9[%c0_22, %c0_23] : memref<128x768xbf16, #tpu.memory_space<vmem>>, vector<128x768xbf16>
    %cst_24 = arith.constant dense<0.000000e+00> : vector<128x768xf32>
    %64 = tpu.matmul %53, %63, %cst_24 {dimension_numbers = #tpu.dot_dimension_numbers<[1], [0], [0], [1], [0, 0, 1, 1], [], []>} : vector<128x128xbf16>, vector<128x768xbf16>, vector<128x768xf32> -> vector<128x768xf32>
    %c0_25 = arith.constant 0 : index
    %c0_26 = arith.constant 0 : index
    %65 = vector.load %arg10[%c0_25, %c0_26] : memref<1x768xf32, #tpu.memory_space<vmem>>, vector<1x768xf32>
    %66 = vector.broadcast %65 : vector<1x768xf32> to vector<128x768xf32>
    %67 = arith.addf %64, %66 : vector<128x768xf32>
    %c0_27 = arith.constant 0 : index
    %c0_28 = arith.constant 0 : index
    %68 = vector.load %arg12[%c0_27, %c0_28] : memref<128x768xf32, #tpu.memory_space<vmem>>, vector<128x768xf32>
    tpu.vector_store %arg12[%c0_27, %c0_28], %67 {strides = array<i32>} : memref<128x768xf32, #tpu.memory_space<vmem>>, vector<128x768xf32>,
    return
  }
  func.func @transform_0(%arg0: i32) -> (i32, i32) {
    %c0_i32 = arith.constant 0 : i32
    %c0_i32_0 = arith.constant 0 : i32
    return %arg0, %c0_i32 : i32, i32
  }
  func.func @transform_1(%arg0: i32) -> (i32, i32) {
    %c0_i32 = arith.constant 0 : i32
    %c0_i32_0 = arith.constant 0 : i32
    return %arg0, %c0_i32 : i32, i32
  }
  func.func @transform_2(%arg0: i32) -> (i32, i32) {
    %c0_i32 = arith.constant 0 : i32
    %c0_i32_0 = arith.constant 0 : i32
    %c0_i32_1 = arith.constant 0 : i32
    return %c0_i32, %c0_i32_0 : i32, i32
  }
  func.func @transform_3(%arg0: i32) -> (i32, i32) {
    %c0_i32 = arith.constant 0 : i32
    %c0_i32_0 = arith.constant 0 : i32
    %c0_i32_1 = arith.constant 0 : i32
    return %c0_i32, %c0_i32_0 : i32, i32
  }
  func.func @transform_4(%arg0: i32) -> (i32, i32) {
    %c0_i32 = arith.constant 0 : i32
    %c0_i32_0 = arith.constant 0 : i32
    %c0_i32_1 = arith.constant 0 : i32
    return %c0_i32, %c0_i32_0 : i32, i32
  }
  func.func @transform_5(%arg0: i32) -> (i32, i32) {
    %c0_i32 = arith.constant 0 : i32
    %c0_i32_0 = arith.constant 0 : i32
    %c0_i32_1 = arith.constant 0 : i32
    return %c0_i32, %c0_i32_0 : i32, i32
  }
  func.func @transform_6(%arg0: i32) -> (i32, i32) {
    %c0_i32 = arith.constant 0 : i32
    %c0_i32_0 = arith.constant 0 : i32
    %c0_i32_1 = arith.constant 0 : i32
    return %c0_i32, %c0_i32_0 : i32, i32
  }
  func.func @transform_7(%arg0: i32) -> (i32, i32) {
    %c0_i32 = arith.constant 0 : i32
    %c0_i32_0 = arith.constant 0 : i32
    %c0_i32_1 = arith.constant 0 : i32
    return %c0_i32, %c0_i32_0 : i32, i32
  }
  func.func @transform_8(%arg0: i32) -> (i32, i32) {
    %c0_i32 = arith.constant 0 : i32
    %c0_i32_0 = arith.constant 0 : i32
    %c0_i32_1 = arith.constant 0 : i32
    return %c0_i32, %c0_i32_0 : i32, i32
  }
  func.func @transform_9(%arg0: i32) -> (i32, i32) {
    %c0_i32 = arith.constant 0 : i32
    %c0_i32_0 = arith.constant 0 : i32
    %c0_i32_1 = arith.constant 0 : i32
    return %c0_i32, %c0_i32_0 : i32, i32
  }
  func.func @transform_10(%arg0: i32) -> (i32, i32) {
    %c0_i32 = arith.constant 0 : i32
    %c0_i32_0 = arith.constant 0 : i32
    return %arg0, %c0_i32 : i32, i32
  }
  func.func @transform_11(%arg0: i32) -> (i32, i32) {
    %c0_i32 = arith.constant 0 : i32
    %c0_i32_0 = arith.constant 0 : i32
    return %arg0, %c0_i32 : i32, i32
  }
}

</mosaic_0001>

<llo_original>
// kernel: tpu_custom_call.1
$region0: #{tpu_custom_call.1}
  #allocation0 [shape = 'u32[]', space=smem, size = 0x4, offset = 0x4, fixed_abs, tag = 'smem constant byte address 0x4 - core index']
  #allocation1 [shape = 'u32[144,128]{1,0:T(1,128)}', space=vmem, size = 0x12000, scoped, tag = 'internal scratch']
  %s0 = inlined_call_operand.hbm [shape: f32[256,128], index: 0, kind: input, shape index: {}]
  %s1 = inlined_call_operand.hbm [shape: f32[256,128], index: 1, kind: input, shape index: {}]
  %s2 = inlined_call_operand.hbm [shape: bf16[128,1024], index: 2, kind: input, shape index: {}]
  %s3 = inlined_call_operand.vmem [shape: f32[1,1024], index: 3, kind: input, shape index: {}]
  %s4 = inlined_call_operand.hbm [shape: bf16[128,1024], index: 4, kind: input, shape index: {}]
  %s5 = inlined_call_operand.vmem [shape: f32[1,1024], index: 5, kind: input, shape index: {}]
  %s6 = inlined_call_operand.hbm [shape: bf16[128,128], index: 6, kind: input, shape index: {}]
  %s7 = inlined_call_operand.vmem [shape: f32[1,128], index: 7, kind: input, shape index: {}]
  %s8 = inlined_call_operand.hbm [shape: bf16[128,768], index: 8, kind: input, shape index: {}]
  %s9 = inlined_call_operand.vmem [shape: f32[1,768], index: 9, kind: input, shape index: {}]
  %s10 = inlined_call_operand.hbm [shape: f32[256,128], index: 10, kind: output, shape index: {0}]
  %s11 = inlined_call_operand.hbm [shape: f32[256,768], index: 11, kind: output, shape index: {1}]
  %12 = xla_tuple %s10, %s11
  %s13 = sld [smem:[#allocation0]]
  $region105: #{tpu_custom_call.1} parent=0
    _
  %s15 = ssub.s32 1, %s13
  %s16 = scalar_select 0, %s15, %s13
  $region1: #{tpu_custom_call.1} parent=0
    #allocation2 [shape = 'u8[131072]{0}', space=vmem, size = 0x20000, scoped, tag = 'input window, operand 0']
    #allocation3 [shape = 's32[2]{0}', space=sflag, size = 0x8, scoped, tag = 'scoped memory for tpu_custom_call.1']
    #allocation4 [shape = 's32[2]{0}', space=sflag, size = 0x8, scoped, tag = 'scoped memory for tpu_custom_call.1']
    #allocation5 [shape = 'u8[131072]{0}', space=vmem, size = 0x20000, scoped, tag = 'input window, operand 1']
    #allocation6 [shape = 's32[2]{0}', space=sflag, size = 0x8, scoped, tag = 'scoped memory for tpu_custom_call.1']
    #allocation7 [shape = 'u8[262144]{0}', space=vmem, size = 0x40000, scoped, tag = 'input window, operand 2, single buffered']
    #allocation8 [shape = 'u8[262144]{0}', space=vmem, size = 0x40000, scoped, tag = 'input window, operand 4, single buffered']
    #allocation9 [shape = 's32[1]{0}', space=sflag, size = 0x4, scoped, tag = 'scoped memory for tpu_custom_call.1']
    #allocation10 [shape = 'u8[32768]{0}', space=vmem, size = 0x8000, scoped, tag = 'input window, operand 6, single buffered']
    #allocation11 [shape = 'u8[196608]{0}', space=vmem, size = 0x30000, scoped, tag = 'input window, operand 8, single buffered']
    #allocation12 [shape = 's32[1]{0}', space=sflag, size = 0x4, scoped, tag = 'scoped memory for tpu_custom_call.1']
    #allocation13 [shape = 'u8[131072]{0}', space=vmem, size = 0x20000, scoped, tag = 'output window, operand 0']
    #allocation14 [shape = 'u8[786432]{0}', space=vmem, size = 0xc0000, scoped, tag = 'output window, operand 1']
    #allocation15 [shape = 's32[2]{0}', space=sflag, size = 0x8, scoped, tag = 'scoped memory for tpu_custom_call.1']
    %17 = vsyncpa [#allocation3], 0
    %s18 = scalar_lea.sflag [#allocation3], 1
    %19 = vsyncpa %s18, 0
    %20 = vsyncpa [#allocation6], 0
    %s21 = scalar_lea.sflag [#allocation6], 1
    %22 = vsyncpa %s21, 0
    %23 = vsyncpa [#allocation9], 0
    %24 = vsyncpa [#allocation12], 0
    %25 = vsyncpa [#allocation4], 0
    %s26 = scalar_lea.sflag [#allocation4], 1
    %27 = vsyncpa %s26, 0
    %28 = vsyncpa [#allocation15], 0
    %s29 = scalar_lea.sflag [#allocation15], 1
    %30 = vsyncpa %s29, 0
    loop: start=0, step=1, limit=4
    $region2: #{tpu_custom_call.1} parent=1 // loop_pre_header
      _
    $region3: #{tpu_custom_call.1} parent=1 // loop_header
      %s32 = sphi 0, %s36
      %p33 = scmp.ge.s32.totalorder %s32, 4
      %s42 = sphi 0, %s44
      %s45 = sphi 0, %s42
      %s46 = sphi 0, %s45
      %s62 = sphi 0, %s46
      %s68 = sphi 0, %s70
      %s71 = sphi 0, %s68
      %s72 = sphi 0, %s71
      %s88 = sphi 0, %s72
      %s92 = sphi 0, %s92
      %s94 = sphi 0, %s92
      %s95 = sphi 0, %s94
      %s109 = sphi 0, %s95
      %s113 = sphi 0, %s113
      %s115 = sphi 0, %s113
      %s116 = sphi 0, %s115
      %s130 = sphi 0, %s116
      %s134 = sphi 0, %s134
      %s136 = sphi 0, %s134
      %s137 = sphi 0, %s136
      %s151 = sphi 0, %s137
      %s155 = sphi 0, %s155
      %s157 = sphi 0, %s155
      %s158 = sphi 0, %s157
      %s172 = sphi 0, %s158
      %s176 = sphi 0, %s176
      %s178 = sphi 0, %s176
      %s179 = sphi 0, %s178
      %s193 = sphi 0, %s179
      %s197 = sphi 0, %s197
      %s199 = sphi 0, %s197
      %s200 = sphi 0, %s199
      %s214 = sphi 0, %s200
      %s218 = sphi 0, %s218
      %s220 = sphi 0, %s218
      %s221 = sphi 0, %s220
      %s235 = sphi 0, %s221
      %s239 = sphi 0, %s239
      %s241 = sphi 0, %s239
      %s242 = sphi 0, %s241
      %s256 = sphi 0, %s242
      %s262 = sphi 0, %s264
      %s265 = sphi 0, %s262
      %s266 = sphi 0, %s265
      %s282 = sphi 0, %s266
      %s288 = sphi 0, %s290
      %s291 = sphi 0, %s288
      %s292 = sphi 0, %s291
      %s308 = sphi 0, %s292
    $region4: #{tpu_custom_call.1} parent=1 // loop_header_branch
      %35 = sbr.rel (%p33) target = $region8
    $region5: #{tpu_custom_call.1} parent=1 // loop_body
      %s37 = ssub.s32 %s32, 1
      %s38 = ssub.s32 %s32, 2
      %s39 = sadd.s32 %s32, 1
      %s40 = ssub.s32 %s32, %s39
      %p41 = scmp.eq.s32.totalorder %s40, 0
      %s43 = sadd.s32 %s42, 1
      %s44 = scalar_select %p41, %s42, %s43
      %p47 = pneg %p41
      %p48 = scmp.eq.s32.totalorder %s32, 1
      %p49 = por %p47, %p48
      %p50 = scmp.ne.s32.totalorder %s42, %s45
      %p51 = scmp.eq.s32.totalorder %s32, 0
      %p52 = por %p50, %p51
      %p53 = scmp.ne.s32.totalorder %s42, %s45
      %p54 = scmp.eq.s32.totalorder %s37, 1
      %p55 = por %p53, %p54
      %p56 = scmp.ne.s32.totalorder %s45, %s46
      %p57 = scmp.eq.s32.totalorder %s37, 0
      %p58 = por %p56, %p57
      %p59 = scmp.ne.s32.totalorder %s45, %s46
      %p60 = scmp.eq.s32.totalorder %s38, 1
      %p61 = por %p59, %p60
      %p63 = scmp.ne.s32.totalorder %s46, %s62
      %p64 = scmp.eq.s32.totalorder %s38, 0
      %p65 = por %p63, %p64
      %s66 = ssub.s32 %s32, %s39
      %p67 = scmp.eq.s32.totalorder %s66, 0
      %s69 = sadd.s32 %s68, 1
      %s70 = scalar_select %p67, %s68, %s69
      %p73 = pneg %p67
      %p74 = scmp.eq.s32.totalorder %s32, 1
      %p75 = por %p73, %p74
      %p76 = scmp.ne.s32.totalorder %s68, %s71
      %p77 = scmp.eq.s32.totalorder %s32, 0
      %p78 = por %p76, %p77
      %p79 = scmp.ne.s32.totalorder %s68, %s71
      %p80 = scmp.eq.s32.totalorder %s37, 1
      %p81 = por %p79, %p80
      %p82 = scmp.ne.s32.totalorder %s71, %s72
      %p83 = scmp.eq.s32.totalorder %s37, 0
      %p84 = por %p82, %p83
      %p85 = scmp.ne.s32.totalorder %s71, %s72
      %p86 = scmp.eq.s32.totalorder %s38, 1
      %p87 = por %p85, %p86
      %p89 = scmp.ne.s32.totalorder %s72, %s88
      %p90 = scmp.eq.s32.totalorder %s38, 0
      %p91 = por %p89, %p90
      %s93 = sadd.s32 %s92, 1
      %p96 = scmp.eq.s32.totalorder %s32, 1
      %p97 = scmp.ne.s32.totalorder %s92, %s94
      %p98 = scmp.eq.s32.totalorder %s32, 0
      %p99 = por %p97, %p98
      %p100 = scmp.ne.s32.totalorder %s92, %s94
      %p101 = scmp.eq.s32.totalorder %s37, 1
      %p102 = por %p100, %p101
      %p103 = scmp.ne.s32.totalorder %s94, %s95
      %p104 = scmp.eq.s32.totalorder %s37, 0
      %p105 = por %p103, %p104
      %p106 = scmp.ne.s32.totalorder %s94, %s95
      %p107 = scmp.eq.s32.totalorder %s38, 1
      %p108 = por %p106, %p107
      %p110 = scmp.ne.s32.totalorder %s95, %s109
      %p111 = scmp.eq.s32.totalorder %s38, 0
      %p112 = por %p110, %p111
      %s114 = sadd.s32 %s113, 1
      %p117 = scmp.eq.s32.totalorder %s32, 1
      %p118 = scmp.ne.s32.totalorder %s113, %s115
      %p119 = scmp.eq.s32.totalorder %s32, 0
      %p120 = por %p118, %p119
      %p121 = scmp.ne.s32.totalorder %s113, %s115
      %p122 = scmp.eq.s32.totalorder %s37, 1
      %p123 = por %p121, %p122
      %p124 = scmp.ne.s32.totalorder %s115, %s116
      %p125 = scmp.eq.s32.totalorder %s37, 0
      %p126 = por %p124, %p125
      %p127 = scmp.ne.s32.totalorder %s115, %s116
      %p128 = scmp.eq.s32.totalorder %s38, 1
      %p129 = por %p127, %p128
      %p131 = scmp.ne.s32.totalorder %s116, %s130
      %p132 = scmp.eq.s32.totalorder %s38, 0
      %p133 = por %p131, %p132
      %s135 = sadd.s32 %s134, 1
      %p138 = scmp.eq.s32.totalorder %s32, 1
      %p139 = scmp.ne.s32.totalorder %s134, %s136
      %p140 = scmp.eq.s32.totalorder %s32, 0
      %p141 = por %p139, %p140
      %p142 = scmp.ne.s32.totalorder %s134, %s136
      %p143 = scmp.eq.s32.totalorder %s37, 1
      %p144 = por %p142, %p143
      %p145 = scmp.ne.s32.totalorder %s136, %s137
      %p146 = scmp.eq.s32.totalorder %s37, 0
      %p147 = por %p145, %p146
      %p148 = scmp.ne.s32.totalorder %s136, %s137
      %p149 = scmp.eq.s32.totalorder %s38, 1
      %p150 = por %p148, %p149
      %p152 = scmp.ne.s32.totalorder %s137, %s151
      %p153 = scmp.eq.s32.totalorder %s38, 0
      %p154 = por %p152, %p153
      %s156 = sadd.s32 %s155, 1
      %p159 = scmp.eq.s32.totalorder %s32, 1
      %p160 = scmp.ne.s32.totalorder %s155, %s157
      %p161 = scmp.eq.s32.totalorder %s32, 0
      %p162 = por %p160, %p161
      %p163 = scmp.ne.s32.totalorder %s155, %s157
      %p164 = scmp.eq.s32.totalorder %s37, 1
      %p165 = por %p163, %p164
      %p166 = scmp.ne.s32.totalorder %s157, %s158
      %p167 = scmp.eq.s32.totalorder %s37, 0
      %p168 = por %p166, %p167
      %p169 = scmp.ne.s32.totalorder %s157, %s158
      %p170 = scmp.eq.s32.totalorder %s38, 1
      %p171 = por %p169, %p170
      %p173 = scmp.ne.s32.totalorder %s158, %s172
      %p174 = scmp.eq.s32.totalorder %s38, 0
      %p175 = por %p173, %p174
      %s177 = sadd.s32 %s176, 1
      %p180 = scmp.eq.s32.totalorder %s32, 1
      %p181 = scmp.ne.s32.totalorder %s176, %s178
      %p182 = scmp.eq.s32.totalorder %s32, 0
      %p183 = por %p181, %p182
      %p184 = scmp.ne.s32.totalorder %s176, %s178
      %p185 = scmp.eq.s32.totalorder %s37, 1
      %p186 = por %p184, %p185
      %p187 = scmp.ne.s32.totalorder %s178, %s179
      %p188 = scmp.eq.s32.totalorder %s37, 0
      %p189 = por %p187, %p188
      %p190 = scmp.ne.s32.totalorder %s178, %s179
      %p191 = scmp.eq.s32.totalorder %s38, 1
      %p192 = por %p190, %p191
      %p194 = scmp.ne.s32.totalorder %s179, %s193
      %p195 = scmp.eq.s32.totalorder %s38, 0
      %p196 = por %p194, %p195
      %s198 = sadd.s32 %s197, 1
      %p201 = scmp.eq.s32.totalorder %s32, 1
      %p202 = scmp.ne.s32.totalorder %s197, %s199
      %p203 = scmp.eq.s32.totalorder %s32, 0
      %p204 = por %p202, %p203
      %p205 = scmp.ne.s32.totalorder %s197, %s199
      %p206 = scmp.eq.s32.totalorder %s37, 1
      %p207 = por %p205, %p206
      %p208 = scmp.ne.s32.totalorder %s199, %s200
      %p209 = scmp.eq.s32.totalorder %s37, 0
      %p210 = por %p208, %p209
      %p211 = scmp.ne.s32.totalorder %s199, %s200
      %p212 = scmp.eq.s32.totalorder %s38, 1
      %p213 = por %p211, %p212
      %p215 = scmp.ne.s32.totalorder %s200, %s214
      %p216 = scmp.eq.s32.totalorder %s38, 0
      %p217 = por %p215, %p216
      %s219 = sadd.s32 %s218, 1
      %p222 = scmp.eq.s32.totalorder %s32, 1
      %p223 = scmp.ne.s32.totalorder %s218, %s220
      %p224 = scmp.eq.s32.totalorder %s32, 0
      %p225 = por %p223, %p224
      %p226 = scmp.ne.s32.totalorder %s218, %s220
      %p227 = scmp.eq.s32.totalorder %s37, 1
      %p228 = por %p226, %p227
      %p229 = scmp.ne.s32.totalorder %s220, %s221
      %p230 = scmp.eq.s32.totalorder %s37, 0
      %p231 = por %p229, %p230
      %p232 = scmp.ne.s32.totalorder %s220, %s221
      %p233 = scmp.eq.s32.totalorder %s38, 1
      %p234 = por %p232, %p233
      %p236 = scmp.ne.s32.totalorder %s221, %s235
      %p237 = scmp.eq.s32.totalorder %s38, 0
      %p238 = por %p236, %p237
      %s240 = sadd.s32 %s239, 1
      %p243 = scmp.eq.s32.totalorder %s32, 1
      %p244 = scmp.ne.s32.totalorder %s239, %s241
      %p245 = scmp.eq.s32.totalorder %s32, 0
      %p246 = por %p244, %p245
      %p247 = scmp.ne.s32.totalorder %s239, %s241
      %p248 = scmp.eq.s32.totalorder %s37, 1
      %p249 = por %p247, %p248
      %p250 = scmp.ne.s32.totalorder %s241, %s242
      %p251 = scmp.eq.s32.totalorder %s37, 0
      %p252 = por %p250, %p251
      %p253 = scmp.ne.s32.totalorder %s241, %s242
      %p254 = scmp.eq.s32.totalorder %s38, 1
      %p255 = por %p253, %p254
      %p257 = scmp.ne.s32.totalorder %s242, %s256
      %p258 = scmp.eq.s32.totalorder %s38, 0
      %p259 = por %p257, %p258
      %s260 = ssub.s32 %s32, %s39
      %p261 = scmp.eq.s32.totalorder %s260, 0
      %s263 = sadd.s32 %s262, 1
      %s264 = scalar_select %p261, %s262, %s263
      %p267 = pneg %p261
      %p268 = scmp.eq.s32.totalorder %s32, 1
      %p269 = por %p267, %p268
      %p270 = scmp.ne.s32.totalorder %s262, %s265
      %p271 = scmp.eq.s32.totalorder %s32, 0
      %p272 = por %p270, %p271
      %p273 = scmp.ne.s32.totalorder %s262, %s265
      %p274 = scmp.eq.s32.totalorder %s37, 1
      %p275 = por %p273, %p274
      %p276 = scmp.ne.s32.totalorder %s265, %s266
      %p277 = scmp.eq.s32.totalorder %s37, 0
      %p278 = por %p276, %p277
      %p279 = scmp.ne.s32.totalorder %s265, %s266
      %p280 = scmp.eq.s32.totalorder %s38, 1
      %p281 = por %p279, %p280
      %p283 = scmp.ne.s32.totalorder %s266, %s282
      %p284 = scmp.eq.s32.totalorder %s38, 0
      %p285 = por %p283, %p284
      %s286 = ssub.s32 %s32, %s39
      %p287 = scmp.eq.s32.totalorder %s286, 0
      %s289 = sadd.s32 %s288, 1
      %s290 = scalar_select %p287, %s288, %s289
      %p293 = pneg %p287
      %p294 = scmp.eq.s32.totalorder %s32, 1
      %p295 = por %p293, %p294
      %p296 = scmp.ne.s32.totalorder %s288, %s291
      %p297 = scmp.eq.s32.totalorder %s32, 0
      %p298 = por %p296, %p297
      %p299 = scmp.ne.s32.totalorder %s288, %s291
      %p300 = scmp.eq.s32.totalorder %s37, 1
      %p301 = por %p299, %p300
      %p302 = scmp.ne.s32.totalorder %s291, %s292
      %p303 = scmp.eq.s32.totalorder %s37, 0
      %p304 = por %p302, %p303
      %p305 = scmp.ne.s32.totalorder %s291, %s292
      %p306 = scmp.eq.s32.totalorder %s38, 1
      %p307 = por %p305, %p306
      %p309 = scmp.ne.s32.totalorder %s292, %s308
      %p310 = scmp.eq.s32.totalorder %s38, 0
      %p311 = por %p309, %p310
      %p312 = scmp.le.s32.totalorder 1, %s32
      %p313 = scmp.lt.s32.totalorder %s32, 3
      %p314 = pnand %p312, %p313
      %p315 = pneg %p314
      // Predicated region
      $region9: #{tpu_custom_call.1} parent=5 // pred_check
        _
      $region10: #{tpu_custom_call.1} parent=5 // pred_check_branch
        %317 = sbr.rel (%p314) target = $region12
      $region11: #{tpu_custom_call.1} parent=5 // pred_region
        %s318 = ssub.s32 %s32, 1
        // Predicated region
        $region13: #{tpu_custom_call.1} parent=11 // pred_check
          %p319 = pneg %p105
        $region14: #{tpu_custom_call.1} parent=11 // pred_check_branch
          %321 = sbr.rel (%p319) target = $region16
        $region15: #{tpu_custom_call.1} parent=11 // pred_region
          %s323 = ssub.s32 8192, 8192
          %324 = vsyncadd [#allocation6], %s323
          %s325 = sshll.u32 [#allocation7], 4
          %s326 = int_to_ptr.vmem [resolvable:$true] %s325
          %331 = dma.hbm_to_vmem [thread:$0]  %s2, 8192, %s326, [#allocation6], 512, 512, 32
        $region16: #{tpu_custom_call.1} parent=11 // pred_fallthru
          _
        // Predicated region
        $region17: #{tpu_custom_call.1} parent=11 // pred_check
          %p332 = pneg %p126
        $region18: #{tpu_custom_call.1} parent=11 // pred_check_branch
          %334 = sbr.rel (%p332) target = $region20
        $region19: #{tpu_custom_call.1} parent=11 // pred_region
          _
        $region20: #{tpu_custom_call.1} parent=11 // pred_fallthru
          _
        // Predicated region
        $region21: #{tpu_custom_call.1} parent=11 // pred_check
          %p335 = pneg %p147
        $region22: #{tpu_custom_call.1} parent=11 // pred_check_branch
          %337 = sbr.rel (%p335) target = $region24
        $region23: #{tpu_custom_call.1} parent=11 // pred_region
          %s339 = ssub.s32 8192, 8192
          %340 = vsyncadd [#allocation9], %s339
          %s341 = sshll.u32 [#allocation8], 4
          %s342 = int_to_ptr.vmem [resolvable:$true] %s341
          %347 = dma.hbm_to_vmem [thread:$0]  %s4, 8192, %s342, [#allocation9], 512, 512, 32
        $region24: #{tpu_custom_call.1} parent=11 // pred_fallthru
          _
        // Predicated region
        $region25: #{tpu_custom_call.1} parent=11 // pred_check
          %p348 = pneg %p168
        $region26: #{tpu_custom_call.1} parent=11 // pred_check_branch
          %350 = sbr.rel (%p348) target = $region28
        $region27: #{tpu_custom_call.1} parent=11 // pred_region
          _
        $region28: #{tpu_custom_call.1} parent=11 // pred_fallthru
          _
        // Predicated region
        $region29: #{tpu_custom_call.1} parent=11 // pred_check
          %p351 = pneg %p189
        $region30: #{tpu_custom_call.1} parent=11 // pred_check_branch
          %353 = sbr.rel (%p351) target = $region32
        $region31: #{tpu_custom_call.1} parent=11 // pred_region
          %s355 = ssub.s32 1024, 1024
          %356 = vsyncadd [#allocation9], %s355
          %s357 = sshll.u32 [#allocation10], 4
          %s358 = int_to_ptr.vmem [resolvable:$true] %s357
          %363 = dma.hbm_to_vmem [thread:$0]  %s6, 1024, %s358, [#allocation9], 64, 64, 4
        $region32: #{tpu_custom_call.1} parent=11 // pred_fallthru
          _
        // Predicated region
        $region33: #{tpu_custom_call.1} parent=11 // pred_check
          %p364 = pneg %p210
        $region34: #{tpu_custom_call.1} parent=11 // pred_check_branch
          %366 = sbr.rel (%p364) target = $region36
        $region35: #{tpu_custom_call.1} parent=11 // pred_region
          _
        $region36: #{tpu_custom_call.1} parent=11 // pred_fallthru
          _
        // Predicated region
        $region37: #{tpu_custom_call.1} parent=11 // pred_check
          %p367 = pneg %p231
        $region38: #{tpu_custom_call.1} parent=11 // pred_check_branch
          %369 = sbr.rel (%p367) target = $region40
        $region39: #{tpu_custom_call.1} parent=11 // pred_region
          %s371 = ssub.s32 6144, 6144
          %372 = vsyncadd [#allocation12], %s371
          %s373 = sshll.u32 [#allocation11], 4
          %s374 = int_to_ptr.vmem [resolvable:$true] %s373
          %379 = dma.hbm_to_vmem [thread:$0]  %s8, 6144, %s374, [#allocation12], 384, 384, 24
        $region40: #{tpu_custom_call.1} parent=11 // pred_fallthru
          _
        // Predicated region
        $region41: #{tpu_custom_call.1} parent=11 // pred_check
          %p380 = pneg %p252
        $region42: #{tpu_custom_call.1} parent=11 // pred_check_branch
          %382 = sbr.rel (%p380) target = $region44
        $region43: #{tpu_custom_call.1} parent=11 // pred_region
          _
        $region44: #{tpu_custom_call.1} parent=11 // pred_fallthru
          _
      $region12: #{tpu_custom_call.1} parent=5 // pred_fallthru
        _
      %p383 = scmp.lt.s32.totalorder %s32, 2
      // Predicated region
      $region45: #{tpu_custom_call.1} parent=5 // pred_check
        %p384 = pneg %p383
      $region46: #{tpu_custom_call.1} parent=5 // pred_check_branch
        %386 = sbr.rel (%p384) target = $region48
      $region47: #{tpu_custom_call.1} parent=5 // pred_region
        // Predicated region
        $region49: #{tpu_custom_call.1} parent=47 // pred_check
          %p387 = pneg %p52
        $region50: #{tpu_custom_call.1} parent=47 // pred_check_branch
          %389 = sbr.rel (%p387) target = $region52
        $region51: #{tpu_custom_call.1} parent=47 // pred_region
          %s390 = sand.u32 %s42, 1
          %s391 = scalar_lea.sflag [#allocation3], %s390
          %s392 = sand.u32 %s42, 1
          %s393 = smul.addr %s392, 128
          %s394 = scalar_lea.vmem [#allocation2], %s393
          %s395 = smul.u32 16, %s32
          %s397 = ssub.s32 2048, 2048
          %398 = vsyncadd %s391, %s397
          %s399 = smul.addr %s395, 128
          %s400 = scalar_lea.hbm %s0, %s399
          %s401 = sshll.u32 %s394, 4
          %s402 = int_to_ptr.vmem [resolvable:$true] %s401
          %407 = dma.hbm_to_vmem [thread:$0]  %s400, 2048, %s402, %s391, 128, 128, 8
        $region52: #{tpu_custom_call.1} parent=47 // pred_fallthru
          _
        // Predicated region
        $region53: #{tpu_custom_call.1} parent=47 // pred_check
          %p408 = pneg %p78
        $region54: #{tpu_custom_call.1} parent=47 // pred_check_branch
          %410 = sbr.rel (%p408) target = $region56
        $region55: #{tpu_custom_call.1} parent=47 // pred_region
          %s411 = sand.u32 %s32, 1
          %s412 = scalar_lea.sflag [#allocation6], %s411
          %s413 = sand.u32 %s68, 1
          %s414 = smul.addr %s413, 128
          %s415 = scalar_lea.vmem [#allocation5], %s414
          %s416 = smul.u32 16, %s32
          %s418 = ssub.s32 2048, 2048
          %419 = vsyncadd %s412, %s418
          %s420 = smul.addr %s416, 128
          %s421 = scalar_lea.hbm %s1, %s420
          %s422 = sshll.u32 %s415, 4
          %s423 = int_to_ptr.vmem [resolvable:$true] %s422
          %428 = dma.hbm_to_vmem [thread:$0]  %s421, 2048, %s423, %s412, 128, 128, 8
        $region56: #{tpu_custom_call.1} parent=47 // pred_fallthru
          _
      $region48: #{tpu_custom_call.1} parent=5 // pred_fallthru
        _
      %p429 = scmp.le.s32.totalorder 1, %s32
      %p430 = scmp.lt.s32.totalorder %s32, 3
      %p431 = pnand %p429, %p430
      %p432 = pneg %p431
      // Predicated region
      $region57: #{tpu_custom_call.1} parent=5 // pred_check
        _
      $region58: #{tpu_custom_call.1} parent=5 // pred_check_branch
        %434 = sbr.rel (%p431) target = $region60
      $region59: #{tpu_custom_call.1} parent=5 // pred_region
        %s435 = ssub.s32 %s32, 1
        %s436 = sand.u32 %s45, 1
        %s437 = scalar_lea.sflag [#allocation3], %s436
        %s438 = sand.u32 %s45, 1
        %s439 = smul.addr %s438, 128
        %s440 = scalar_lea.vmem [#allocation2], %s439
        // Predicated region
        $region61: #{tpu_custom_call.1} parent=59 // pred_check
          %p441 = pneg %p58
        $region62: #{tpu_custom_call.1} parent=59 // pred_check_branch
          %443 = sbr.rel (%p441) target = $region64
        $region63: #{tpu_custom_call.1} parent=59 // pred_region
          %444 = dma.done %s437, 2048
        $region64: #{tpu_custom_call.1} parent=59 // pred_fallthru
          _
        %s445 = sand.u32 %s37, 1
        %s446 = scalar_lea.sflag [#allocation6], %s445
        %s447 = sand.u32 %s71, 1
        %s448 = smul.addr %s447, 128
        %s449 = scalar_lea.vmem [#allocation5], %s448
        // Predicated region
        $region65: #{tpu_custom_call.1} parent=59 // pred_check
          %p450 = pneg %p84
        $region66: #{tpu_custom_call.1} parent=59 // pred_check_branch
          %452 = sbr.rel (%p450) target = $region68
        $region67: #{tpu_custom_call.1} parent=59 // pred_region
          %453 = dma.done %s446, 2048
        $region68: #{tpu_custom_call.1} parent=59 // pred_fallthru
          _
        // Predicated region
        $region69: #{tpu_custom_call.1} parent=59 // pred_check
          %p454 = pneg %p105
        $region70: #{tpu_custom_call.1} parent=59 // pred_check_branch
          %456 = sbr.rel (%p454) target = $region72
        $region71: #{tpu_custom_call.1} parent=59 // pred_region
          %457 = dma.done [#allocation6], 8192
        $region72: #{tpu_custom_call.1} parent=59 // pred_fallthru
          _
        // Predicated region
        $region73: #{tpu_custom_call.1} parent=59 // pred_check
          %p458 = pneg %p147
        $region74: #{tpu_custom_call.1} parent=59 // pred_check_branch
          %460 = sbr.rel (%p458) target = $region76
        $region75: #{tpu_custom_call.1} parent=59 // pred_region
          %461 = dma.done [#allocation9], 8192
        $region76: #{tpu_custom_call.1} parent=59 // pred_fallthru
          _
        // Predicated region
        $region77: #{tpu_custom_call.1} parent=59 // pred_check
          %p462 = pneg %p189
        $region78: #{tpu_custom_call.1} parent=59 // pred_check_branch
          %464 = sbr.rel (%p462) target = $region80
        $region79: #{tpu_custom_call.1} parent=59 // pred_region
          %465 = dma.done [#allocation9], 1024
        $region80: #{tpu_custom_call.1} parent=59 // pred_fallthru
          _
        // Predicated region
        $region81: #{tpu_custom_call.1} parent=59 // pred_check
          %p466 = pneg %p231
        $region82: #{tpu_custom_call.1} parent=59 // pred_check_branch
          %468 = sbr.rel (%p466) target = $region84
        $region83: #{tpu_custom_call.1} parent=59 // pred_region
          %469 = dma.done [#allocation12], 6144
        $region84: #{tpu_custom_call.1} parent=59 // pred_fallthru
          _
        %s470 = sand.u32 %s45, 1
        %s471 = scalar_lea.sflag [#allocation3], %s470
        %s472 = sand.u32 %s45, 1
        %s473 = smul.addr %s472, 128
        %s474 = scalar_lea.vmem [#allocation2], %s473
        %p475 = pneg %p58
        %p476 = pneg %p55
        %s477 = sand.u32 %s37, 1
        %s478 = scalar_lea.sflag [#allocation6], %s477
        %s479 = sand.u32 %s71, 1
        %s480 = smul.addr %s479, 128
        %s481 = scalar_lea.vmem [#allocation5], %s480
        %p482 = pneg %p84
        %p483 = pneg %p81
        %p484 = pneg %p105
        %p485 = pneg %p102
        %p486 = pneg %p126
        %p487 = pneg %p123
        %p488 = pneg %p147
        %p489 = pneg %p144
        %p490 = pneg %p168
        %p491 = pneg %p165
        %p492 = pneg %p189
        %p493 = pneg %p186
        %p494 = pneg %p210
        %p495 = pneg %p207
        %p496 = pneg %p231
        %p497 = pneg %p228
        %p498 = pneg %p252
        %p499 = pneg %p249
        %p500 = pneg %p278
        %p501 = pneg %p275
        %s502 = sand.u32 %s265, 1
        %s503 = scalar_lea.sflag [#allocation4], %s502
        %s504 = sand.u32 %s265, 1
        %s505 = smul.addr %s504, 128
        %s506 = scalar_lea.vmem [#allocation13], %s505
        %p507 = pneg %p304
        %p508 = pneg %p301
        %s509 = sand.u32 %s291, 1
        %s510 = scalar_lea.sflag [#allocation15], %s509
        %s511 = sand.u32 %s291, 1
        %s512 = smul.addr %s511, 768
        %s513 = scalar_lea.vmem [#allocation14], %s512
        %s514 = smul.u32 16, %s37
        %s515 = smul.u32 16, %s37
        %s516 = smul.u32 16, %s37
        %s517 = smul.u32 16, %s37
        %v519 = vld [vmem:[%s440] sm:$0xff]
        %v520 = vld [vmem:[%s440 + $0x8] sm:$0xff]
        %v521 = vld [vmem:[%s440 + $0x10] sm:$0xff]
        %v522 = vld [vmem:[%s440 + $0x18] sm:$0xff]
        %v523 = vld [vmem:[%s440 + $0x20] sm:$0xff]
        %v524 = vld [vmem:[%s440 + $0x28] sm:$0xff]
        %v525 = vld [vmem:[%s440 + $0x30] sm:$0xff]
        %v526 = vld [vmem:[%s440 + $0x38] sm:$0xff]
        %v527 = vld [vmem:[%s440 + $0x40] sm:$0xff]
        %v528 = vld [vmem:[%s440 + $0x48] sm:$0xff]
        %v529 = vld [vmem:[%s440 + $0x50] sm:$0xff]
        %v530 = vld [vmem:[%s440 + $0x58] sm:$0xff]
        %v531 = vld [vmem:[%s440 + $0x60] sm:$0xff]
        %v532 = vld [vmem:[%s440 + $0x68] sm:$0xff]
        %v533 = vld [vmem:[%s440 + $0x70] sm:$0xff]
        %v534 = vld [vmem:[%s440 + $0x78] sm:$0xff]
        %v535 = vpack.c.bf16 %v520, %v519
        %v536 = vpack.c.bf16 %v522, %v521
        %v537 = vpack.c.bf16 %v524, %v523
        %v538 = vpack.c.bf16 %v526, %v525
        %v539 = vpack.c.bf16 %v528, %v527
        %v540 = vpack.c.bf16 %v530, %v529
        %v541 = vpack.c.bf16 %v532, %v531
        %v542 = vpack.c.bf16 %v534, %v533
        %v543 = vld [vmem:[%s449] sm:$0xff]
        %v544 = vld [vmem:[%s449 + $0x8] sm:$0xff]
        %v545 = vld [vmem:[%s449 + $0x10] sm:$0xff]
        %v546 = vld [vmem:[%s449 + $0x18] sm:$0xff]
        %v547 = vld [vmem:[%s449 + $0x20] sm:$0xff]
        %v548 = vld [vmem:[%s449 + $0x28] sm:$0xff]
        %v549 = vld [vmem:[%s449 + $0x30] sm:$0xff]
        %v550 = vld [vmem:[%s449 + $0x38] sm:$0xff]
        %v551 = vld [vmem:[%s449 + $0x40] sm:$0xff]
        %v552 = vld [vmem:[%s449 + $0x48] sm:$0xff]
        %v553 = vld [vmem:[%s449 + $0x50] sm:$0xff]
        %v554 = vld [vmem:[%s449 + $0x58] sm:$0xff]
        %v555 = vld [vmem:[%s449 + $0x60] sm:$0xff]
        %v556 = vld [vmem:[%s449 + $0x68] sm:$0xff]
        %v557 = vld [vmem:[%s449 + $0x70] sm:$0xff]
        %v558 = vld [vmem:[%s449 + $0x78] sm:$0xff]
        %v559 = vpack.c.bf16 %v544, %v543
        %v560 = vpack.c.bf16 %v546, %v545
        %v561 = vpack.c.bf16 %v548, %v547
        %v562 = vpack.c.bf16 %v550, %v549
        %v563 = vpack.c.bf16 %v552, %v551
        %v564 = vpack.c.bf16 %v554, %v553
        %v565 = vpack.c.bf16 %v556, %v555
        %v566 = vpack.c.bf16 %v558, %v557
        %v567 = vld [vmem:[#allocation7] sm:$0xff]
        %v568 = vld [vmem:[#allocation7 + $0x8] sm:$0xff]
        %v569 = vld [vmem:[#allocation7 + $0x10] sm:$0xff]
        %v570 = vld [vmem:[#allocation7 + $0x18] sm:$0xff]
        %v571 = vld [vmem:[#allocation7 + $0x20] sm:$0xff]
        %v572 = vld [vmem:[#allocation7 + $0x28] sm:$0xff]
        %v573 = vld [vmem:[#allocation7 + $0x30] sm:$0xff]
        %v574 = vld [vmem:[#allocation7 + $0x38] sm:$0xff]
        %v575 = vld [vmem:[#allocation7 + $0x40] sm:$0xff]
        %v576 = vld [vmem:[#allocation7 + $0x48] sm:$0xff]
        %v577 = vld [vmem:[#allocation7 + $0x50] sm:$0xff]
        %v578 = vld [vmem:[#allocation7 + $0x58] sm:$0xff]
        %v579 = vld [vmem:[#allocation7 + $0x60] sm:$0xff]
        %v580 = vld [vmem:[#allocation7 + $0x68] sm:$0xff]
        %v581 = vld [vmem:[#allocation7 + $0x70] sm:$0xff]
        %v582 = vld [vmem:[#allocation7 + $0x78] sm:$0xff]
        %v583 = vld [vmem:[#allocation7 + $0x80] sm:$0xff]
        %v584 = vld [vmem:[#allocation7 + $0x88] sm:$0xff]
        %v585 = vld [vmem:[#allocation7 + $0x90] sm:$0xff]
        %v586 = vld [vmem:[#allocation7 + $0x98] sm:$0xff]
        %v587 = vld [vmem:[#allocation7 + $0xa0] sm:$0xff]
        %v588 = vld [vmem:[#allocation7 + $0xa8] sm:$0xff]
        %v589 = vld [vmem:[#allocation7 + $0xb0] sm:$0xff]
        %v590 = vld [vmem:[#allocation7 + $0xb8] sm:$0xff]
        %v591 = vld [vmem:[#allocation7 + $0xc0] sm:$0xff]
        %v592 = vld [vmem:[#allocation7 + $0xc8] sm:$0xff]
        %v593 = vld [vmem:[#allocation7 + $0xd0] sm:$0xff]
        %v594 = vld [vmem:[#allocation7 + $0xd8] sm:$0xff]
        %v595 = vld [vmem:[#allocation7 + $0xe0] sm:$0xff]
        %v596 = vld [vmem:[#allocation7 + $0xe8] sm:$0xff]
        %v597 = vld [vmem:[#allocation7 + $0xf0] sm:$0xff]
        %v598 = vld [vmem:[#allocation7 + $0xf8] sm:$0xff]
        %v599 = vld [vmem:[#allocation7 + $0x100] sm:$0xff]
        %v600 = vld [vmem:[#allocation7 + $0x108] sm:$0xff]
        %v601 = vld [vmem:[#allocation7 + $0x110] sm:$0xff]
        %v602 = vld [vmem:[#allocation7 + $0x118] sm:$0xff]
        %v603 = vld [vmem:[#allocation7 + $0x120] sm:$0xff]
        %v604 = vld [vmem:[#allocation7 + $0x128] sm:$0xff]
        %v605 = vld [vmem:[#allocation7 + $0x130] sm:$0xff]
        %v606 = vld [vmem:[#allocation7 + $0x138] sm:$0xff]
        %v607 = vld [vmem:[#allocation7 + $0x140] sm:$0xff]
        %v608 = vld [vmem:[#allocation7 + $0x148] sm:$0xff]
        %v609 = vld [vmem:[#allocation7 + $0x150] sm:$0xff]
        %v610 = vld [vmem:[#allocation7 + $0x158] sm:$0xff]
        %v611 = vld [vmem:[#allocation7 + $0x160] sm:$0xff]
        %v612 = vld [vmem:[#allocation7 + $0x168] sm:$0xff]
        %v613 = vld [vmem:[#allocation7 + $0x170] sm:$0xff]
        %v614 = vld [vmem:[#allocation7 + $0x178] sm:$0xff]
        %v615 = vld [vmem:[#allocation7 + $0x180] sm:$0xff]
        %v616 = vld [vmem:[#allocation7 + $0x188] sm:$0xff]
        %v617 = vld [vmem:[#allocation7 + $0x190] sm:$0xff]
        %v618 = vld [vmem:[#allocation7 + $0x198] sm:$0xff]
        %v619 = vld [vmem:[#allocation7 + $0x1a0] sm:$0xff]
        %v620 = vld [vmem:[#allocation7 + $0x1a8] sm:$0xff]
        %v621 = vld [vmem:[#allocation7 + $0x1b0] sm:$0xff]
        %v622 = vld [vmem:[#allocation7 + $0x1b8] sm:$0xff]
        %v623 = vld [vmem:[#allocation7 + $0x1c0] sm:$0xff]
        %v624 = vld [vmem:[#allocation7 + $0x1c8] sm:$0xff]
        %v625 = vld [vmem:[#allocation7 + $0x1d0] sm:$0xff]
        %v626 = vld [vmem:[#allocation7 + $0x1d8] sm:$0xff]
        %v627 = vld [vmem:[#allocation7 + $0x1e0] sm:$0xff]
        %v628 = vld [vmem:[#allocation7 + $0x1e8] sm:$0xff]
        %v629 = vld [vmem:[#allocation7 + $0x1f0] sm:$0xff]
        %v630 = vld [vmem:[#allocation7 + $0x1f8] sm:$0xff]
        %v631 = vld [vmem:[%s3] sm:$0xff]
        %v633 = vlaneseq
        %v634 = vshrl.u32 %v633, 7
        %v635 = vsub.s32 0, %v634
        %v636 = vrot.slane %v631, %v635
        %v637 = vlaneseq
        %v638 = vshrl.u32 %v637, 7
        %v639 = vsub.s32 1, %v638
        %v640 = vrot.slane %v631, %v639
        %v641 = vlaneseq
        %v642 = vshrl.u32 %v641, 7
        %v643 = vsub.s32 2, %v642
        %v644 = vrot.slane %v631, %v643
        %v645 = vlaneseq
        %v646 = vshrl.u32 %v645, 7
        %v647 = vsub.s32 3, %v646
        %v648 = vrot.slane %v631, %v647
        %v649 = vlaneseq
        %v650 = vshrl.u32 %v649, 7
        %v651 = vsub.s32 4, %v650
        %v652 = vrot.slane %v631, %v651
        %v653 = vlaneseq
        %v654 = vshrl.u32 %v653, 7
        %v655 = vsub.s32 5, %v654
        %v656 = vrot.slane %v631, %v655
        %v657 = vlaneseq
        %v658 = vshrl.u32 %v657, 7
        %v659 = vsub.s32 6, %v658
        %v660 = vrot.slane %v631, %v659
        %v661 = vlaneseq
        %v662 = vshrl.u32 %v661, 7
        %v663 = vsub.s32 7, %v662
        %v664 = vrot.slane %v631, %v663
        %v737 = vunpack.c.l.b16 %v567
        %v738 = vunpack.c.h.b16 %v567
        %v739 = vunpack.c.l.b16 %v568
        %v740 = vunpack.c.h.b16 %v568
        %v741 = vunpack.c.l.b16 %v569
        %v742 = vunpack.c.h.b16 %v569
        %v743 = vunpack.c.l.b16 %v570
        %v744 = vunpack.c.h.b16 %v570
        %v745 = vunpack.c.l.b16 %v571
        %v746 = vunpack.c.h.b16 %v571
        %v747 = vunpack.c.l.b16 %v572
        %v748 = vunpack.c.h.b16 %v572
        %v749 = vunpack.c.l.b16 %v573
        %v750 = vunpack.c.h.b16 %v573
        %v751 = vunpack.c.l.b16 %v574
        %v752 = vunpack.c.h.b16 %v574
        %v753 = vunpack.c.l.b16 %v575
        %v754 = vunpack.c.h.b16 %v575
        %v755 = vunpack.c.l.b16 %v576
        %v756 = vunpack.c.h.b16 %v576
        %v757 = vunpack.c.l.b16 %v577
        %v758 = vunpack.c.h.b16 %v577
        %v759 = vunpack.c.l.b16 %v578
        %v760 = vunpack.c.h.b16 %v578
        %v761 = vunpack.c.l.b16 %v579
        %v762 = vunpack.c.h.b16 %v579
        %v763 = vunpack.c.l.b16 %v580
        %v764 = vunpack.c.h.b16 %v580
        %v765 = vunpack.c.l.b16 %v581
        %v766 = vunpack.c.h.b16 %v581
        %v767 = vunpack.c.l.b16 %v582
        %v768 = vunpack.c.h.b16 %v582
        %v769 = vunpack.c.l.b16 %v583
        %v770 = vunpack.c.h.b16 %v583
        %v771 = vunpack.c.l.b16 %v584
        %v772 = vunpack.c.h.b16 %v584
        %v773 = vunpack.c.l.b16 %v585
        %v774 = vunpack.c.h.b16 %v585
        %v775 = vunpack.c.l.b16 %v586
        %v776 = vunpack.c.h.b16 %v586
        %v777 = vunpack.c.l.b16 %v587
        %v778 = vunpack.c.h.b16 %v587
        %v779 = vunpack.c.l.b16 %v588
        %v780 = vunpack.c.h.b16 %v588
        %v781 = vunpack.c.l.b16 %v589
        %v782 = vunpack.c.h.b16 %v589
        %v783 = vunpack.c.l.b16 %v590
        %v784 = vunpack.c.h.b16 %v590
        %v785 = vunpack.c.l.b16 %v591
        %v786 = vunpack.c.h.b16 %v591
        %v787 = vunpack.c.l.b16 %v592
        %v788 = vunpack.c.h.b16 %v592
        %v789 = vunpack.c.l.b16 %v593
        %v790 = vunpack.c.h.b16 %v593
        %v791 = vunpack.c.l.b16 %v594
        %v792 = vunpack.c.h.b16 %v594
        %v793 = vunpack.c.l.b16 %v595
        %v794 = vunpack.c.h.b16 %v595
        %v795 = vunpack.c.l.b16 %v596
        %v796 = vunpack.c.h.b16 %v596
        %v797 = vunpack.c.l.b16 %v597
        %v798 = vunpack.c.h.b16 %v597
        %v799 = vunpack.c.l.b16 %v598
        %v800 = vunpack.c.h.b16 %v598
        %v801 = vunpack.c.l.b16 %v599
        %v802 = vunpack.c.h.b16 %v599
        %v803 = vunpack.c.l.b16 %v600
        %v804 = vunpack.c.h.b16 %v600
        %v805 = vunpack.c.l.b16 %v601
        %v806 = vunpack.c.h.b16 %v601
        %v807 = vunpack.c.l.b16 %v602
        %v808 = vunpack.c.h.b16 %v602
        %v809 = vunpack.c.l.b16 %v603
        %v810 = vunpack.c.h.b16 %v603
        %v811 = vunpack.c.l.b16 %v604
        %v812 = vunpack.c.h.b16 %v604
        %v813 = vunpack.c.l.b16 %v605
        %v814 = vunpack.c.h.b16 %v605
        %v815 = vunpack.c.l.b16 %v606
        %v816 = vunpack.c.h.b16 %v606
        %v817 = vunpack.c.l.b16 %v607
        %v818 = vunpack.c.h.b16 %v607
        %v819 = vunpack.c.l.b16 %v608
        %v820 = vunpack.c.h.b16 %v608
        %v821 = vunpack.c.l.b16 %v609
        %v822 = vunpack.c.h.b16 %v609
        %v823 = vunpack.c.l.b16 %v610
        %v824 = vunpack.c.h.b16 %v610
        %v825 = vunpack.c.l.b16 %v611
        %v826 = vunpack.c.h.b16 %v611
        %v827 = vunpack.c.l.b16 %v612
        %v828 = vunpack.c.h.b16 %v612
        %v829 = vunpack.c.l.b16 %v613
        %v830 = vunpack.c.h.b16 %v613
        %v831 = vunpack.c.l.b16 %v614
        %v832 = vunpack.c.h.b16 %v614
        %v833 = vunpack.c.l.b16 %v615
        %v834 = vunpack.c.h.b16 %v615
        %v835 = vunpack.c.l.b16 %v616
        %v836 = vunpack.c.h.b16 %v616
        %v837 = vunpack.c.l.b16 %v617
        %v838 = vunpack.c.h.b16 %v617
        %v839 = vunpack.c.l.b16 %v618
        %v840 = vunpack.c.h.b16 %v618
        %v841 = vunpack.c.l.b16 %v619
        %v842 = vunpack.c.h.b16 %v619
        %v843 = vunpack.c.l.b16 %v620
        %v844 = vunpack.c.h.b16 %v620
        %v845 = vunpack.c.l.b16 %v621
        %v846 = vunpack.c.h.b16 %v621
        %v847 = vunpack.c.l.b16 %v622
        %v848 = vunpack.c.h.b16 %v622
        %v849 = vunpack.c.l.b16 %v623
        %v850 = vunpack.c.h.b16 %v623
        %v851 = vunpack.c.l.b16 %v624
        %v852 = vunpack.c.h.b16 %v624
        %v853 = vunpack.c.l.b16 %v625
        %v854 = vunpack.c.h.b16 %v625
        %v855 = vunpack.c.l.b16 %v626
        %v856 = vunpack.c.h.b16 %v626
        %v857 = vunpack.c.l.b16 %v627
        %v858 = vunpack.c.h.b16 %v627
        %v859 = vunpack.c.l.b16 %v628
        %v860 = vunpack.c.h.b16 %v628
        %v861 = vunpack.c.l.b16 %v629
        %v862 = vunpack.c.h.b16 %v629
        %v863 = vunpack.c.l.b16 %v630
        %v864 = vunpack.c.h.b16 %v630
        %v865 = vpack.c.b16 %v745, %v737
        %v866 = vpack.c.b16 %v746, %v738
        %v867 = vpack.c.b16 %v747, %v739
        %v868 = vpack.c.b16 %v748, %v740
        %v869 = vpack.c.b16 %v749, %v741
        %v870 = vpack.c.b16 %v750, %v742
        %v871 = vpack.c.b16 %v751, %v743
        %v872 = vpack.c.b16 %v752, %v744
        %v873 = vpack.c.b16 %v761, %v753
        %v874 = vpack.c.b16 %v762, %v754
        %v875 = vpack.c.b16 %v763, %v755
        %v876 = vpack.c.b16 %v764, %v756
        %v877 = vpack.c.b16 %v765, %v757
        %v878 = vpack.c.b16 %v766, %v758
        %v879 = vpack.c.b16 %v767, %v759
        %v880 = vpack.c.b16 %v768, %v760
        %v881 = vpack.c.b16 %v777, %v769
        %v882 = vpack.c.b16 %v778, %v770
        %v883 = vpack.c.b16 %v779, %v771
        %v884 = vpack.c.b16 %v780, %v772
        %v885 = vpack.c.b16 %v781, %v773
        %v886 = vpack.c.b16 %v782, %v774
        %v887 = vpack.c.b16 %v783, %v775
        %v888 = vpack.c.b16 %v784, %v776
        %v889 = vpack.c.b16 %v793, %v785
        %v890 = vpack.c.b16 %v794, %v786
        %v891 = vpack.c.b16 %v795, %v787
        %v892 = vpack.c.b16 %v796, %v788
        %v893 = vpack.c.b16 %v797, %v789
        %v894 = vpack.c.b16 %v798, %v790
        %v895 = vpack.c.b16 %v799, %v791
        %v896 = vpack.c.b16 %v800, %v792
        %v897 = vpack.c.b16 %v809, %v801
        %v898 = vpack.c.b16 %v810, %v802
        %v899 = vpack.c.b16 %v811, %v803
        %v900 = vpack.c.b16 %v812, %v804
        %v901 = vpack.c.b16 %v813, %v805
        %v902 = vpack.c.b16 %v814, %v806
        %v903 = vpack.c.b16 %v815, %v807
        %v904 = vpack.c.b16 %v816, %v808
        %v905 = vpack.c.b16 %v825, %v817
        %v906 = vpack.c.b16 %v826, %v818
        %v907 = vpack.c.b16 %v827, %v819
        %v908 = vpack.c.b16 %v828, %v820
        %v909 = vpack.c.b16 %v829, %v821
        %v910 = vpack.c.b16 %v830, %v822
        %v911 = vpack.c.b16 %v831, %v823
        %v912 = vpack.c.b16 %v832, %v824
        %v913 = vpack.c.b16 %v841, %v833
        %v914 = vpack.c.b16 %v842, %v834
        %v915 = vpack.c.b16 %v843, %v835
        %v916 = vpack.c.b16 %v844, %v836
        %v917 = vpack.c.b16 %v845, %v837
        %v918 = vpack.c.b16 %v846, %v838
        %v919 = vpack.c.b16 %v847, %v839
        %v920 = vpack.c.b16 %v848, %v840
        %v921 = vpack.c.b16 %v857, %v849
        %v922 = vpack.c.b16 %v858, %v850
        %v923 = vpack.c.b16 %v859, %v851
        %v924 = vpack.c.b16 %v860, %v852
        %v925 = vpack.c.b16 %v861, %v853
        %v926 = vpack.c.b16 %v862, %v854
        %v927 = vpack.c.b16 %v863, %v855
        %v928 = vpack.c.b16 %v864, %v856
        %993 = vmatprep.subr.bf16.mxu0 %v866
        %994 = vmatpush1.bf16.msra.mxu0 %v865
        %995 = vmatprep.subr.bf16.mxu0 %v874
        %996 = vmatpush1.bf16.msra.mxu0 %v873
        %997 = vmatprep.subr.bf16.mxu0 %v882
        %998 = vmatpush1.bf16.msra.mxu0 %v881
        %999 = vmatprep.subr.bf16.mxu0 %v890
        %1000 = vmatpush1.bf16.msra.mxu0 %v889
        %1001 = vmatprep.subr.bf16.mxu0 %v898
        %1002 = vmatpush1.bf16.msra.mxu0 %v897
        %1003 = vmatprep.subr.bf16.mxu0 %v906
        %1004 = vmatpush1.bf16.msra.mxu0 %v905
        %1005 = vmatprep.subr.bf16.mxu0 %v914
        %1006 = vmatpush1.bf16.msra.mxu0 %v913
        %1007 = vmatprep.subr.bf16.mxu0 %v922
        %1008 = vmatpush1.bf16.msra.mxu0 %v921
        %1009 = vmatprep.subr.bf16.mxu0 0
        %1010 = vmatpush1.bf16.msra.mxu0 0
        %1011 = vmatprep.subr.bf16.mxu0 0
        %1012 = vmatpush1.bf16.msra.mxu0 0
        %1013 = vmatprep.subr.bf16.mxu0 0
        %1014 = vmatpush1.bf16.msra.mxu0 0
        %1015 = vmatprep.subr.bf16.mxu0 0
        %1016 = vmatpush1.bf16.msra.mxu0 0
        %1017 = vmatprep.subr.bf16.mxu0 0
        %1018 = vmatpush1.bf16.msra.mxu0 0
        %1019 = vmatprep.subr.bf16.mxu0 0
        %1020 = vmatpush1.bf16.msra.mxu0 0
        %1021 = vmatprep.subr.bf16.mxu0 0
        %1022 = vmatpush1.bf16.msra.mxu0 0
        %1023 = vmatprep.subr.bf16.mxu0 0
        %1024 = vmatpush1.bf16.msra.mxu0 0
        %1025 = vmatprep.mubr.bf16.mxu0 0
        %1026 = vmatmul.mubr.bf16.gmra.mrb[0].mxu0 %v535
        %v1027 = vpop.f32.mrb[0].mxu0
        %v1028 = vadd.f32 %v636, %v1027
        %v1029 = vpop.f32.mrb[0].mxu0
        %v1030 = vadd.f32 %v640, %v1029
        %v1031 = vpop.f32.mrb[0].mxu0
        %v1032 = vadd.f32 %v636, %v1031
        %v1033 = vpop.f32.mrb[0].mxu0
        %v1034 = vadd.f32 %v640, %v1033
        %1035 = vmatprep.mubr.bf16.mxu0 0
        %1036 = vmatmul.mubr.bf16.gmra.mrb[0].mxu0 %v536
        %v1037 = vpop.f32.mrb[0].mxu0
        %v1038 = vadd.f32 %v636, %v1037
        %v1039 = vpop.f32.mrb[0].mxu0
        %v1040 = vadd.f32 %v640, %v1039
        %v1041 = vpop.f32.mrb[0].mxu0
        %v1042 = vadd.f32 %v636, %v1041
        %v1043 = vpop.f32.mrb[0].mxu0
        %v1044 = vadd.f32 %v640, %v1043
        %1045 = vmatprep.mubr.bf16.mxu0 0
        %1046 = vmatmul.mubr.bf16.gmra.mrb[0].mxu0 %v537
        %v1047 = vpop.f32.mrb[0].mxu0
        %v1048 = vadd.f32 %v636, %v1047
        %v1049 = vpop.f32.mrb[0].mxu0
        %v1050 = vadd.f32 %v640, %v1049
        %v1051 = vpop.f32.mrb[0].mxu0
        %v1052 = vadd.f32 %v636, %v1051
        %v1053 = vpop.f32.mrb[0].mxu0
        %v1054 = vadd.f32 %v640, %v1053
        %1055 = vmatprep.mubr.bf16.mxu0 0
        %1056 = vmatmul.mubr.bf16.gmra.mrb[0].mxu0 %v538
        %v1057 = vpop.f32.mrb[0].mxu0
        %v1058 = vadd.f32 %v636, %v1057
        %v1059 = vpop.f32.mrb[0].mxu0
        %v1060 = vadd.f32 %v640, %v1059
        %v1061 = vpop.f32.mrb[0].mxu0
        %v1062 = vadd.f32 %v636, %v1061
        %v1063 = vpop.f32.mrb[0].mxu0
        %v1064 = vadd.f32 %v640, %v1063
        %1065 = vmatprep.mubr.bf16.mxu0 0
        %1066 = vmatmul.mubr.bf16.gmra.mrb[0].mxu0 %v539
        %v1067 = vpop.f32.mrb[0].mxu0
        %v1068 = vadd.f32 %v636, %v1067
        %v1069 = vpop.f32.mrb[0].mxu0
        %v1070 = vadd.f32 %v640, %v1069
        %v1071 = vpop.f32.mrb[0].mxu0
        %v1072 = vadd.f32 %v636, %v1071
        %v1073 = vpop.f32.mrb[0].mxu0
        %v1074 = vadd.f32 %v640, %v1073
        %1075 = vmatprep.mubr.bf16.mxu0 0
        %1076 = vmatmul.mubr.bf16.gmra.mrb[0].mxu0 %v540
        %v1077 = vpop.f32.mrb[0].mxu0
        %v1078 = vadd.f32 %v636, %v1077
        %v1079 = vpop.f32.mrb[0].mxu0
        %v1080 = vadd.f32 %v640, %v1079
        %v1081 = vpop.f32.mrb[0].mxu0
        %v1082 = vadd.f32 %v636, %v1081
        %v1083 = vpop.f32.mrb[0].mxu0
        %v1084 = vadd.f32 %v640, %v1083
        %1085 = vmatprep.mubr.bf16.mxu0 0
        %1086 = vmatmul.mubr.bf16.gmra.mrb[0].mxu0 %v541
        %v1087 = vpop.f32.mrb[0].mxu0
        %v1088 = vadd.f32 %v636, %v1087
        %v1089 = vpop.f32.mrb[0].mxu0
        %v1090 = vadd.f32 %v640, %v1089
        %v1091 = vpop.f32.mrb[0].mxu0
        %v1092 = vadd.f32 %v636, %v1091
        %v1093 = vpop.f32.mrb[0].mxu0
        %v1094 = vadd.f32 %v640, %v1093
        %1095 = vmatprep.mubr.bf16.mxu0 0
        %1096 = vmatmul.mubr.bf16.gmra.mrb[0].mxu0 %v542
        %v1097 = vpop.f32.mrb[0].mxu0
        %v1098 = vadd.f32 %v636, %v1097
        %v1099 = vpop.f32.mrb[0].mxu0
        %v1100 = vadd.f32 %v640, %v1099
        %v1101 = vpop.f32.mrb[0].mxu0
        %v1102 = vadd.f32 %v636, %v1101
        %v1103 = vpop.f32.mrb[0].mxu0
        %v1104 = vadd.f32 %v640, %v1103
        %1105 = vdwg.mxu0
        %1106 = vmatprep.subr.bf16.mxu0 %v868
        %1107 = vmatpush1.bf16.msra.mxu0 %v867
        %1108 = vmatprep.subr.bf16.mxu0 %v876
        %1109 = vmatpush1.bf16.msra.mxu0 %v875
        %1110 = vmatprep.subr.bf16.mxu0 %v884
        %1111 = vmatpush1.bf16.msra.mxu0 %v883
        %1112 = vmatprep.subr.bf16.mxu0 %v892
        %1113 = vmatpush1.bf16.msra.mxu0 %v891
        %1114 = vmatprep.subr.bf16.mxu0 %v900
        %1115 = vmatpush1.bf16.msra.mxu0 %v899
        %1116 = vmatprep.subr.bf16.mxu0 %v908
        %1117 = vmatpush1.bf16.msra.mxu0 %v907
        %1118 = vmatprep.subr.bf16.mxu0 %v916
        %1119 = vmatpush1.bf16.msra.mxu0 %v915
        %1120 = vmatprep.subr.bf16.mxu0 %v924
        %1121 = vmatpush1.bf16.msra.mxu0 %v923
        %1122 = vmatprep.subr.bf16.mxu0 0
        %1123 = vmatpush1.bf16.msra.mxu0 0
        %1124 = vmatprep.subr.bf16.mxu0 0
        %1125 = vmatpush1.bf16.msra.mxu0 0
        %1126 = vmatprep.subr.bf16.mxu0 0
        %1127 = vmatpush1.bf16.msra.mxu0 0
        %1128 = vmatprep.subr.bf16.mxu0 0
        %1129 = vmatpush1.bf16.msra.mxu0 0
        %1130 = vmatprep.subr.bf16.mxu0 0
        %1131 = vmatpush1.bf16.msra.mxu0 0
        %1132 = vmatprep.subr.bf16.mxu0 0
        %1133 = vmatpush1.bf16.msra.mxu0 0
        %1134 = vmatprep.subr.bf16.mxu0 0
        %1135 = vmatpush1.bf16.msra.mxu0 0
        %1136 = vmatprep.subr.bf16.mxu0 0
        %1137 = vmatpush1.bf16.msra.mxu0 0
        %1138 = vmatprep.mubr.bf16.mxu0 0
        %1139 = vmatmul.mubr.bf16.gmra.mrb[0].mxu0 %v535
        %v1140 = vpop.f32.mrb[0].mxu0
        %v1141 = vadd.f32 %v644, %v1140
        %v1142 = vpop.f32.mrb[0].mxu0
        %v1143 = vadd.f32 %v648, %v1142
        %v1144 = vpop.f32.mrb[0].mxu0
        %v1145 = vadd.f32 %v644, %v1144
        %v1146 = vpop.f32.mrb[0].mxu0
        %v1147 = vadd.f32 %v648, %v1146
        %1148 = vmatprep.mubr.bf16.mxu0 0
        %1149 = vmatmul.mubr.bf16.gmra.mrb[0].mxu0 %v536
        %v1150 = vpop.f32.mrb[0].mxu0
        %v1151 = vadd.f32 %v644, %v1150
        %v1152 = vpop.f32.mrb[0].mxu0
        %v1153 = vadd.f32 %v648, %v1152
        %v1154 = vpop.f32.mrb[0].mxu0
        %v1155 = vadd.f32 %v644, %v1154
        %v1156 = vpop.f32.mrb[0].mxu0
        %v1157 = vadd.f32 %v648, %v1156
        %1158 = vmatprep.mubr.bf16.mxu0 0
        %1159 = vmatmul.mubr.bf16.gmra.mrb[0].mxu0 %v537
        %v1160 = vpop.f32.mrb[0].mxu0
        %v1161 = vadd.f32 %v644, %v1160
        %v1162 = vpop.f32.mrb[0].mxu0
        %v1163 = vadd.f32 %v648, %v1162
        %v1164 = vpop.f32.mrb[0].mxu0
        %v1165 = vadd.f32 %v644, %v1164
        %v1166 = vpop.f32.mrb[0].mxu0
        %v1167 = vadd.f32 %v648, %v1166
        %1168 = vmatprep.mubr.bf16.mxu0 0
        %1169 = vmatmul.mubr.bf16.gmra.mrb[0].mxu0 %v538
        %v1170 = vpop.f32.mrb[0].mxu0
        %v1171 = vadd.f32 %v644, %v1170
        %v1172 = vpop.f32.mrb[0].mxu0
        %v1173 = vadd.f32 %v648, %v1172
        %v1174 = vpop.f32.mrb[0].mxu0
        %v1175 = vadd.f32 %v644, %v1174
        %v1176 = vpop.f32.mrb[0].mxu0
        %v1177 = vadd.f32 %v648, %v1176
        %1178 = vmatprep.mubr.bf16.mxu0 0
        %1179 = vmatmul.mubr.bf16.gmra.mrb[0].mxu0 %v539
        %v1180 = vpop.f32.mrb[0].mxu0
        %v1181 = vadd.f32 %v644, %v1180
        %v1182 = vpop.f32.mrb[0].mxu0
        %v1183 = vadd.f32 %v648, %v1182
        %v1184 = vpop.f32.mrb[0].mxu0
        %v1185 = vadd.f32 %v644, %v1184
        %v1186 = vpop.f32.mrb[0].mxu0
        %v1187 = vadd.f32 %v648, %v1186
        %1188 = vmatprep.mubr.bf16.mxu0 0
        %1189 = vmatmul.mubr.bf16.gmra.mrb[0].mxu0 %v540
        %v1190 = vpop.f32.mrb[0].mxu0
        %v1191 = vadd.f32 %v644, %v1190
        %v1192 = vpop.f32.mrb[0].mxu0
        %v1193 = vadd.f32 %v648, %v1192
        %v1194 = vpop.f32.mrb[0].mxu0
        %v1195 = vadd.f32 %v644, %v1194
        %v1196 = vpop.f32.mrb[0].mxu0
        %v1197 = vadd.f32 %v648, %v1196
        %1198 = vmatprep.mubr.bf16.mxu0 0
        %1199 = vmatmul.mubr.bf16.gmra.mrb[0].mxu0 %v541
        %v1200 = vpop.f32.mrb[0].mxu0
        %v1201 = vadd.f32 %v644, %v1200
        %v1202 = vpop.f32.mrb[0].mxu0
        %v1203 = vadd.f32 %v648, %v1202
        %v1204 = vpop.f32.mrb[0].mxu0
        %v1205 = vadd.f32 %v644, %v1204
        %v1206 = vpop.f32.mrb[0].mxu0
        %v1207 = vadd.f32 %v648, %v1206
        %1208 = vmatprep.mubr.bf16.mxu0 0
        %1209 = vmatmul.mubr.bf16.gmra.mrb[0].mxu0 %v542
        %v1210 = vpop.f32.mrb[0].mxu0
        %v1211 = vadd.f32 %v644, %v1210
        %v1212 = vpop.f32.mrb[0].mxu0
        %v1213 = vadd.f32 %v648, %v1212
        %v1214 = vpop.f32.mrb[0].mxu0
        %v1215 = vadd.f32 %v644, %v1214
        %v1216 = vpop.f32.mrb[0].mxu0
        %v1217 = vadd.f32 %v648, %v1216
        %1218 = vdwg.mxu0
        %1219 = vmatprep.subr.bf16.mxu0 %v870
        %1220 = vmatpush1.bf16.msra.mxu0 %v869
        %1221 = vmatprep.subr.bf16.mxu0 %v878
        %1222 = vmatpush1.bf16.msra.mxu0 %v877
        %1223 = vmatprep.subr.bf16.mxu0 %v886
        %1224 = vmatpush1.bf16.msra.mxu0 %v885
        %1225 = vmatprep.subr.bf16.mxu0 %v894
        %1226 = vmatpush1.bf16.msra.mxu0 %v893
        %1227 = vmatprep.subr.bf16.mxu0 %v902
        %1228 = vmatpush1.bf16.msra.mxu0 %v901
        %1229 = vmatprep.subr.bf16.mxu0 %v910
        %1230 = vmatpush1.bf16.msra.mxu0 %v909
        %1231 = vmatprep.subr.bf16.mxu0 %v918
        %1232 = vmatpush1.bf16.msra.mxu0 %v917
        %1233 = vmatprep.subr.bf16.mxu0 %v926
        %1234 = vmatpush1.bf16.msra.mxu0 %v925
        %1235 = vmatprep.subr.bf16.mxu0 0
        %1236 = vmatpush1.bf16.msra.mxu0 0
        %1237 = vmatprep.subr.bf16.mxu0 0
        %1238 = vmatpush1.bf16.msra.mxu0 0
        %1239 = vmatprep.subr.bf16.mxu0 0
        %1240 = vmatpush1.bf16.msra.mxu0 0
        %1241 = vmatprep.subr.bf16.mxu0 0
        %1242 = vmatpush1.bf16.msra.mxu0 0
        %1243 = vmatprep.subr.bf16.mxu0 0
        %1244 = vmatpush1.bf16.msra.mxu0 0
        %1245 = vmatprep.subr.bf16.mxu0 0
        %1246 = vmatpush1.bf16.msra.mxu0 0
        %1247 = vmatprep.subr.bf16.mxu0 0
        %1248 = vmatpush1.bf16.msra.mxu0 0
        %1249 = vmatprep.subr.bf16.mxu0 0
        %1250 = vmatpush1.bf16.msra.mxu0 0
        %1251 = vmatprep.mubr.bf16.mxu0 0
        %1252 = vmatmul.mubr.bf16.gmra.mrb[0].mxu0 %v535
        %v1253 = vpop.f32.mrb[0].mxu0
        %v1254 = vadd.f32 %v652, %v1253
        %v1255 = vpop.f32.mrb[0].mxu0
        %v1256 = vadd.f32 %v656, %v1255
        %v1257 = vpop.f32.mrb[0].mxu0
        %v1258 = vadd.f32 %v652, %v1257
        %v1259 = vpop.f32.mrb[0].mxu0
        %v1260 = vadd.f32 %v656, %v1259
        %1261 = vmatprep.mubr.bf16.mxu0 0
        %1262 = vmatmul.mubr.bf16.gmra.mrb[0].mxu0 %v536
        %v1263 = vpop.f32.mrb[0].mxu0
        %v1264 = vadd.f32 %v652, %v1263
        %v1265 = vpop.f32.mrb[0].mxu0
        %v1266 = vadd.f32 %v656, %v1265
        %v1267 = vpop.f32.mrb[0].mxu0
        %v1268 = vadd.f32 %v652, %v1267
        %v1269 = vpop.f32.mrb[0].mxu0
        %v1270 = vadd.f32 %v656, %v1269
        %1271 = vmatprep.mubr.bf16.mxu0 0
        %1272 = vmatmul.mubr.bf16.gmra.mrb[0].mxu0 %v537
        %v1273 = vpop.f32.mrb[0].mxu0
        %v1274 = vadd.f32 %v652, %v1273
        %v1275 = vpop.f32.mrb[0].mxu0
        %v1276 = vadd.f32 %v656, %v1275
        %v1277 = vpop.f32.mrb[0].mxu0
        %v1278 = vadd.f32 %v652, %v1277
        %v1279 = vpop.f32.mrb[0].mxu0
        %v1280 = vadd.f32 %v656, %v1279
        %1281 = vmatprep.mubr.bf16.mxu0 0
        %1282 = vmatmul.mubr.bf16.gmra.mrb[0].mxu0 %v538
        %v1283 = vpop.f32.mrb[0].mxu0
        %v1284 = vadd.f32 %v652, %v1283
        %v1285 = vpop.f32.mrb[0].mxu0
        %v1286 = vadd.f32 %v656, %v1285
        %v1287 = vpop.f32.mrb[0].mxu0
        %v1288 = vadd.f32 %v652, %v1287
        %v1289 = vpop.f32.mrb[0].mxu0
        %v1290 = vadd.f32 %v656, %v1289
        %1291 = vmatprep.mubr.bf16.mxu0 0
        %1292 = vmatmul.mubr.bf16.gmra.mrb[0].mxu0 %v539
        %v1293 = vpop.f32.mrb[0].mxu0
        %v1294 = vadd.f32 %v652, %v1293
        %v1295 = vpop.f32.mrb[0].mxu0
        %v1296 = vadd.f32 %v656, %v1295
        %v1297 = vpop.f32.mrb[0].mxu0
        %v1298 = vadd.f32 %v652, %v1297
        %v1299 = vpop.f32.mrb[0].mxu0
        %v1300 = vadd.f32 %v656, %v1299
        %1301 = vmatprep.mubr.bf16.mxu0 0
        %1302 = vmatmul.mubr.bf16.gmra.mrb[0].mxu0 %v540
        %v1303 = vpop.f32.mrb[0].mxu0
        %v1304 = vadd.f32 %v652, %v1303
        %v1305 = vpop.f32.mrb[0].mxu0
        %v1306 = vadd.f32 %v656, %v1305
        %v1307 = vpop.f32.mrb[0].mxu0
        %v1308 = vadd.f32 %v652, %v1307
        %v1309 = vpop.f32.mrb[0].mxu0
        %v1310 = vadd.f32 %v656, %v1309
        %1311 = vmatprep.mubr.bf16.mxu0 0
        %1312 = vmatmul.mubr.bf16.gmra.mrb[0].mxu0 %v541
        %v1313 = vpop.f32.mrb[0].mxu0
        %v1314 = vadd.f32 %v652, %v1313
        %v1315 = vpop.f32.mrb[0].mxu0
        %v1316 = vadd.f32 %v656, %v1315
        %v1317 = vpop.f32.mrb[0].mxu0
        %v1318 = vadd.f32 %v652, %v1317
        %v1319 = vpop.f32.mrb[0].mxu0
        %v1320 = vadd.f32 %v656, %v1319
        %1321 = vmatprep.mubr.bf16.mxu0 0
        %1322 = vmatmul.mubr.bf16.gmra.mrb[0].mxu0 %v542
        %v1323 = vpop.f32.mrb[0].mxu0
        %v1324 = vadd.f32 %v652, %v1323
        %v1325 = vpop.f32.mrb[0].mxu0
        %v1326 = vadd.f32 %v656, %v1325
        %v1327 = vpop.f32.mrb[0].mxu0
        %v1328 = vadd.f32 %v652, %v1327
        %v1329 = vpop.f32.mrb[0].mxu0
        %v1330 = vadd.f32 %v656, %v1329
        %1331 = vdwg.mxu0
        %1332 = vmatprep.subr.bf16.mxu0 %v872
        %1333 = vmatpush1.bf16.msra.mxu0 %v871
        %1334 = vmatprep.subr.bf16.mxu0 %v880
        %1335 = vmatpush1.bf16.msra.mxu0 %v879
        %1336 = vmatprep.subr.bf16.mxu0 %v888
        %1337 = vmatpush1.bf16.msra.mxu0 %v887
        %1338 = vmatprep.subr.bf16.mxu0 %v896
        %1339 = vmatpush1.bf16.msra.mxu0 %v895
        %1340 = vmatprep.subr.bf16.mxu0 %v904
        %1341 = vmatpush1.bf16.msra.mxu0 %v903
        %1342 = vmatprep.subr.bf16.mxu0 %v912
        %1343 = vmatpush1.bf16.msra.mxu0 %v911
        %1344 = vmatprep.subr.bf16.mxu0 %v920
        %1345 = vmatpush1.bf16.msra.mxu0 %v919
        %1346 = vmatprep.subr.bf16.mxu0 %v928
        %1347 = vmatpush1.bf16.msra.mxu0 %v927
        %1348 = vmatprep.subr.bf16.mxu0 0
        %1349 = vmatpush1.bf16.msra.mxu0 0
        %1350 = vmatprep.subr.bf16.mxu0 0
        %1351 = vmatpush1.bf16.msra.mxu0 0
        %1352 = vmatprep.subr.bf16.mxu0 0
        %1353 = vmatpush1.bf16.msra.mxu0 0
        %1354 = vmatprep.subr.bf16.mxu0 0
        %1355 = vmatpush1.bf16.msra.mxu0 0
        %1356 = vmatprep.subr.bf16.mxu0 0
        %1357 = vmatpush1.bf16.msra.mxu0 0
        %1358 = vmatprep.subr.bf16.mxu0 0
        %1359 = vmatpush1.bf16.msra.mxu0 0
        %1360 = vmatprep.subr.bf16.mxu0 0
        %1361 = vmatpush1.bf16.msra.mxu0 0
        %1362 = vmatprep.subr.bf16.mxu0 0
        %1363 = vmatpush1.bf16.msra.mxu0 0
        %1364 = vmatprep.mubr.bf16.mxu0 0
        %1365 = vmatmul.mubr.bf16.gmra.mrb[0].mxu0 %v535
        %v1366 = vpop.f32.mrb[0].mxu0
        %v1367 = vadd.f32 %v660, %v1366
        %v1368 = vpop.f32.mrb[0].mxu0
        %v1369 = vadd.f32 %v664, %v1368
        %v1370 = vpop.f32.mrb[0].mxu0
        %v1371 = vadd.f32 %v660, %v1370
        %v1372 = vpop.f32.mrb[0].mxu0
        %v1373 = vadd.f32 %v664, %v1372
        %1374 = vmatprep.mubr.bf16.mxu0 0
        %1375 = vmatmul.mubr.bf16.gmra.mrb[0].mxu0 %v536
        %v1376 = vpop.f32.mrb[0].mxu0
        %v1377 = vadd.f32 %v660, %v1376
        %v1378 = vpop.f32.mrb[0].mxu0
        %v1379 = vadd.f32 %v664, %v1378
        %v1380 = vpop.f32.mrb[0].mxu0
        %v1381 = vadd.f32 %v660, %v1380
        %v1382 = vpop.f32.mrb[0].mxu0
        %v1383 = vadd.f32 %v664, %v1382
        %1384 = vmatprep.mubr.bf16.mxu0 0
        %1385 = vmatmul.mubr.bf16.gmra.mrb[0].mxu0 %v537
        %v1386 = vpop.f32.mrb[0].mxu0
        %v1387 = vadd.f32 %v660, %v1386
        %v1388 = vpop.f32.mrb[0].mxu0
        %v1389 = vadd.f32 %v664, %v1388
        %v1390 = vpop.f32.mrb[0].mxu0
        %v1391 = vadd.f32 %v660, %v1390
        %v1392 = vpop.f32.mrb[0].mxu0
        %v1393 = vadd.f32 %v664, %v1392
        %1394 = vmatprep.mubr.bf16.mxu0 0
        %1395 = vmatmul.mubr.bf16.gmra.mrb[0].mxu0 %v538
        %v1396 = vpop.f32.mrb[0].mxu0
        %v1397 = vadd.f32 %v660, %v1396
        %v1398 = vpop.f32.mrb[0].mxu0
        %v1399 = vadd.f32 %v664, %v1398
        %v1400 = vpop.f32.mrb[0].mxu0
        %v1401 = vadd.f32 %v660, %v1400
        %v1402 = vpop.f32.mrb[0].mxu0
        %v1403 = vadd.f32 %v664, %v1402
        %1404 = vmatprep.mubr.bf16.mxu0 0
        %1405 = vmatmul.mubr.bf16.gmra.mrb[0].mxu0 %v539
        %v1406 = vpop.f32.mrb[0].mxu0
        %v1407 = vadd.f32 %v660, %v1406
        %v1408 = vpop.f32.mrb[0].mxu0
        %v1409 = vadd.f32 %v664, %v1408
        %v1410 = vpop.f32.mrb[0].mxu0
        %v1411 = vadd.f32 %v660, %v1410
        %v1412 = vpop.f32.mrb[0].mxu0
        %v1413 = vadd.f32 %v664, %v1412
        %1414 = vmatprep.mubr.bf16.mxu0 0
        %1415 = vmatmul.mubr.bf16.gmra.mrb[0].mxu0 %v540
        %v1416 = vpop.f32.mrb[0].mxu0
        %v1417 = vadd.f32 %v660, %v1416
        %v1418 = vpop.f32.mrb[0].mxu0
        %v1419 = vadd.f32 %v664, %v1418
        %v1420 = vpop.f32.mrb[0].mxu0
        %v1421 = vadd.f32 %v660, %v1420
        %v1422 = vpop.f32.mrb[0].mxu0
        %v1423 = vadd.f32 %v664, %v1422
        %1424 = vmatprep.mubr.bf16.mxu0 0
        %1425 = vmatmul.mubr.bf16.gmra.mrb[0].mxu0 %v541
        %v1426 = vpop.f32.mrb[0].mxu0
        %v1427 = vadd.f32 %v660, %v1426
        %v1428 = vpop.f32.mrb[0].mxu0
        %v1429 = vadd.f32 %v664, %v1428
        %v1430 = vpop.f32.mrb[0].mxu0
        %v1431 = vadd.f32 %v660, %v1430
        %v1432 = vpop.f32.mrb[0].mxu0
        %v1433 = vadd.f32 %v664, %v1432
        %1434 = vmatprep.mubr.bf16.mxu0 0
        %1435 = vmatmul.mubr.bf16.gmra.mrb[0].mxu0 %v542
        %v1436 = vpop.f32.mrb[0].mxu0
        %v1437 = vadd.f32 %v660, %v1436
        %v1438 = vpop.f32.mrb[0].mxu0
        %v1439 = vadd.f32 %v664, %v1438
        %v1440 = vpop.f32.mrb[0].mxu0
        %v1441 = vadd.f32 %v660, %v1440
        %v1442 = vpop.f32.mrb[0].mxu0
        %v1443 = vadd.f32 %v664, %v1442
        %1444 = vdwg.mxu0
        %v1445 = vld [vmem:[#allocation8] sm:$0xff]
        %v1446 = vld [vmem:[#allocation8 + $0x8] sm:$0xff]
        %v1447 = vld [vmem:[#allocation8 + $0x10] sm:$0xff]
        %v1448 = vld [vmem:[#allocation8 + $0x18] sm:$0xff]
        %v1449 = vld [vmem:[#allocation8 + $0x20] sm:$0xff]
        %v1450 = vld [vmem:[#allocation8 + $0x28] sm:$0xff]
        %v1451 = vld [vmem:[#allocation8 + $0x30] sm:$0xff]
        %v1452 = vld [vmem:[#allocation8 + $0x38] sm:$0xff]
        %v1453 = vld [vmem:[#allocation8 + $0x40] sm:$0xff]
        %v1454 = vld [vmem:[#allocation8 + $0x48] sm:$0xff]
        %v1455 = vld [vmem:[#allocation8 + $0x50] sm:$0xff]
        %v1456 = vld [vmem:[#allocation8 + $0x58] sm:$0xff]
        %v1457 = vld [vmem:[#allocation8 + $0x60] sm:$0xff]
        %v1458 = vld [vmem:[#allocation8 + $0x68] sm:$0xff]
        %v1459 = vld [vmem:[#allocation8 + $0x70] sm:$0xff]
        %v1460 = vld [vmem:[#allocation8 + $0x78] sm:$0xff]
        %v1461 = vld [vmem:[#allocation8 + $0x80] sm:$0xff]
        %v1462 = vld [vmem:[#allocation8 + $0x88] sm:$0xff]
        %v1463 = vld [vmem:[#allocation8 + $0x90] sm:$0xff]
        %v1464 = vld [vmem:[#allocation8 + $0x98] sm:$0xff]
        %v1465 = vld [vmem:[#allocation8 + $0xa0] sm:$0xff]
        %v1466 = vld [vmem:[#allocation8 + $0xa8] sm:$0xff]
        %v1467 = vld [vmem:[#allocation8 + $0xb0] sm:$0xff]
        %v1468 = vld [vmem:[#allocation8 + $0xb8] sm:$0xff]
        %v1469 = vld [vmem:[#allocation8 + $0xc0] sm:$0xff]
        %v1470 = vld [vmem:[#allocation8 + $0xc8] sm:$0xff]
        %v1471 = vld [vmem:[#allocation8 + $0xd0] sm:$0xff]
        %v1472 = vld [vmem:[#allocation8 + $0xd8] sm:$0xff]
        %v1473 = vld [vmem:[#allocation8 + $0xe0] sm:$0xff]
        %v1474 = vld [vmem:[#allocation8 + $0xe8] sm:$0xff]
        %v1475 = vld [vmem:[#allocation8 + $0xf0] sm:$0xff]
        %v1476 = vld [vmem:[#allocation8 + $0xf8] sm:$0xff]
        %v1477 = vld [vmem:[#allocation8 + $0x100] sm:$0xff]
        %v1478 = vld [vmem:[#allocation8 + $0x108] sm:$0xff]
        %v1479 = vld [vmem:[#allocation8 + $0x110] sm:$0xff]
        %v1480 = vld [vmem:[#allocation8 + $0x118] sm:$0xff]
        %v1481 = vld [vmem:[#allocation8 + $0x120] sm:$0xff]
        %v1482 = vld [vmem:[#allocation8 + $0x128] sm:$0xff]
        %v1483 = vld [vmem:[#allocation8 + $0x130] sm:$0xff]
        %v1484 = vld [vmem:[#allocation8 + $0x138] sm:$0xff]
        %v1485 = vld [vmem:[#allocation8 + $0x140] sm:$0xff]
        %v1486 = vld [vmem:[#allocation8 + $0x148] sm:$0xff]
        %v1487 = vld [vmem:[#allocation8 + $0x150] sm:$0xff]
        %v1488 = vld [vmem:[#allocation8 + $0x158] sm:$0xff]
        %v1489 = vld [vmem:[#allocation8 + $0x160] sm:$0xff]
        %v1490 = vld [vmem:[#allocation8 + $0x168] sm:$0xff]
        %v1491 = vld [vmem:[#allocation8 + $0x170] sm:$0xff]
        %v1492 = vld [vmem:[#allocation8 + $0x178] sm:$0xff]
        %v1493 = vld [vmem:[#allocation8 + $0x180] sm:$0xff]
        %v1494 = vld [vmem:[#allocation8 + $0x188] sm:$0xff]
        %v1495 = vld [vmem:[#allocation8 + $0x190] sm:$0xff]
        %v1496 = vld [vmem:[#allocation8 + $0x198] sm:$0xff]
        %v1497 = vld [vmem:[#allocation8 + $0x1a0] sm:$0xff]
        %v1498 = vld [vmem:[#allocation8 + $0x1a8] sm:$0xff]
        %v1499 = vld [vmem:[#allocation8 + $0x1b0] sm:$0xff]
        %v1500 = vld [vmem:[#allocation8 + $0x1b8] sm:$0xff]
        %v1501 = vld [vmem:[#allocation8 + $0x1c0] sm:$0xff]
        %v1502 = vld [vmem:[#allocation8 + $0x1c8] sm:$0xff]
        %v1503 = vld [vmem:[#allocation8 + $0x1d0] sm:$0xff]
        %v1504 = vld [vmem:[#allocation8 + $0x1d8] sm:$0xff]
        %v1505 = vld [vmem:[#allocation8 + $0x1e0] sm:$0xff]
        %v1506 = vld [vmem:[#allocation8 + $0x1e8] sm:$0xff]
        %v1507 = vld [vmem:[#allocation8 + $0x1f0] sm:$0xff]
        %v1508 = vld [vmem:[#allocation8 + $0x1f8] sm:$0xff]
        %v1509 = vld [vmem:[%s5] sm:$0xff]
        %v1511 = vlaneseq
        %v1512 = vshrl.u32 %v1511, 7
        %v1513 = vsub.s32 0, %v1512
        %v1514 = vrot.slane %v1509, %v1513
        %v1515 = vlaneseq
        %v1516 = vshrl.u32 %v1515, 7
        %v1517 = vsub.s32 1, %v1516
        %v1518 = vrot.slane %v1509, %v1517
        %v1519 = vlaneseq
        %v1520 = vshrl.u32 %v1519, 7
        %v1521 = vsub.s32 2, %v1520
        %v1522 = vrot.slane %v1509, %v1521
        %v1523 = vlaneseq
        %v1524 = vshrl.u32 %v1523, 7
        %v1525 = vsub.s32 3, %v1524
        %v1526 = vrot.slane %v1509, %v1525
        %v1527 = vlaneseq
        %v1528 = vshrl.u32 %v1527, 7
        %v1529 = vsub.s32 4, %v1528
        %v1530 = vrot.slane %v1509, %v1529
        %v1531 = vlaneseq
        %v1532 = vshrl.u32 %v1531, 7
        %v1533 = vsub.s32 5, %v1532
        %v1534 = vrot.slane %v1509, %v1533
        %v1535 = vlaneseq
        %v1536 = vshrl.u32 %v1535, 7
        %v1537 = vsub.s32 6, %v1536
        %v1538 = vrot.slane %v1509, %v1537
        %v1539 = vlaneseq
        %v1540 = vshrl.u32 %v1539, 7
        %v1541 = vsub.s32 7, %v1540
        %v1542 = vrot.slane %v1509, %v1541
        %v1615 = vunpack.c.l.b16 %v1445
        %v1616 = vunpack.c.h.b16 %v1445
        %v1617 = vunpack.c.l.b16 %v1446
        %v1618 = vunpack.c.h.b16 %v1446
        %v1619 = vunpack.c.l.b16 %v1447
        %v1620 = vunpack.c.h.b16 %v1447
        %v1621 = vunpack.c.l.b16 %v1448
        %v1622 = vunpack.c.h.b16 %v1448
        %v1623 = vunpack.c.l.b16 %v1449
        %v1624 = vunpack.c.h.b16 %v1449
        %v1625 = vunpack.c.l.b16 %v1450
        %v1626 = vunpack.c.h.b16 %v1450
        %v1627 = vunpack.c.l.b16 %v1451
        %v1628 = vunpack.c.h.b16 %v1451
        %v1629 = vunpack.c.l.b16 %v1452
        %v1630 = vunpack.c.h.b16 %v1452
        %v1631 = vunpack.c.l.b16 %v1453
        %v1632 = vunpack.c.h.b16 %v1453
        %v1633 = vunpack.c.l.b16 %v1454
        %v1634 = vunpack.c.h.b16 %v1454
        %v1635 = vunpack.c.l.b16 %v1455
        %v1636 = vunpack.c.h.b16 %v1455
        %v1637 = vunpack.c.l.b16 %v1456
        %v1638 = vunpack.c.h.b16 %v1456
        %v1639 = vunpack.c.l.b16 %v1457
        %v1640 = vunpack.c.h.b16 %v1457
        %v1641 = vunpack.c.l.b16 %v1458
        %v1642 = vunpack.c.h.b16 %v1458
        %v1643 = vunpack.c.l.b16 %v1459
        %v1644 = vunpack.c.h.b16 %v1459
        %v1645 = vunpack.c.l.b16 %v1460
        %v1646 = vunpack.c.h.b16 %v1460
        %v1647 = vunpack.c.l.b16 %v1461
        %v1648 = vunpack.c.h.b16 %v1461
        %v1649 = vunpack.c.l.b16 %v1462
        %v1650 = vunpack.c.h.b16 %v1462
        %v1651 = vunpack.c.l.b16 %v1463
        %v1652 = vunpack.c.h.b16 %v1463
        %v1653 = vunpack.c.l.b16 %v1464
        %v1654 = vunpack.c.h.b16 %v1464
        %v1655 = vunpack.c.l.b16 %v1465
        %v1656 = vunpack.c.h.b16 %v1465
        %v1657 = vunpack.c.l.b16 %v1466
        %v1658 = vunpack.c.h.b16 %v1466
        %v1659 = vunpack.c.l.b16 %v1467
        %v1660 = vunpack.c.h.b16 %v1467
        %v1661 = vunpack.c.l.b16 %v1468
        %v1662 = vunpack.c.h.b16 %v1468
        %v1663 = vunpack.c.l.b16 %v1469
        %v1664 = vunpack.c.h.b16 %v1469
        %v1665 = vunpack.c.l.b16 %v1470
        %v1666 = vunpack.c.h.b16 %v1470
        %v1667 = vunpack.c.l.b16 %v1471
        %v1668 = vunpack.c.h.b16 %v1471
        %v1669 = vunpack.c.l.b16 %v1472
        %v1670 = vunpack.c.h.b16 %v1472
        %v1671 = vunpack.c.l.b16 %v1473
        %v1672 = vunpack.c.h.b16 %v1473
        %v1673 = vunpack.c.l.b16 %v1474
        %v1674 = vunpack.c.h.b16 %v1474
        %v1675 = vunpack.c.l.b16 %v1475
        %v1676 = vunpack.c.h.b16 %v1475
        %v1677 = vunpack.c.l.b16 %v1476
        %v1678 = vunpack.c.h.b16 %v1476
        %v1679 = vunpack.c.l.b16 %v1477
        %v1680 = vunpack.c.h.b16 %v1477
        %v1681 = vunpack.c.l.b16 %v1478
        %v1682 = vunpack.c.h.b16 %v1478
        %v1683 = vunpack.c.l.b16 %v1479
        %v1684 = vunpack.c.h.b16 %v1479
        %v1685 = vunpack.c.l.b16 %v1480
        %v1686 = vunpack.c.h.b16 %v1480
        %v1687 = vunpack.c.l.b16 %v1481
        %v1688 = vunpack.c.h.b16 %v1481
        %v1689 = vunpack.c.l.b16 %v1482
        %v1690 = vunpack.c.h.b16 %v1482
        %v1691 = vunpack.c.l.b16 %v1483
        %v1692 = vunpack.c.h.b16 %v1483
        %v1693 = vunpack.c.l.b16 %v1484
        %v1694 = vunpack.c.h.b16 %v1484
        %v1695 = vunpack.c.l.b16 %v1485
        %v1696 = vunpack.c.h.b16 %v1485
        %v1697 = vunpack.c.l.b16 %v1486
        %v1698 = vunpack.c.h.b16 %v1486
        %v1699 = vunpack.c.l.b16 %v1487
        %v1700 = vunpack.c.h.b16 %v1487
        %v1701 = vunpack.c.l.b16 %v1488
        %v1702 = vunpack.c.h.b16 %v1488
        %v1703 = vunpack.c.l.b16 %v1489
        %v1704 = vunpack.c.h.b16 %v1489
        %v1705 = vunpack.c.l.b16 %v1490
        %v1706 = vunpack.c.h.b16 %v1490
        %v1707 = vunpack.c.l.b16 %v1491
        %v1708 = vunpack.c.h.b16 %v1491
        %v1709 = vunpack.c.l.b16 %v1492
        %v1710 = vunpack.c.h.b16 %v1492
        %v1711 = vunpack.c.l.b16 %v1493
        %v1712 = vunpack.c.h.b16 %v1493
        %v1713 = vunpack.c.l.b16 %v1494
        %v1714 = vunpack.c.h.b16 %v1494
        %v1715 = vunpack.c.l.b16 %v1495
        %v1716 = vunpack.c.h.b16 %v1495
        %v1717 = vunpack.c.l.b16 %v1496
        %v1718 = vunpack.c.h.b16 %v1496
        %v1719 = vunpack.c.l.b16 %v1497
        %v1720 = vunpack.c.h.b16 %v1497
        %v1721 = vunpack.c.l.b16 %v1498
        %v1722 = vunpack.c.h.b16 %v1498
        %v1723 = vunpack.c.l.b16 %v1499
        %v1724 = vunpack.c.h.b16 %v1499
        %v1725 = vunpack.c.l.b16 %v1500
        %v1726 = vunpack.c.h.b16 %v1500
        %v1727 = vunpack.c.l.b16 %v1501
        %v1728 = vunpack.c.h.b16 %v1501
        %v1729 = vunpack.c.l.b16 %v1502
        %v1730 = vunpack.c.h.b16 %v1502
        %v1731 = vunpack.c.l.b16 %v1503
        %v1732 = vunpack.c.h.b16 %v1503
        %v1733 = vunpack.c.l.b16 %v1504
        %v1734 = vunpack.c.h.b16 %v1504
        %v1735 = vunpack.c.l.b16 %v1505
        %v1736 = vunpack.c.h.b16 %v1505
        %v1737 = vunpack.c.l.b16 %v1506
        %v1738 = vunpack.c.h.b16 %v1506
        %v1739 = vunpack.c.l.b16 %v1507
        %v1740 = vunpack.c.h.b16 %v1507
        %v1741 = vunpack.c.l.b16 %v1508
        %v1742 = vunpack.c.h.b16 %v1508
        %v1743 = vpack.c.b16 %v1623, %v1615
        %v1744 = vpack.c.b16 %v1624, %v1616
        %v1745 = vpack.c.b16 %v1625, %v1617
        %v1746 = vpack.c.b16 %v1626, %v1618
        %v1747 = vpack.c.b16 %v1627, %v1619
        %v1748 = vpack.c.b16 %v1628, %v1620
        %v1749 = vpack.c.b16 %v1629, %v1621
        %v1750 = vpack.c.b16 %v1630, %v1622
        %v1751 = vpack.c.b16 %v1639, %v1631
        %v1752 = vpack.c.b16 %v1640, %v1632
        %v1753 = vpack.c.b16 %v1641, %v1633
        %v1754 = vpack.c.b16 %v1642, %v1634
        %v1755 = vpack.c.b16 %v1643, %v1635
        %v1756 = vpack.c.b16 %v1644, %v1636
        %v1757 = vpack.c.b16 %v1645, %v1637
        %v1758 = vpack.c.b16 %v1646, %v1638
        %v1759 = vpack.c.b16 %v1655, %v1647
        %v1760 = vpack.c.b16 %v1656, %v1648
        %v1761 = vpack.c.b16 %v1657, %v1649
        %v1762 = vpack.c.b16 %v1658, %v1650
        %v1763 = vpack.c.b16 %v1659, %v1651
        %v1764 = vpack.c.b16 %v1660, %v1652
        %v1765 = vpack.c.b16 %v1661, %v1653
        %v1766 = vpack.c.b16 %v1662, %v1654
        %v1767 = vpack.c.b16 %v1671, %v1663
        %v1768 = vpack.c.b16 %v1672, %v1664
        %v1769 = vpack.c.b16 %v1673, %v1665
        %v1770 = vpack.c.b16 %v1674, %v1666
        %v1771 = vpack.c.b16 %v1675, %v1667
        %v1772 = vpack.c.b16 %v1676, %v1668
        %v1773 = vpack.c.b16 %v1677, %v1669
        %v1774 = vpack.c.b16 %v1678, %v1670
        %v1775 = vpack.c.b16 %v1687, %v1679
        %v1776 = vpack.c.b16 %v1688, %v1680
        %v1777 = vpack.c.b16 %v1689, %v1681
        %v1778 = vpack.c.b16 %v1690, %v1682
        %v1779 = vpack.c.b16 %v1691, %v1683
        %v1780 = vpack.c.b16 %v1692, %v1684
        %v1781 = vpack.c.b16 %v1693, %v1685
        %v1782 = vpack.c.b16 %v1694, %v1686
        %v1783 = vpack.c.b16 %v1703, %v1695
        %v1784 = vpack.c.b16 %v1704, %v1696
        %v1785 = vpack.c.b16 %v1705, %v1697
        %v1786 = vpack.c.b16 %v1706, %v1698
        %v1787 = vpack.c.b16 %v1707, %v1699
        %v1788 = vpack.c.b16 %v1708, %v1700
        %v1789 = vpack.c.b16 %v1709, %v1701
        %v1790 = vpack.c.b16 %v1710, %v1702
        %v1791 = vpack.c.b16 %v1719, %v1711
        %v1792 = vpack.c.b16 %v1720, %v1712
        %v1793 = vpack.c.b16 %v1721, %v1713
        %v1794 = vpack.c.b16 %v1722, %v1714
        %v1795 = vpack.c.b16 %v1723, %v1715
        %v1796 = vpack.c.b16 %v1724, %v1716
        %v1797 = vpack.c.b16 %v1725, %v1717
        %v1798 = vpack.c.b16 %v1726, %v1718
        %v1799 = vpack.c.b16 %v1735, %v1727
        %v1800 = vpack.c.b16 %v1736, %v1728
        %v1801 = vpack.c.b16 %v1737, %v1729
        %v1802 = vpack.c.b16 %v1738, %v1730
        %v1803 = vpack.c.b16 %v1739, %v1731
        %v1804 = vpack.c.b16 %v1740, %v1732
        %v1805 = vpack.c.b16 %v1741, %v1733
        %v1806 = vpack.c.b16 %v1742, %v1734
        %1871 = vmatprep.subr.bf16.mxu0 %v1744
        %1872 = vmatpush1.bf16.msra.mxu0 %v1743
        %1873 = vmatprep.subr.bf16.mxu0 %v1752
        %1874 = vmatpush1.bf16.msra.mxu0 %v1751
        %1875 = vmatprep.subr.bf16.mxu0 %v1760
        %1876 = vmatpush1.bf16.msra.mxu0 %v1759
        %1877 = vmatprep.subr.bf16.mxu0 %v1768
        %1878 = vmatpush1.bf16.msra.mxu0 %v1767
        %1879 = vmatprep.subr.bf16.mxu0 %v1776
        %1880 = vmatpush1.bf16.msra.mxu0 %v1775
        %1881 = vmatprep.subr.bf16.mxu0 %v1784
        %1882 = vmatpush1.bf16.msra.mxu0 %v1783
        %1883 = vmatprep.subr.bf16.mxu0 %v1792
        %1884 = vmatpush1.bf16.msra.mxu0 %v1791
        %1885 = vmatprep.subr.bf16.mxu0 %v1800
        %1886 = vmatpush1.bf16.msra.mxu0 %v1799
        %1887 = vmatprep.subr.bf16.mxu0 0
        %1888 = vmatpush1.bf16.msra.mxu0 0
        %1889 = vmatprep.subr.bf16.mxu0 0
        %1890 = vmatpush1.bf16.msra.mxu0 0
        %1891 = vmatprep.subr.bf16.mxu0 0
        %1892 = vmatpush1.bf16.msra.mxu0 0
        %1893 = vmatprep.subr.bf16.mxu0 0
        %1894 = vmatpush1.bf16.msra.mxu0 0
        %1895 = vmatprep.subr.bf16.mxu0 0
        %1896 = vmatpush1.bf16.msra.mxu0 0
        %1897 = vmatprep.subr.bf16.mxu0 0
        %1898 = vmatpush1.bf16.msra.mxu0 0
        %1899 = vmatprep.subr.bf16.mxu0 0
        %1900 = vmatpush1.bf16.msra.mxu0 0
        %1901 = vmatprep.subr.bf16.mxu0 0
        %1902 = vmatpush1.bf16.msra.mxu0 0
        %1903 = vmatprep.mubr.bf16.mxu0 0
        %1904 = vmatmul.mubr.bf16.gmra.mrb[0].mxu0 %v559
        %v1905 = vpop.f32.mrb[0].mxu0
        %v1906 = vadd.f32 %v1514, %v1905
        %v1907 = vpop.f32.mrb[0].mxu0
        %v1908 = vadd.f32 %v1518, %v1907
        %v1909 = vpop.f32.mrb[0].mxu0
        %v1910 = vadd.f32 %v1514, %v1909
        %v1911 = vpop.f32.mrb[0].mxu0
        %v1912 = vadd.f32 %v1518, %v1911
        %1913 = vmatprep.mubr.bf16.mxu0 0
        %1914 = vmatmul.mubr.bf16.gmra.mrb[0].mxu0 %v560
        %v1915 = vpop.f32.mrb[0].mxu0
        %v1916 = vadd.f32 %v1514, %v1915
        %v1917 = vpop.f32.mrb[0].mxu0
        %v1918 = vadd.f32 %v1518, %v1917
        %v1919 = vpop.f32.mrb[0].mxu0
        %v1920 = vadd.f32 %v1514, %v1919
        %v1921 = vpop.f32.mrb[0].mxu0
        %v1922 = vadd.f32 %v1518, %v1921
        %1923 = vmatprep.mubr.bf16.mxu0 0
        %1924 = vmatmul.mubr.bf16.gmra.mrb[0].mxu0 %v561
        %v1925 = vpop.f32.mrb[0].mxu0
        %v1926 = vadd.f32 %v1514, %v1925
        %v1927 = vpop.f32.mrb[0].mxu0
        %v1928 = vadd.f32 %v1518, %v1927
        %v1929 = vpop.f32.mrb[0].mxu0
        %v1930 = vadd.f32 %v1514, %v1929
        %v1931 = vpop.f32.mrb[0].mxu0
        %v1932 = vadd.f32 %v1518, %v1931
        %1933 = vmatprep.mubr.bf16.mxu0 0
        %1934 = vmatmul.mubr.bf16.gmra.mrb[0].mxu0 %v562
        %v1935 = vpop.f32.mrb[0].mxu0
        %v1936 = vadd.f32 %v1514, %v1935
        %v1937 = vpop.f32.mrb[0].mxu0
        %v1938 = vadd.f32 %v1518, %v1937
        %v1939 = vpop.f32.mrb[0].mxu0
        %v1940 = vadd.f32 %v1514, %v1939
        %v1941 = vpop.f32.mrb[0].mxu0
        %v1942 = vadd.f32 %v1518, %v1941
        %1943 = vmatprep.mubr.bf16.mxu0 0
        %1944 = vmatmul.mubr.bf16.gmra.mrb[0].mxu0 %v563
        %v1945 = vpop.f32.mrb[0].mxu0
        %v1946 = vadd.f32 %v1514, %v1945
        %v1947 = vpop.f32.mrb[0].mxu0
        %v1948 = vadd.f32 %v1518, %v1947
        %v1949 = vpop.f32.mrb[0].mxu0
        %v1950 = vadd.f32 %v1514, %v1949
        %v1951 = vpop.f32.mrb[0].mxu0
        %v1952 = vadd.f32 %v1518, %v1951
        %1953 = vmatprep.mubr.bf16.mxu0 0
        %1954 = vmatmul.mubr.bf16.gmra.mrb[0].mxu0 %v564
        %v1955 = vpop.f32.mrb[0].mxu0
        %v1956 = vadd.f32 %v1514, %v1955
        %v1957 = vpop.f32.mrb[0].mxu0
        %v1958 = vadd.f32 %v1518, %v1957
        %v1959 = vpop.f32.mrb[0].mxu0
        %v1960 = vadd.f32 %v1514, %v1959
        %v1961 = vpop.f32.mrb[0].mxu0
        %v1962 = vadd.f32 %v1518, %v1961
        %1963 = vmatprep.mubr.bf16.mxu0 0
        %1964 = vmatmul.mubr.bf16.gmra.mrb[0].mxu0 %v565
        %v1965 = vpop.f32.mrb[0].mxu0
        %v1966 = vadd.f32 %v1514, %v1965
        %v1967 = vpop.f32.mrb[0].mxu0
        %v1968 = vadd.f32 %v1518, %v1967
        %v1969 = vpop.f32.mrb[0].mxu0
        %v1970 = vadd.f32 %v1514, %v1969
        %v1971 = vpop.f32.mrb[0].mxu0
        %v1972 = vadd.f32 %v1518, %v1971
        %1973 = vmatprep.mubr.bf16.mxu0 0
        %1974 = vmatmul.mubr.bf16.gmra.mrb[0].mxu0 %v566
        %v1975 = vpop.f32.mrb[0].mxu0
        %v1976 = vadd.f32 %v1514, %v1975
        %v1977 = vpop.f32.mrb[0].mxu0
        %v1978 = vadd.f32 %v1518, %v1977
        %v1979 = vpop.f32.mrb[0].mxu0
        %v1980 = vadd.f32 %v1514, %v1979
        %v1981 = vpop.f32.mrb[0].mxu0
        %v1982 = vadd.f32 %v1518, %v1981
        %1983 = vdwg.mxu0
        %1984 = vmatprep.subr.bf16.mxu0 %v1746
        %1985 = vmatpush1.bf16.msra.mxu0 %v1745
        %1986 = vmatprep.subr.bf16.mxu0 %v1754
        %1987 = vmatpush1.bf16.msra.mxu0 %v1753
        %1988 = vmatprep.subr.bf16.mxu0 %v1762
        %1989 = vmatpush1.bf16.msra.mxu0 %v1761
        %1990 = vmatprep.subr.bf16.mxu0 %v1770
        %1991 = vmatpush1.bf16.msra.mxu0 %v1769
        %1992 = vmatprep.subr.bf16.mxu0 %v1778
        %1993 = vmatpush1.bf16.msra.mxu0 %v1777
        %1994 = vmatprep.subr.bf16.mxu0 %v1786
        %1995 = vmatpush1.bf16.msra.mxu0 %v1785
        %1996 = vmatprep.subr.bf16.mxu0 %v1794
        %1997 = vmatpush1.bf16.msra.mxu0 %v1793
        %1998 = vmatprep.subr.bf16.mxu0 %v1802
        %1999 = vmatpush1.bf16.msra.mxu0 %v1801
        %2000 = vmatprep.subr.bf16.mxu0 0
        %2001 = vmatpush1.bf16.msra.mxu0 0
        %2002 = vmatprep.subr.bf16.mxu0 0
        %2003 = vmatpush1.bf16.msra.mxu0 0
        %2004 = vmatprep.subr.bf16.mxu0 0
        %2005 = vmatpush1.bf16.msra.mxu0 0
        %2006 = vmatprep.subr.bf16.mxu0 0
        %2007 = vmatpush1.bf16.msra.mxu0 0
        %2008 = vmatprep.subr.bf16.mxu0 0
        %2009 = vmatpush1.bf16.msra.mxu0 0
        %2010 = vmatprep.subr.bf16.mxu0 0
        %2011 = vmatpush1.bf16.msra.mxu0 0
        %2012 = vmatprep.subr.bf16.mxu0 0
        %2013 = vmatpush1.bf16.msra.mxu0 0
        %2014 = vmatprep.subr.bf16.mxu0 0
        %2015 = vmatpush1.bf16.msra.mxu0 0
        %2016 = vmatprep.mubr.bf16.mxu0 0
        %2017 = vmatmul.mubr.bf16.gmra.mrb[0].mxu0 %v559
        %v2018 = vpop.f32.mrb[0].mxu0
        %v2019 = vadd.f32 %v1522, %v2018
        %v2020 = vpop.f32.mrb[0].mxu0
        %v2021 = vadd.f32 %v1526, %v2020
        %v2022 = vpop.f32.mrb[0].mxu0
        %v2023 = vadd.f32 %v1522, %v2022
        %v2024 = vpop.f32.mrb[0].mxu0
        %v2025 = vadd.f32 %v1526, %v2024
        %2026 = vmatprep.mubr.bf16.mxu0 0
        %2027 = vmatmul.mubr.bf16.gmra.mrb[0].mxu0 %v560
        %v2028 = vpop.f32.mrb[0].mxu0
        %v2029 = vadd.f32 %v1522, %v2028
        %v2030 = vpop.f32.mrb[0].mxu0
        %v2031 = vadd.f32 %v1526, %v2030
        %v2032 = vpop.f32.mrb[0].mxu0
        %v2033 = vadd.f32 %v1522, %v2032
        %v2034 = vpop.f32.mrb[0].mxu0
        %v2035 = vadd.f32 %v1526, %v2034
        %2036 = vmatprep.mubr.bf16.mxu0 0
        %2037 = vmatmul.mubr.bf16.gmra.mrb[0].mxu0 %v561
        %v2038 = vpop.f32.mrb[0].mxu0
        %v2039 = vadd.f32 %v1522, %v2038
        %v2040 = vpop.f32.mrb[0].mxu0
        %v2041 = vadd.f32 %v1526, %v2040
        %v2042 = vpop.f32.mrb[0].mxu0
        %v2043 = vadd.f32 %v1522, %v2042
        %v2044 = vpop.f32.mrb[0].mxu0
        %v2045 = vadd.f32 %v1526, %v2044
        %2046 = vmatprep.mubr.bf16.mxu0 0
        %2047 = vmatmul.mubr.bf16.gmra.mrb[0].mxu0 %v562
        %v2048 = vpop.f32.mrb[0].mxu0
        %v2049 = vadd.f32 %v1522, %v2048
        %v2050 = vpop.f32.mrb[0].mxu0
        %v2051 = vadd.f32 %v1526, %v2050
        %v2052 = vpop.f32.mrb[0].mxu0
        %v2053 = vadd.f32 %v1522, %v2052
        %v2054 = vpop.f32.mrb[0].mxu0
        %v2055 = vadd.f32 %v1526, %v2054
        %2056 = vmatprep.mubr.bf16.mxu0 0
        %2057 = vmatmul.mubr.bf16.gmra.mrb[0].mxu0 %v563
        %v2058 = vpop.f32.mrb[0].mxu0
        %v2059 = vadd.f32 %v1522, %v2058
        %v2060 = vpop.f32.mrb[0].mxu0
        %v2061 = vadd.f32 %v1526, %v2060
        %v2062 = vpop.f32.mrb[0].mxu0
        %v2063 = vadd.f32 %v1522, %v2062
        %v2064 = vpop.f32.mrb[0].mxu0
        %v2065 = vadd.f32 %v1526, %v2064
        %2066 = vmatprep.mubr.bf16.mxu0 0
        %2067 = vmatmul.mubr.bf16.gmra.mrb[0].mxu0 %v564
        %v2068 = vpop.f32.mrb[0].mxu0
        %v2069 = vadd.f32 %v1522, %v2068
        %v2070 = vpop.f32.mrb[0].mxu0
        %v2071 = vadd.f32 %v1526, %v2070
        %v2072 = vpop.f32.mrb[0].mxu0
        %v2073 = vadd.f32 %v1522, %v2072
        %v2074 = vpop.f32.mrb[0].mxu0
        %v2075 = vadd.f32 %v1526, %v2074
        %2076 = vmatprep.mubr.bf16.mxu0 0
        %2077 = vmatmul.mubr.bf16.gmra.mrb[0].mxu0 %v565
        %v2078 = vpop.f32.mrb[0].mxu0
        %v2079 = vadd.f32 %v1522, %v2078
        %v2080 = vpop.f32.mrb[0].mxu0
        %v2081 = vadd.f32 %v1526, %v2080
        %v2082 = vpop.f32.mrb[0].mxu0
        %v2083 = vadd.f32 %v1522, %v2082
        %v2084 = vpop.f32.mrb[0].mxu0
        %v2085 = vadd.f32 %v1526, %v2084
        %2086 = vmatprep.mubr.bf16.mxu0 0
        %2087 = vmatmul.mubr.bf16.gmra.mrb[0].mxu0 %v566
        %v2088 = vpop.f32.mrb[0].mxu0
        %v2089 = vadd.f32 %v1522, %v2088
        %v2090 = vpop.f32.mrb[0].mxu0
        %v2091 = vadd.f32 %v1526, %v2090
        %v2092 = vpop.f32.mrb[0].mxu0
        %v2093 = vadd.f32 %v1522, %v2092
        %v2094 = vpop.f32.mrb[0].mxu0
        %v2095 = vadd.f32 %v1526, %v2094
        %2096 = vdwg.mxu0
        %2097 = vmatprep.subr.bf16.mxu0 %v1748
        %2098 = vmatpush1.bf16.msra.mxu0 %v1747
        %2099 = vmatprep.subr.bf16.mxu0 %v1756
        %2100 = vmatpush1.bf16.msra.mxu0 %v1755
        %2101 = vmatprep.subr.bf16.mxu0 %v1764
        %2102 = vmatpush1.bf16.msra.mxu0 %v1763
        %2103 = vmatprep.subr.bf16.mxu0 %v1772
        %2104 = vmatpush1.bf16.msra.mxu0 %v1771
        %2105 = vmatprep.subr.bf16.mxu0 %v1780
        %2106 = vmatpush1.bf16.msra.mxu0 %v1779
        %2107 = vmatprep.subr.bf16.mxu0 %v1788
        %2108 = vmatpush1.bf16.msra.mxu0 %v1787
        %2109 = vmatprep.subr.bf16.mxu0 %v1796
        %2110 = vmatpush1.bf16.msra.mxu0 %v1795
        %2111 = vmatprep.subr.bf16.mxu0 %v1804
        %2112 = vmatpush1.bf16.msra.mxu0 %v1803
        %2113 = vmatprep.subr.bf16.mxu0 0
        %2114 = vmatpush1.bf16.msra.mxu0 0
        %2115 = vmatprep.subr.bf16.mxu0 0
        %2116 = vmatpush1.bf16.msra.mxu0 0
        %2117 = vmatprep.subr.bf16.mxu0 0
        %2118 = vmatpush1.bf16.msra.mxu0 0
        %2119 = vmatprep.subr.bf16.mxu0 0
        %2120 = vmatpush1.bf16.msra.mxu0 0
        %2121 = vmatprep.subr.bf16.mxu0 0
        %2122 = vmatpush1.bf16.msra.mxu0 0
        %2123 = vmatprep.subr.bf16.mxu0 0
        %2124 = vmatpush1.bf16.msra.mxu0 0
        %2125 = vmatprep.subr.bf16.mxu0 0
        %2126 = vmatpush1.bf16.msra.mxu0 0
        %2127 = vmatprep.subr.bf16.mxu0 0
        %2128 = vmatpush1.bf16.msra.mxu0 0
        %2129 = vmatprep.mubr.bf16.mxu0 0
        %2130 = vmatmul.mubr.bf16.gmra.mrb[0].mxu0 %v559
        %v2131 = vpop.f32.mrb[0].mxu0
        %v2132 = vadd.f32 %v1530, %v2131
        %v2133 = vpop.f32.mrb[0].mxu0
        %v2134 = vadd.f32 %v1534, %v2133
        %v2135 = vpop.f32.mrb[0].mxu0
        %v2136 = vadd.f32 %v1530, %v2135
        %v2137 = vpop.f32.mrb[0].mxu0
        %v2138 = vadd.f32 %v1534, %v2137
        %2139 = vmatprep.mubr.bf16.mxu0 0
        %2140 = vmatmul.mubr.bf16.gmra.mrb[0].mxu0 %v560
        %v2141 = vpop.f32.mrb[0].mxu0
        %v2142 = vadd.f32 %v1530, %v2141
        %v2143 = vpop.f32.mrb[0].mxu0
        %v2144 = vadd.f32 %v1534, %v2143
        %v2145 = vpop.f32.mrb[0].mxu0
        %v2146 = vadd.f32 %v1530, %v2145
        %v2147 = vpop.f32.mrb[0].mxu0
        %v2148 = vadd.f32 %v1534, %v2147
        %2149 = vmatprep.mubr.bf16.mxu0 0
        %2150 = vmatmul.mubr.bf16.gmra.mrb[0].mxu0 %v561
        %v2151 = vpop.f32.mrb[0].mxu0
        %v2152 = vadd.f32 %v1530, %v2151
        %v2153 = vpop.f32.mrb[0].mxu0
        %v2154 = vadd.f32 %v1534, %v2153
        %v2155 = vpop.f32.mrb[0].mxu0
        %v2156 = vadd.f32 %v1530, %v2155
        %v2157 = vpop.f32.mrb[0].mxu0
        %v2158 = vadd.f32 %v1534, %v2157
        %2159 = vmatprep.mubr.bf16.mxu0 0
        %2160 = vmatmul.mubr.bf16.gmra.mrb[0].mxu0 %v562
        %v2161 = vpop.f32.mrb[0].mxu0
        %v2162 = vadd.f32 %v1530, %v2161
        %v2163 = vpop.f32.mrb[0].mxu0
        %v2164 = vadd.f32 %v1534, %v2163
        %v2165 = vpop.f32.mrb[0].mxu0
        %v2166 = vadd.f32 %v1530, %v2165
        %v2167 = vpop.f32.mrb[0].mxu0
        %v2168 = vadd.f32 %v1534, %v2167
        %2169 = vmatprep.mubr.bf16.mxu0 0
        %2170 = vmatmul.mubr.bf16.gmra.mrb[0].mxu0 %v563
        %v2171 = vpop.f32.mrb[0].mxu0
        %v2172 = vadd.f32 %v1530, %v2171
        %v2173 = vpop.f32.mrb[0].mxu0
        %v2174 = vadd.f32 %v1534, %v2173
        %v2175 = vpop.f32.mrb[0].mxu0
        %v2176 = vadd.f32 %v1530, %v2175
        %v2177 = vpop.f32.mrb[0].mxu0
        %v2178 = vadd.f32 %v1534, %v2177
        %2179 = vmatprep.mubr.bf16.mxu0 0
        %2180 = vmatmul.mubr.bf16.gmra.mrb[0].mxu0 %v564
        %v2181 = vpop.f32.mrb[0].mxu0
        %v2182 = vadd.f32 %v1530, %v2181
        %v2183 = vpop.f32.mrb[0].mxu0
        %v2184 = vadd.f32 %v1534, %v2183
        %v2185 = vpop.f32.mrb[0].mxu0
        %v2186 = vadd.f32 %v1530, %v2185
        %v2187 = vpop.f32.mrb[0].mxu0
        %v2188 = vadd.f32 %v1534, %v2187
        %2189 = vmatprep.mubr.bf16.mxu0 0
        %2190 = vmatmul.mubr.bf16.gmra.mrb[0].mxu0 %v565
        %v2191 = vpop.f32.mrb[0].mxu0
        %v2192 = vadd.f32 %v1530, %v2191
        %v2193 = vpop.f32.mrb[0].mxu0
        %v2194 = vadd.f32 %v1534, %v2193
        %v2195 = vpop.f32.mrb[0].mxu0
        %v2196 = vadd.f32 %v1530, %v2195
        %v2197 = vpop.f32.mrb[0].mxu0
        %v2198 = vadd.f32 %v1534, %v2197
        %2199 = vmatprep.mubr.bf16.mxu0 0
        %2200 = vmatmul.mubr.bf16.gmra.mrb[0].mxu0 %v566
        %v2201 = vpop.f32.mrb[0].mxu0
        %v2202 = vadd.f32 %v1530, %v2201
        %v2203 = vpop.f32.mrb[0].mxu0
        %v2204 = vadd.f32 %v1534, %v2203
        %v2205 = vpop.f32.mrb[0].mxu0
        %v2206 = vadd.f32 %v1530, %v2205
        %v2207 = vpop.f32.mrb[0].mxu0
        %v2208 = vadd.f32 %v1534, %v2207
        %2209 = vdwg.mxu0
        %2210 = vmatprep.subr.bf16.mxu0 %v1750
        %2211 = vmatpush1.bf16.msra.mxu0 %v1749
        %2212 = vmatprep.subr.bf16.mxu0 %v1758
        %2213 = vmatpush1.bf16.msra.mxu0 %v1757
        %2214 = vmatprep.subr.bf16.mxu0 %v1766
        %2215 = vmatpush1.bf16.msra.mxu0 %v1765
        %2216 = vmatprep.subr.bf16.mxu0 %v1774
        %2217 = vmatpush1.bf16.msra.mxu0 %v1773
        %2218 = vmatprep.subr.bf16.mxu0 %v1782
        %2219 = vmatpush1.bf16.msra.mxu0 %v1781
        %2220 = vmatprep.subr.bf16.mxu0 %v1790
        %2221 = vmatpush1.bf16.msra.mxu0 %v1789
        %2222 = vmatprep.subr.bf16.mxu0 %v1798
        %2223 = vmatpush1.bf16.msra.mxu0 %v1797
        %2224 = vmatprep.subr.bf16.mxu0 %v1806
        %2225 = vmatpush1.bf16.msra.mxu0 %v1805
        %2226 = vmatprep.subr.bf16.mxu0 0
        %2227 = vmatpush1.bf16.msra.mxu0 0
        %2228 = vmatprep.subr.bf16.mxu0 0
        %2229 = vmatpush1.bf16.msra.mxu0 0
        %2230 = vmatprep.subr.bf16.mxu0 0
        %2231 = vmatpush1.bf16.msra.mxu0 0
        %2232 = vmatprep.subr.bf16.mxu0 0
        %2233 = vmatpush1.bf16.msra.mxu0 0
        %2234 = vmatprep.subr.bf16.mxu0 0
        %2235 = vmatpush1.bf16.msra.mxu0 0
        %2236 = vmatprep.subr.bf16.mxu0 0
        %2237 = vmatpush1.bf16.msra.mxu0 0
        %2238 = vmatprep.subr.bf16.mxu0 0
        %2239 = vmatpush1.bf16.msra.mxu0 0
        %2240 = vmatprep.subr.bf16.mxu0 0
        %2241 = vmatpush1.bf16.msra.mxu0 0
        %2242 = vmatprep.mubr.bf16.mxu0 0
        %2243 = vmatmul.mubr.bf16.gmra.mrb[0].mxu0 %v559
        %v2244 = vpop.f32.mrb[0].mxu0
        %v2245 = vadd.f32 %v1538, %v2244
        %v2246 = vpop.f32.mrb[0].mxu0
        %v2247 = vadd.f32 %v1542, %v2246
        %v2248 = vpop.f32.mrb[0].mxu0
        %v2249 = vadd.f32 %v1538, %v2248
        %v2250 = vpop.f32.mrb[0].mxu0
        %v2251 = vadd.f32 %v1542, %v2250
        %2252 = vmatprep.mubr.bf16.mxu0 0
        %2253 = vmatmul.mubr.bf16.gmra.mrb[0].mxu0 %v560
        %v2254 = vpop.f32.mrb[0].mxu0
        %v2255 = vadd.f32 %v1538, %v2254
        %v2256 = vpop.f32.mrb[0].mxu0
        %v2257 = vadd.f32 %v1542, %v2256
        %v2258 = vpop.f32.mrb[0].mxu0
        %v2259 = vadd.f32 %v1538, %v2258
        %v2260 = vpop.f32.mrb[0].mxu0
        %v2261 = vadd.f32 %v1542, %v2260
        %2262 = vmatprep.mubr.bf16.mxu0 0
        %2263 = vmatmul.mubr.bf16.gmra.mrb[0].mxu0 %v561
        %v2264 = vpop.f32.mrb[0].mxu0
        %v2265 = vadd.f32 %v1538, %v2264
        %v2266 = vpop.f32.mrb[0].mxu0
        %v2267 = vadd.f32 %v1542, %v2266
        %v2268 = vpop.f32.mrb[0].mxu0
        %v2269 = vadd.f32 %v1538, %v2268
        %v2270 = vpop.f32.mrb[0].mxu0
        %v2271 = vadd.f32 %v1542, %v2270
        %2272 = vmatprep.mubr.bf16.mxu0 0
        %2273 = vmatmul.mubr.bf16.gmra.mrb[0].mxu0 %v562
        %v2274 = vpop.f32.mrb[0].mxu0
        %v2275 = vadd.f32 %v1538, %v2274
        %v2276 = vpop.f32.mrb[0].mxu0
        %v2277 = vadd.f32 %v1542, %v2276
        %v2278 = vpop.f32.mrb[0].mxu0
        %v2279 = vadd.f32 %v1538, %v2278
        %v2280 = vpop.f32.mrb[0].mxu0
        %v2281 = vadd.f32 %v1542, %v2280
        %2282 = vmatprep.mubr.bf16.mxu0 0
        %2283 = vmatmul.mubr.bf16.gmra.mrb[0].mxu0 %v563
        %v2284 = vpop.f32.mrb[0].mxu0
        %v2285 = vadd.f32 %v1538, %v2284
        %v2286 = vpop.f32.mrb[0].mxu0
        %v2287 = vadd.f32 %v1542, %v2286
        %v2288 = vpop.f32.mrb[0].mxu0
        %v2289 = vadd.f32 %v1538, %v2288
        %v2290 = vpop.f32.mrb[0].mxu0
        %v2291 = vadd.f32 %v1542, %v2290
        %2292 = vmatprep.mubr.bf16.mxu0 0
        %2293 = vmatmul.mubr.bf16.gmra.mrb[0].mxu0 %v564
        %v2294 = vpop.f32.mrb[0].mxu0
        %v2295 = vadd.f32 %v1538, %v2294
        %v2296 = vpop.f32.mrb[0].mxu0
        %v2297 = vadd.f32 %v1542, %v2296
        %v2298 = vpop.f32.mrb[0].mxu0
        %v2299 = vadd.f32 %v1538, %v2298
        %v2300 = vpop.f32.mrb[0].mxu0
        %v2301 = vadd.f32 %v1542, %v2300
        %2302 = vmatprep.mubr.bf16.mxu0 0
        %2303 = vmatmul.mubr.bf16.gmra.mrb[0].mxu0 %v565
        %v2304 = vpop.f32.mrb[0].mxu0
        %v2305 = vadd.f32 %v1538, %v2304
        %v2306 = vpop.f32.mrb[0].mxu0
        %v2307 = vadd.f32 %v1542, %v2306
        %v2308 = vpop.f32.mrb[0].mxu0
        %v2309 = vadd.f32 %v1538, %v2308
        %v2310 = vpop.f32.mrb[0].mxu0
        %v2311 = vadd.f32 %v1542, %v2310
        %2312 = vmatprep.mubr.bf16.mxu0 0
        %2313 = vmatmul.mubr.bf16.gmra.mrb[0].mxu0 %v566
        %v2314 = vpop.f32.mrb[0].mxu0
        %v2315 = vadd.f32 %v1538, %v2314
        %v2316 = vpop.f32.mrb[0].mxu0
        %v2317 = vadd.f32 %v1542, %v2316
        %v2318 = vpop.f32.mrb[0].mxu0
        %v2319 = vadd.f32 %v1538, %v2318
        %v2320 = vpop.f32.mrb[0].mxu0
        %v2321 = vadd.f32 %v1542, %v2320
        %2322 = vdwg.mxu0
        %v2323 = vmul.f32 %v1028, %v1906
        %v2324 = vmul.f32 %v1032, %v1910
        %v2325 = vmul.f32 %v1038, %v1916
        %v2326 = vmul.f32 %v1042, %v1920
        %v2327 = vmul.f32 %v1048, %v1926
        %v2328 = vmul.f32 %v1052, %v1930
        %v2329 = vmul.f32 %v1058, %v1936
        %v2330 = vmul.f32 %v1062, %v1940
        %v2331 = vmul.f32 %v1068, %v1946
        %v2332 = vmul.f32 %v1072, %v1950
        %v2333 = vmul.f32 %v1078, %v1956
        %v2334 = vmul.f32 %v1082, %v1960
        %v2335 = vmul.f32 %v1088, %v1966
        %v2336 = vmul.f32 %v1092, %v1970
        %v2337 = vmul.f32 %v1098, %v1976
        %v2338 = vmul.f32 %v1102, %v1980
        %v2339 = vmul.f32 %v1030, %v1908
        %v2340 = vmul.f32 %v1034, %v1912
        %v2341 = vmul.f32 %v1040, %v1918
        %v2342 = vmul.f32 %v1044, %v1922
        %v2343 = vmul.f32 %v1050, %v1928
        %v2344 = vmul.f32 %v1054, %v1932
        %v2345 = vmul.f32 %v1060, %v1938
        %v2346 = vmul.f32 %v1064, %v1942
        %v2347 = vmul.f32 %v1070, %v1948
        %v2348 = vmul.f32 %v1074, %v1952
        %v2349 = vmul.f32 %v1080, %v1958
        %v2350 = vmul.f32 %v1084, %v1962
        %v2351 = vmul.f32 %v1090, %v1968
        %v2352 = vmul.f32 %v1094, %v1972
        %v2353 = vmul.f32 %v1100, %v1978
        %v2354 = vmul.f32 %v1104, %v1982
        %v2355 = vadd.f32 %v2323, %v2339
        %v2356 = vadd.f32 %v2324, %v2340
        %v2357 = vadd.f32 %v2325, %v2341
        %v2358 = vadd.f32 %v2326, %v2342
        %v2359 = vadd.f32 %v2327, %v2343
        %v2360 = vadd.f32 %v2328, %v2344
        %v2361 = vadd.f32 %v2329, %v2345
        %v2362 = vadd.f32 %v2330, %v2346
        %v2363 = vadd.f32 %v2331, %v2347
        %v2364 = vadd.f32 %v2332, %v2348
        %v2365 = vadd.f32 %v2333, %v2349
        %v2366 = vadd.f32 %v2334, %v2350
        %v2367 = vadd.f32 %v2335, %v2351
        %v2368 = vadd.f32 %v2336, %v2352
        %v2369 = vadd.f32 %v2337, %v2353
        %v2370 = vadd.f32 %v2338, %v2354
        %v2371 = vmul.f32 %v1141, %v2019
        %v2372 = vmul.f32 %v1145, %v2023
        %v2373 = vmul.f32 %v1151, %v2029
        %v2374 = vmul.f32 %v1155, %v2033
        %v2375 = vmul.f32 %v1161, %v2039
        %v2376 = vmul.f32 %v1165, %v2043
        %v2377 = vmul.f32 %v1171, %v2049
        %v2378 = vmul.f32 %v1175, %v2053
        %v2379 = vmul.f32 %v1181, %v2059
        %v2380 = vmul.f32 %v1185, %v2063
        %v2381 = vmul.f32 %v1191, %v2069
        %v2382 = vmul.f32 %v1195, %v2073
        %v2383 = vmul.f32 %v1201, %v2079
        %v2384 = vmul.f32 %v1205, %v2083
        %v2385 = vmul.f32 %v1211, %v2089
        %v2386 = vmul.f32 %v1215, %v2093
        %v2387 = vadd.f32 %v2355, %v2371
        %v2388 = vadd.f32 %v2356, %v2372
        %v2389 = vadd.f32 %v2357, %v2373
        %v2390 = vadd.f32 %v2358, %v2374
        %v2391 = vadd.f32 %v2359, %v2375
        %v2392 = vadd.f32 %v2360, %v2376
        %v2393 = vadd.f32 %v2361, %v2377
        %v2394 = vadd.f32 %v2362, %v2378
        %v2395 = vadd.f32 %v2363, %v2379
        %v2396 = vadd.f32 %v2364, %v2380
        %v2397 = vadd.f32 %v2365, %v2381
        %v2398 = vadd.f32 %v2366, %v2382
        %v2399 = vadd.f32 %v2367, %v2383
        %v2400 = vadd.f32 %v2368, %v2384
        %v2401 = vadd.f32 %v2369, %v2385
        %v2402 = vadd.f32 %v2370, %v2386
        %v2403 = vmul.f32 %v1143, %v2021
        %v2404 = vmul.f32 %v1147, %v2025
        %v2405 = vmul.f32 %v1153, %v2031
        %v2406 = vmul.f32 %v1157, %v2035
        %v2407 = vmul.f32 %v1163, %v2041
        %v2408 = vmul.f32 %v1167, %v2045
        %v2409 = vmul.f32 %v1173, %v2051
        %v2410 = vmul.f32 %v1177, %v2055
        %v2411 = vmul.f32 %v1183, %v2061
        %v2412 = vmul.f32 %v1187, %v2065
        %v2413 = vmul.f32 %v1193, %v2071
        %v2414 = vmul.f32 %v1197, %v2075
        %v2415 = vmul.f32 %v1203, %v2081
        %v2416 = vmul.f32 %v1207, %v2085
        %v2417 = vmul.f32 %v1213, %v2091
        %v2418 = vmul.f32 %v1217, %v2095
        %v2419 = vadd.f32 %v2387, %v2403
        %v2420 = vadd.f32 %v2388, %v2404
        %v2421 = vadd.f32 %v2389, %v2405
        %v2422 = vadd.f32 %v2390, %v2406
        %v2423 = vadd.f32 %v2391, %v2407
        %v2424 = vadd.f32 %v2392, %v2408
        %v2425 = vadd.f32 %v2393, %v2409
        %v2426 = vadd.f32 %v2394, %v2410
        %v2427 = vadd.f32 %v2395, %v2411
        %v2428 = vadd.f32 %v2396, %v2412
        %v2429 = vadd.f32 %v2397, %v2413
        %v2430 = vadd.f32 %v2398, %v2414
        %v2431 = vadd.f32 %v2399, %v2415
        %v2432 = vadd.f32 %v2400, %v2416
        %v2433 = vadd.f32 %v2401, %v2417
        %v2434 = vadd.f32 %v2402, %v2418
        %v2435 = vmul.f32 %v1254, %v2132
        %v2436 = vmul.f32 %v1258, %v2136
        %v2437 = vmul.f32 %v1264, %v2142
        %v2438 = vmul.f32 %v1268, %v2146
        %v2439 = vmul.f32 %v1274, %v2152
        %v2440 = vmul.f32 %v1278, %v2156
        %v2441 = vmul.f32 %v1284, %v2162
        %v2442 = vmul.f32 %v1288, %v2166
        %v2443 = vmul.f32 %v1294, %v2172
        %v2444 = vmul.f32 %v1298, %v2176
        %v2445 = vmul.f32 %v1304, %v2182
        %v2446 = vmul.f32 %v1308, %v2186
        %v2447 = vmul.f32 %v1314, %v2192
        %v2448 = vmul.f32 %v1318, %v2196
        %v2449 = vmul.f32 %v1324, %v2202
        %v2450 = vmul.f32 %v1328, %v2206
        %v2451 = vadd.f32 %v2419, %v2435
        %v2452 = vadd.f32 %v2420, %v2436
        %v2453 = vadd.f32 %v2421, %v2437
        %v2454 = vadd.f32 %v2422, %v2438
        %v2455 = vadd.f32 %v2423, %v2439
        %v2456 = vadd.f32 %v2424, %v2440
        %v2457 = vadd.f32 %v2425, %v2441
        %v2458 = vadd.f32 %v2426, %v2442
        %v2459 = vadd.f32 %v2427, %v2443
        %v2460 = vadd.f32 %v2428, %v2444
        %v2461 = vadd.f32 %v2429, %v2445
        %v2462 = vadd.f32 %v2430, %v2446
        %v2463 = vadd.f32 %v2431, %v2447
        %v2464 = vadd.f32 %v2432, %v2448
        %v2465 = vadd.f32 %v2433, %v2449
        %v2466 = vadd.f32 %v2434, %v2450
        %v2467 = vmul.f32 %v1256, %v2134
        %v2468 = vmul.f32 %v1260, %v2138
        %v2469 = vmul.f32 %v1266, %v2144
        %v2470 = vmul.f32 %v1270, %v2148
        %v2471 = vmul.f32 %v1276, %v2154
        %v2472 = vmul.f32 %v1280, %v2158
        %v2473 = vmul.f32 %v1286, %v2164
        %v2474 = vmul.f32 %v1290, %v2168
        %v2475 = vmul.f32 %v1296, %v2174
        %v2476 = vmul.f32 %v1300, %v2178
        %v2477 = vmul.f32 %v1306, %v2184
        %v2478 = vmul.f32 %v1310, %v2188
        %v2479 = vmul.f32 %v1316, %v2194
        %v2480 = vmul.f32 %v1320, %v2198
        %v2481 = vmul.f32 %v1326, %v2204
        %v2482 = vmul.f32 %v1330, %v2208
        %v2483 = vadd.f32 %v2451, %v2467
        %v2484 = vadd.f32 %v2452, %v2468
        %v2485 = vadd.f32 %v2453, %v2469
        %v2486 = vadd.f32 %v2454, %v2470
        %v2487 = vadd.f32 %v2455, %v2471
        %v2488 = vadd.f32 %v2456, %v2472
        %v2489 = vadd.f32 %v2457, %v2473
        %v2490 = vadd.f32 %v2458, %v2474
        %v2491 = vadd.f32 %v2459, %v2475
        %v2492 = vadd.f32 %v2460, %v2476
        %v2493 = vadd.f32 %v2461, %v2477
        %v2494 = vadd.f32 %v2462, %v2478
        %v2495 = vadd.f32 %v2463, %v2479
        %v2496 = vadd.f32 %v2464, %v2480
        %v2497 = vadd.f32 %v2465, %v2481
        %v2498 = vadd.f32 %v2466, %v2482
        %v2499 = vmul.f32 %v1367, %v2245
        %v2500 = vmul.f32 %v1371, %v2249
        %v2501 = vmul.f32 %v1377, %v2255
        %v2502 = vmul.f32 %v1381, %v2259
        %v2503 = vmul.f32 %v1387, %v2265
        %v2504 = vmul.f32 %v1391, %v2269
        %v2505 = vmul.f32 %v1397, %v2275
        %v2506 = vmul.f32 %v1401, %v2279
        %v2507 = vmul.f32 %v1407, %v2285
        %v2508 = vmul.f32 %v1411, %v2289
        %v2509 = vmul.f32 %v1417, %v2295
        %v2510 = vmul.f32 %v1421, %v2299
        %v2511 = vmul.f32 %v1427, %v2305
        %v2512 = vmul.f32 %v1431, %v2309
        %v2513 = vmul.f32 %v1437, %v2315
        %v2514 = vmul.f32 %v1441, %v2319
        %v2515 = vadd.f32 %v2483, %v2499
        %v2516 = vadd.f32 %v2484, %v2500
        %v2517 = vadd.f32 %v2485, %v2501
        %v2518 = vadd.f32 %v2486, %v2502
        %v2519 = vadd.f32 %v2487, %v2503
        %v2520 = vadd.f32 %v2488, %v2504
        %v2521 = vadd.f32 %v2489, %v2505
        %v2522 = vadd.f32 %v2490, %v2506
        %v2523 = vadd.f32 %v2491, %v2507
        %v2524 = vadd.f32 %v2492, %v2508
        %v2525 = vadd.f32 %v2493, %v2509
        %v2526 = vadd.f32 %v2494, %v2510
        %v2527 = vadd.f32 %v2495, %v2511
        %v2528 = vadd.f32 %v2496, %v2512
        %v2529 = vadd.f32 %v2497, %v2513
        %v2530 = vadd.f32 %v2498, %v2514
        %v2531 = vmul.f32 %v1369, %v2247
        %v2532 = vmul.f32 %v1373, %v2251
        %v2533 = vmul.f32 %v1379, %v2257
        %v2534 = vmul.f32 %v1383, %v2261
        %v2535 = vmul.f32 %v1389, %v2267
        %v2536 = vmul.f32 %v1393, %v2271
        %v2537 = vmul.f32 %v1399, %v2277
        %v2538 = vmul.f32 %v1403, %v2281
        %v2539 = vmul.f32 %v1409, %v2287
        %v2540 = vmul.f32 %v1413, %v2291
        %v2541 = vmul.f32 %v1419, %v2297
        %v2542 = vmul.f32 %v1423, %v2301
        %v2543 = vmul.f32 %v1429, %v2307
        %v2544 = vmul.f32 %v1433, %v2311
        %v2545 = vmul.f32 %v1439, %v2317
        %v2546 = vmul.f32 %v1443, %v2321
        %v2547 = vadd.f32 %v2515, %v2531
        %v2548 = vadd.f32 %v2516, %v2532
        %v2549 = vadd.f32 %v2517, %v2533
        %v2550 = vadd.f32 %v2518, %v2534
        %v2551 = vadd.f32 %v2519, %v2535
        %v2552 = vadd.f32 %v2520, %v2536
        %v2553 = vadd.f32 %v2521, %v2537
        %v2554 = vadd.f32 %v2522, %v2538
        %v2555 = vadd.f32 %v2523, %v2539
        %v2556 = vadd.f32 %v2524, %v2540
        %v2557 = vadd.f32 %v2525, %v2541
        %v2558 = vadd.f32 %v2526, %v2542
        %v2559 = vadd.f32 %v2527, %v2543
        %v2560 = vadd.f32 %v2528, %v2544
        %v2561 = vadd.f32 %v2529, %v2545
        %v2562 = vadd.f32 %v2530, %v2546
        %v2563 = vmul.f32 %v2547, %v2547
        %v2564 = vmul.f32 %v2548, %v2548
        %v2565 = vmul.f32 %v2549, %v2549
        %v2566 = vmul.f32 %v2550, %v2550
        %v2567 = vmul.f32 %v2551, %v2551
        %v2568 = vmul.f32 %v2552, %v2552
        %v2569 = vmul.f32 %v2553, %v2553
        %v2570 = vmul.f32 %v2554, %v2554
        %v2571 = vmul.f32 %v2555, %v2555
        %v2572 = vmul.f32 %v2556, %v2556
        %v2573 = vmul.f32 %v2557, %v2557
        %v2574 = vmul.f32 %v2558, %v2558
        %v2575 = vmul.f32 %v2559, %v2559
        %v2576 = vmul.f32 %v2560, %v2560
        %v2577 = vmul.f32 %v2561, %v2561
        %v2578 = vmul.f32 %v2562, %v2562
        %2579 = vadd.xlane.f32.xlu0 %v2563
        %v2580 = vpop.xlane.xlu0 %2579
        %2581 = vadd.xlane.f32.xlu0 %v2564
        %v2582 = vpop.xlane.xlu0 %2581
        %2583 = vadd.xlane.f32.xlu0 %v2565
        %v2584 = vpop.xlane.xlu0 %2583
        %2585 = vadd.xlane.f32.xlu0 %v2566
        %v2586 = vpop.xlane.xlu0 %2585
        %2587 = vadd.xlane.f32.xlu0 %v2567
        %v2588 = vpop.xlane.xlu0 %2587
        %2589 = vadd.xlane.f32.xlu0 %v2568
        %v2590 = vpop.xlane.xlu0 %2589
        %2591 = vadd.xlane.f32.xlu0 %v2569
        %v2592 = vpop.xlane.xlu0 %2591
        %2593 = vadd.xlane.f32.xlu0 %v2570
        %v2594 = vpop.xlane.xlu0 %2593
        %2595 = vadd.xlane.f32.xlu0 %v2571
        %v2596 = vpop.xlane.xlu0 %2595
        %2597 = vadd.xlane.f32.xlu0 %v2572
        %v2598 = vpop.xlane.xlu0 %2597
        %2599 = vadd.xlane.f32.xlu0 %v2573
        %v2600 = vpop.xlane.xlu0 %2599
        %2601 = vadd.xlane.f32.xlu0 %v2574
        %v2602 = vpop.xlane.xlu0 %2601
        %2603 = vadd.xlane.f32.xlu0 %v2575
        %v2604 = vpop.xlane.xlu0 %2603
        %2605 = vadd.xlane.f32.xlu0 %v2576
        %v2606 = vpop.xlane.xlu0 %2605
        %2607 = vadd.xlane.f32.xlu0 %v2577
        %v2608 = vpop.xlane.xlu0 %2607
        %2609 = vadd.xlane.f32.xlu0 %v2578
        %v2610 = vpop.xlane.xlu0 %2609
        %v2611 = vmax.f32 %v2580, 1e-24
        %v2612 = vmax.f32 %v2582, 1e-24
        %v2613 = vmax.f32 %v2584, 1e-24
        %v2614 = vmax.f32 %v2586, 1e-24
        %v2615 = vmax.f32 %v2588, 1e-24
        %v2616 = vmax.f32 %v2590, 1e-24
        %v2617 = vmax.f32 %v2592, 1e-24
        %v2618 = vmax.f32 %v2594, 1e-24
        %v2619 = vmax.f32 %v2596, 1e-24
        %v2620 = vmax.f32 %v2598, 1e-24
        %v2621 = vmax.f32 %v2600, 1e-24
        %v2622 = vmax.f32 %v2602, 1e-24
        %v2623 = vmax.f32 %v2604, 1e-24
        %v2624 = vmax.f32 %v2606, 1e-24
        %v2625 = vmax.f32 %v2608, 1e-24
        %v2626 = vmax.f32 %v2610, 1e-24
        %v2627 = vrsqrt.pop %v2611
        %v2628 = vrsqrt.pop %v2612
        %v2629 = vrsqrt.pop %v2613
        %v2630 = vrsqrt.pop %v2614
        %v2631 = vrsqrt.pop %v2615
        %v2632 = vrsqrt.pop %v2616
        %v2633 = vrsqrt.pop %v2617
        %v2634 = vrsqrt.pop %v2618
        %v2635 = vrsqrt.pop %v2619
        %v2636 = vrsqrt.pop %v2620
        %v2637 = vrsqrt.pop %v2621
        %v2638 = vrsqrt.pop %v2622
        %v2639 = vrsqrt.pop %v2623
        %v2640 = vrsqrt.pop %v2624
        %v2641 = vrsqrt.pop %v2625
        %v2642 = vrsqrt.pop %v2626
        %v2643 = vmul.f32 %v2547, %v2627
        %v2644 = vmul.f32 %v2548, %v2628
        %v2645 = vmul.f32 %v2549, %v2629
        %v2646 = vmul.f32 %v2550, %v2630
        %v2647 = vmul.f32 %v2551, %v2631
        %v2648 = vmul.f32 %v2552, %v2632
        %v2649 = vmul.f32 %v2553, %v2633
        %v2650 = vmul.f32 %v2554, %v2634
        %v2651 = vmul.f32 %v2555, %v2635
        %v2652 = vmul.f32 %v2556, %v2636
        %v2653 = vmul.f32 %v2557, %v2637
        %v2654 = vmul.f32 %v2558, %v2638
        %v2655 = vmul.f32 %v2559, %v2639
        %v2656 = vmul.f32 %v2560, %v2640
        %v2657 = vmul.f32 %v2561, %v2641
        %v2658 = vmul.f32 %v2562, %v2642
        %v2659 = vpack.c.bf16 %v2644, %v2643
        %v2660 = vpack.c.bf16 %v2646, %v2645
        %v2661 = vpack.c.bf16 %v2648, %v2647
        %v2662 = vpack.c.bf16 %v2650, %v2649
        %v2663 = vpack.c.bf16 %v2652, %v2651
        %v2664 = vpack.c.bf16 %v2654, %v2653
        %v2665 = vpack.c.bf16 %v2656, %v2655
        %v2666 = vpack.c.bf16 %v2658, %v2657
        %v2667 = vmax.f32 %v2643, 0.0
        %v2668 = vmax.f32 %v2644, 0.0
        %v2669 = vmax.f32 %v2645, 0.0
        %v2670 = vmax.f32 %v2646, 0.0
        %v2671 = vmax.f32 %v2647, 0.0
        %v2672 = vmax.f32 %v2648, 0.0
        %v2673 = vmax.f32 %v2649, 0.0
        %v2674 = vmax.f32 %v2650, 0.0
        %v2675 = vmax.f32 %v2651, 0.0
        %v2676 = vmax.f32 %v2652, 0.0
        %v2677 = vmax.f32 %v2653, 0.0
        %v2678 = vmax.f32 %v2654, 0.0
        %v2679 = vmax.f32 %v2655, 0.0
        %v2680 = vmax.f32 %v2656, 0.0
        %v2681 = vmax.f32 %v2657, 0.0
        %v2682 = vmax.f32 %v2658, 0.0
        %v2683 = vpack.c.bf16 %v2668, %v2667
        %v2684 = vpack.c.bf16 %v2670, %v2669
        %v2685 = vpack.c.bf16 %v2672, %v2671
        %v2686 = vpack.c.bf16 %v2674, %v2673
        %v2687 = vpack.c.bf16 %v2676, %v2675
        %v2688 = vpack.c.bf16 %v2678, %v2677
        %v2689 = vpack.c.bf16 %v2680, %v2679
        %v2690 = vpack.c.bf16 %v2682, %v2681
        %v2691 = vld [vmem:[#allocation10] sm:$0xf]
        %v2692 = vld [vmem:[#allocation10 + $0x4] sm:$0xf]
        %v2693 = vld [vmem:[#allocation10 + $0x8] sm:$0xf]
        %v2694 = vld [vmem:[#allocation10 + $0xc] sm:$0xf]
        %v2695 = vld [vmem:[#allocation10 + $0x10] sm:$0xf]
        %v2696 = vld [vmem:[#allocation10 + $0x14] sm:$0xf]
        %v2697 = vld [vmem:[#allocation10 + $0x18] sm:$0xf]
        %v2698 = vld [vmem:[#allocation10 + $0x1c] sm:$0xf]
        %v2699 = vld [vmem:[#allocation10 + $0x20] sm:$0xf]
        %v2700 = vld [vmem:[#allocation10 + $0x24] sm:$0xf]
        %v2701 = vld [vmem:[#allocation10 + $0x28] sm:$0xf]
        %v2702 = vld [vmem:[#allocation10 + $0x2c] sm:$0xf]
        %v2703 = vld [vmem:[#allocation10 + $0x30] sm:$0xf]
        %v2704 = vld [vmem:[#allocation10 + $0x34] sm:$0xf]
        %v2705 = vld [vmem:[#allocation10 + $0x38] sm:$0xf]
        %v2706 = vld [vmem:[#allocation10 + $0x3c] sm:$0xf]
        %v2707 = vld [vmem:[%s7] sm:$0x1]
        %v2709 = vlaneseq
        %v2710 = vshrl.u32 %v2709, 7
        %v2711 = vsub.s32 0, %v2710
        %v2712 = vrot.slane %v2707, %v2711
        %v2730 = vunpack.c.l.b16 %v2691
        %v2731 = vunpack.c.l.b16 %v2692
        %v2732 = vunpack.c.l.b16 %v2693
        %v2733 = vunpack.c.l.b16 %v2694
        %v2734 = vunpack.c.l.b16 %v2695
        %v2735 = vunpack.c.l.b16 %v2696
        %v2736 = vunpack.c.l.b16 %v2697
        %v2737 = vunpack.c.l.b16 %v2698
        %v2738 = vunpack.c.l.b16 %v2699
        %v2739 = vunpack.c.l.b16 %v2700
        %v2740 = vunpack.c.l.b16 %v2701
        %v2741 = vunpack.c.l.b16 %v2702
        %v2742 = vunpack.c.l.b16 %v2703
        %v2743 = vunpack.c.l.b16 %v2704
        %v2744 = vunpack.c.l.b16 %v2705
        %v2745 = vunpack.c.l.b16 %v2706
        %v2746 = vpack.c.b16 %v2731, %v2730
        %v2747 = vpack.c.b16 %v2733, %v2732
        %v2748 = vpack.c.b16 %v2735, %v2734
        %v2749 = vpack.c.b16 %v2737, %v2736
        %v2750 = vpack.c.b16 %v2739, %v2738
        %v2751 = vpack.c.b16 %v2741, %v2740
        %v2752 = vpack.c.b16 %v2743, %v2742
        %v2753 = vpack.c.b16 %v2745, %v2744
        %2762 = vmatprep.subr.bf16.mxu0 0
        %2763 = vmatpush1.bf16.msra.mxu0 %v2746
        %2764 = vmatprep.subr.bf16.mxu0 0
        %2765 = vmatpush1.bf16.msra.mxu0 %v2747
        %2766 = vmatprep.subr.bf16.mxu0 0
        %2767 = vmatpush1.bf16.msra.mxu0 %v2748
        %2768 = vmatprep.subr.bf16.mxu0 0
        %2769 = vmatpush1.bf16.msra.mxu0 %v2749
        %2770 = vmatprep.subr.bf16.mxu0 0
        %2771 = vmatpush1.bf16.msra.mxu0 %v2750
        %2772 = vmatprep.subr.bf16.mxu0 0
        %2773 = vmatpush1.bf16.msra.mxu0 %v2751
        %2774 = vmatprep.subr.bf16.mxu0 0
        %2775 = vmatpush1.bf16.msra.mxu0 %v2752
        %2776 = vmatprep.subr.bf16.mxu0 0
        %2777 = vmatpush1.bf16.msra.mxu0 %v2753
        %2778 = vmatprep.subr.bf16.mxu0 0
        %2779 = vmatpush1.bf16.msra.mxu0 0
        %2780 = vmatprep.subr.bf16.mxu0 0
        %2781 = vmatpush1.bf16.msra.mxu0 0
        %2782 = vmatprep.subr.bf16.mxu0 0
        %2783 = vmatpush1.bf16.msra.mxu0 0
        %2784 = vmatprep.subr.bf16.mxu0 0
        %2785 = vmatpush1.bf16.msra.mxu0 0
        %2786 = vmatprep.subr.bf16.mxu0 0
        %2787 = vmatpush1.bf16.msra.mxu0 0
        %2788 = vmatprep.subr.bf16.mxu0 0
        %2789 = vmatpush1.bf16.msra.mxu0 0
        %2790 = vmatprep.subr.bf16.mxu0 0
        %2791 = vmatpush1.bf16.msra.mxu0 0
        %2792 = vmatprep.subr.bf16.mxu0 0
        %2793 = vmatpush1.bf16.msra.mxu0 0
        %2794 = vmatprep.mubr.bf16.mxu0 0
        %2795 = vmatmul.mubr.bf16.gmra.mrb[0].mxu0 %v2683
        %v2796 = vpop.f32.mrb[0].mxu0
        %v2797 = vadd.f32 %v2712, %v2796
        %v2798 = vpop.f32.mrb[0].mxu0
        %v2799 = vpop.f32.mrb[0].mxu0
        %v2800 = vadd.f32 %v2712, %v2799
        %v2801 = vpop.f32.mrb[0].mxu0
        %2802 = vmatprep.mubr.bf16.mxu0 0
        %2803 = vmatmul.mubr.bf16.gmra.mrb[0].mxu0 %v2684
        %v2804 = vpop.f32.mrb[0].mxu0
        %v2805 = vadd.f32 %v2712, %v2804
        %v2806 = vpop.f32.mrb[0].mxu0
        %v2807 = vpop.f32.mrb[0].mxu0
        %v2808 = vadd.f32 %v2712, %v2807
        %v2809 = vpop.f32.mrb[0].mxu0
        %2810 = vmatprep.mubr.bf16.mxu0 0
        %2811 = vmatmul.mubr.bf16.gmra.mrb[0].mxu0 %v2685
        %v2812 = vpop.f32.mrb[0].mxu0
        %v2813 = vadd.f32 %v2712, %v2812
        %v2814 = vpop.f32.mrb[0].mxu0
        %v2815 = vpop.f32.mrb[0].mxu0
        %v2816 = vadd.f32 %v2712, %v2815
        %v2817 = vpop.f32.mrb[0].mxu0
        %2818 = vmatprep.mubr.bf16.mxu0 0
        %2819 = vmatmul.mubr.bf16.gmra.mrb[0].mxu0 %v2686
        %v2820 = vpop.f32.mrb[0].mxu0
        %v2821 = vadd.f32 %v2712, %v2820
        %v2822 = vpop.f32.mrb[0].mxu0
        %v2823 = vpop.f32.mrb[0].mxu0
        %v2824 = vadd.f32 %v2712, %v2823
        %v2825 = vpop.f32.mrb[0].mxu0
        %2826 = vmatprep.mubr.bf16.mxu0 0
        %2827 = vmatmul.mubr.bf16.gmra.mrb[0].mxu0 %v2687
        %v2828 = vpop.f32.mrb[0].mxu0
        %v2829 = vadd.f32 %v2712, %v2828
        %v2830 = vpop.f32.mrb[0].mxu0
        %v2831 = vpop.f32.mrb[0].mxu0
        %v2832 = vadd.f32 %v2712, %v2831
        %v2833 = vpop.f32.mrb[0].mxu0
        %2834 = vmatprep.mubr.bf16.mxu0 0
        %2835 = vmatmul.mubr.bf16.gmra.mrb[0].mxu0 %v2688
        %v2836 = vpop.f32.mrb[0].mxu0
        %v2837 = vadd.f32 %v2712, %v2836
        %v2838 = vpop.f32.mrb[0].mxu0
        %v2839 = vpop.f32.mrb[0].mxu0
        %v2840 = vadd.f32 %v2712, %v2839
        %v2841 = vpop.f32.mrb[0].mxu0
        %2842 = vmatprep.mubr.bf16.mxu0 0
        %2843 = vmatmul.mubr.bf16.gmra.mrb[0].mxu0 %v2689
        %v2844 = vpop.f32.mrb[0].mxu0
        %v2845 = vadd.f32 %v2712, %v2844
        %v2846 = vpop.f32.mrb[0].mxu0
        %v2847 = vpop.f32.mrb[0].mxu0
        %v2848 = vadd.f32 %v2712, %v2847
        %v2849 = vpop.f32.mrb[0].mxu0
        %2850 = vmatprep.mubr.bf16.mxu0 0
        %2851 = vmatmul.mubr.bf16.gmra.mrb[0].mxu0 %v2690
        %v2852 = vpop.f32.mrb[0].mxu0
        %v2853 = vadd.f32 %v2712, %v2852
        %v2854 = vpop.f32.mrb[0].mxu0
        %v2855 = vpop.f32.mrb[0].mxu0
        %v2856 = vadd.f32 %v2712, %v2855
        %v2857 = vpop.f32.mrb[0].mxu0
        %2858 = vdwg.mxu0
        %2859 = vst [vmem:[%s506] sm:$0xff] %v2797
        %2860 = vst [vmem:[%s506 + $0x8] sm:$0xff] %v2800
        %2861 = vst [vmem:[%s506 + $0x10] sm:$0xff] %v2805
        %2862 = vst [vmem:[%s506 + $0x18] sm:$0xff] %v2808
        %2863 = vst [vmem:[%s506 + $0x20] sm:$0xff] %v2813
        %2864 = vst [vmem:[%s506 + $0x28] sm:$0xff] %v2816
        %2865 = vst [vmem:[%s506 + $0x30] sm:$0xff] %v2821
        %2866 = vst [vmem:[%s506 + $0x38] sm:$0xff] %v2824
        %2867 = vst [vmem:[%s506 + $0x40] sm:$0xff] %v2829
        %2868 = vst [vmem:[%s506 + $0x48] sm:$0xff] %v2832
        %2869 = vst [vmem:[%s506 + $0x50] sm:$0xff] %v2837
        %2870 = vst [vmem:[%s506 + $0x58] sm:$0xff] %v2840
        %2871 = vst [vmem:[%s506 + $0x60] sm:$0xff] %v2845
        %2872 = vst [vmem:[%s506 + $0x68] sm:$0xff] %v2848
        %2873 = vst [vmem:[%s506 + $0x70] sm:$0xff] %v2853
        %2874 = vst [vmem:[%s506 + $0x78] sm:$0xff] %v2856
        %v2875 = vld [vmem:[#allocation11] sm:$0xff]
        %v2876 = vld [vmem:[#allocation11 + $0x8] sm:$0xff]
        %v2877 = vld [vmem:[#allocation11 + $0x10] sm:$0xff]
        %v2878 = vld [vmem:[#allocation11 + $0x18] sm:$0xff]
        %v2879 = vld [vmem:[#allocation11 + $0x20] sm:$0xff]
        %v2880 = vld [vmem:[#allocation11 + $0x28] sm:$0xff]
        %v2881 = vld [vmem:[#allocation11 + $0x30] sm:$0xff]
        %v2882 = vld [vmem:[#allocation11 + $0x38] sm:$0xff]
        %v2883 = vld [vmem:[#allocation11 + $0x40] sm:$0xff]
        %v2884 = vld [vmem:[#allocation11 + $0x48] sm:$0xff]
        %v2885 = vld [vmem:[#allocation11 + $0x50] sm:$0xff]
        %v2886 = vld [vmem:[#allocation11 + $0x58] sm:$0xff]
        %v2887 = vld [vmem:[#allocation11 + $0x60] sm:$0xff]
        %v2888 = vld [vmem:[#allocation11 + $0x68] sm:$0xff]
        %v2889 = vld [vmem:[#allocation11 + $0x70] sm:$0xff]
        %v2890 = vld [vmem:[#allocation11 + $0x78] sm:$0xff]
        %v2891 = vld [vmem:[#allocation11 + $0x80] sm:$0xff]
        %v2892 = vld [vmem:[#allocation11 + $0x88] sm:$0xff]
        %v2893 = vld [vmem:[#allocation11 + $0x90] sm:$0xff]
        %v2894 = vld [vmem:[#allocation11 + $0x98] sm:$0xff]
        %v2895 = vld [vmem:[#allocation11 + $0xa0] sm:$0xff]
        %v2896 = vld [vmem:[#allocation11 + $0xa8] sm:$0xff]
        %v2897 = vld [vmem:[#allocation11 + $0xb0] sm:$0xff]
        %v2898 = vld [vmem:[#allocation11 + $0xb8] sm:$0xff]
        %v2899 = vld [vmem:[#allocation11 + $0xc0] sm:$0xff]
        %v2900 = vld [vmem:[#allocation11 + $0xc8] sm:$0xff]
        %v2901 = vld [vmem:[#allocation11 + $0xd0] sm:$0xff]
        %v2902 = vld [vmem:[#allocation11 + $0xd8] sm:$0xff]
        %v2903 = vld [vmem:[#allocation11 + $0xe0] sm:$0xff]
        %v2904 = vld [vmem:[#allocation11 + $0xe8] sm:$0xff]
        %v2905 = vld [vmem:[#allocation11 + $0xf0] sm:$0xff]
        %v2906 = vld [vmem:[#allocation11 + $0xf8] sm:$0xff]
        %v2907 = vld [vmem:[#allocation11 + $0x100] sm:$0xff]
        %v2908 = vld [vmem:[#allocation11 + $0x108] sm:$0xff]
        %v2909 = vld [vmem:[#allocation11 + $0x110] sm:$0xff]
        %v2910 = vld [vmem:[#allocation11 + $0x118] sm:$0xff]
        %v2911 = vld [vmem:[#allocation11 + $0x120] sm:$0xff]
        %v2912 = vld [vmem:[#allocation11 + $0x128] sm:$0xff]
        %v2913 = vld [vmem:[#allocation11 + $0x130] sm:$0xff]
        %v2914 = vld [vmem:[#allocation11 + $0x138] sm:$0xff]
        %v2915 = vld [vmem:[#allocation11 + $0x140] sm:$0xff]
        %v2916 = vld [vmem:[#allocation11 + $0x148] sm:$0xff]
        %v2917 = vld [vmem:[#allocation11 + $0x150] sm:$0xff]
        %v2918 = vld [vmem:[#allocation11 + $0x158] sm:$0xff]
        %v2919 = vld [vmem:[#allocation11 + $0x160] sm:$0xff]
        %v2920 = vld [vmem:[#allocation11 + $0x168] sm:$0xff]
        %v2921 = vld [vmem:[#allocation11 + $0x170] sm:$0xff]
        %v2922 = vld [vmem:[#allocation11 + $0x178] sm:$0xff]
        %v2923 = vld [vmem:[%s9] sm:$0x3f]
        %v2925 = vlaneseq
        %v2926 = vshrl.u32 %v2925, 7
        %v2927 = vsub.s32 0, %v2926
        %v2928 = vrot.slane %v2923, %v2927
        %v2929 = vlaneseq
        %v2930 = vshrl.u32 %v2929, 7
        %v2931 = vsub.s32 1, %v2930
        %v2932 = vrot.slane %v2923, %v2931
        %v2933 = vlaneseq
        %v2934 = vshrl.u32 %v2933, 7
        %v2935 = vsub.s32 2, %v2934
        %v2936 = vrot.slane %v2923, %v2935
        %v2937 = vlaneseq
        %v2938 = vshrl.u32 %v2937, 7
        %v2939 = vsub.s32 3, %v2938
        %v2940 = vrot.slane %v2923, %v2939
        %v2941 = vlaneseq
        %v2942 = vshrl.u32 %v2941, 7
        %v2943 = vsub.s32 4, %v2942
        %v2944 = vrot.slane %v2923, %v2943
        %v2945 = vlaneseq
        %v2946 = vshrl.u32 %v2945, 7
        %v2947 = vsub.s32 5, %v2946
        %v2948 = vrot.slane %v2923, %v2947
        %v3003 = vunpack.c.l.b16 %v2875
        %v3004 = vunpack.c.h.b16 %v2875
        %v3005 = vunpack.c.l.b16 %v2876
        %v3006 = vunpack.c.h.b16 %v2876
        %v3007 = vunpack.c.l.b16 %v2877
        %v3008 = vunpack.c.h.b16 %v2877
        %v3009 = vunpack.c.l.b16 %v2878
        %v3010 = vunpack.c.h.b16 %v2878
        %v3011 = vunpack.c.l.b16 %v2879
        %v3012 = vunpack.c.h.b16 %v2879
        %v3013 = vunpack.c.l.b16 %v2880
        %v3014 = vunpack.c.h.b16 %v2880
        %v3015 = vunpack.c.l.b16 %v2881
        %v3016 = vunpack.c.h.b16 %v2881
        %v3017 = vunpack.c.l.b16 %v2882
        %v3018 = vunpack.c.h.b16 %v2882
        %v3019 = vunpack.c.l.b16 %v2883
        %v3020 = vunpack.c.h.b16 %v2883
        %v3021 = vunpack.c.l.b16 %v2884
        %v3022 = vunpack.c.h.b16 %v2884
        %v3023 = vunpack.c.l.b16 %v2885
        %v3024 = vunpack.c.h.b16 %v2885
        %v3025 = vunpack.c.l.b16 %v2886
        %v3026 = vunpack.c.h.b16 %v2886
        %v3027 = vunpack.c.l.b16 %v2887
        %v3028 = vunpack.c.h.b16 %v2887
        %v3029 = vunpack.c.l.b16 %v2888
        %v3030 = vunpack.c.h.b16 %v2888
        %v3031 = vunpack.c.l.b16 %v2889
        %v3032 = vunpack.c.h.b16 %v2889
        %v3033 = vunpack.c.l.b16 %v2890
        %v3034 = vunpack.c.h.b16 %v2890
        %v3035 = vunpack.c.l.b16 %v2891
        %v3036 = vunpack.c.h.b16 %v2891
        %v3037 = vunpack.c.l.b16 %v2892
        %v3038 = vunpack.c.h.b16 %v2892
        %v3039 = vunpack.c.l.b16 %v2893
        %v3040 = vunpack.c.h.b16 %v2893
        %v3041 = vunpack.c.l.b16 %v2894
        %v3042 = vunpack.c.h.b16 %v2894
        %v3043 = vunpack.c.l.b16 %v2895
        %v3044 = vunpack.c.h.b16 %v2895
        %v3045 = vunpack.c.l.b16 %v2896
        %v3046 = vunpack.c.h.b16 %v2896
        %v3047 = vunpack.c.l.b16 %v2897
        %v3048 = vunpack.c.h.b16 %v2897
        %v3049 = vunpack.c.l.b16 %v2898
        %v3050 = vunpack.c.h.b16 %v2898
        %v3051 = vunpack.c.l.b16 %v2899
        %v3052 = vunpack.c.h.b16 %v2899
        %v3053 = vunpack.c.l.b16 %v2900
        %v3054 = vunpack.c.h.b16 %v2900
        %v3055 = vunpack.c.l.b16 %v2901
        %v3056 = vunpack.c.h.b16 %v2901
        %v3057 = vunpack.c.l.b16 %v2902
        %v3058 = vunpack.c.h.b16 %v2902
        %v3059 = vunpack.c.l.b16 %v2903
        %v3060 = vunpack.c.h.b16 %v2903
        %v3061 = vunpack.c.l.b16 %v2904
        %v3062 = vunpack.c.h.b16 %v2904
        %v3063 = vunpack.c.l.b16 %v2905
        %v3064 = vunpack.c.h.b16 %v2905
        %v3065 = vunpack.c.l.b16 %v2906
        %v3066 = vunpack.c.h.b16 %v2906
        %v3067 = vunpack.c.l.b16 %v2907
        %v3068 = vunpack.c.h.b16 %v2907
        %v3069 = vunpack.c.l.b16 %v2908
        %v3070 = vunpack.c.h.b16 %v2908
        %v3071 = vunpack.c.l.b16 %v2909
        %v3072 = vunpack.c.h.b16 %v2909
        %v3073 = vunpack.c.l.b16 %v2910
        %v3074 = vunpack.c.h.b16 %v2910
        %v3075 = vunpack.c.l.b16 %v2911
        %v3076 = vunpack.c.h.b16 %v2911
        %v3077 = vunpack.c.l.b16 %v2912
        %v3078 = vunpack.c.h.b16 %v2912
        %v3079 = vunpack.c.l.b16 %v2913
        %v3080 = vunpack.c.h.b16 %v2913
        %v3081 = vunpack.c.l.b16 %v2914
        %v3082 = vunpack.c.h.b16 %v2914
        %v3083 = vunpack.c.l.b16 %v2915
        %v3084 = vunpack.c.h.b16 %v2915
        %v3085 = vunpack.c.l.b16 %v2916
        %v3086 = vunpack.c.h.b16 %v2916
        %v3087 = vunpack.c.l.b16 %v2917
        %v3088 = vunpack.c.h.b16 %v2917
        %v3089 = vunpack.c.l.b16 %v2918
        %v3090 = vunpack.c.h.b16 %v2918
        %v3091 = vunpack.c.l.b16 %v2919
        %v3092 = vunpack.c.h.b16 %v2919
        %v3093 = vunpack.c.l.b16 %v2920
        %v3094 = vunpack.c.h.b16 %v2920
        %v3095 = vunpack.c.l.b16 %v2921
        %v3096 = vunpack.c.h.b16 %v2921
        %v3097 = vunpack.c.l.b16 %v2922
        %v3098 = vunpack.c.h.b16 %v2922
        %v3099 = vpack.c.b16 %v3009, %v3003
        %v3100 = vpack.c.b16 %v3010, %v3004
        %v3101 = vpack.c.b16 %v3011, %v3005
        %v3102 = vpack.c.b16 %v3012, %v3006
        %v3103 = vpack.c.b16 %v3013, %v3007
        %v3104 = vpack.c.b16 %v3014, %v3008
        %v3105 = vpack.c.b16 %v3021, %v3015
        %v3106 = vpack.c.b16 %v3022, %v3016
        %v3107 = vpack.c.b16 %v3023, %v3017
        %v3108 = vpack.c.b16 %v3024, %v3018
        %v3109 = vpack.c.b16 %v3025, %v3019
        %v3110 = vpack.c.b16 %v3026, %v3020
        %v3111 = vpack.c.b16 %v3033, %v3027
        %v3112 = vpack.c.b16 %v3034, %v3028
        %v3113 = vpack.c.b16 %v3035, %v3029
        %v3114 = vpack.c.b16 %v3036, %v3030
        %v3115 = vpack.c.b16 %v3037, %v3031
        %v3116 = vpack.c.b16 %v3038, %v3032
        %v3117 = vpack.c.b16 %v3045, %v3039
        %v3118 = vpack.c.b16 %v3046, %v3040
        %v3119 = vpack.c.b16 %v3047, %v3041
        %v3120 = vpack.c.b16 %v3048, %v3042
        %v3121 = vpack.c.b16 %v3049, %v3043
        %v3122 = vpack.c.b16 %v3050, %v3044
        %v3123 = vpack.c.b16 %v3057, %v3051
        %v3124 = vpack.c.b16 %v3058, %v3052
        %v3125 = vpack.c.b16 %v3059, %v3053
        %v3126 = vpack.c.b16 %v3060, %v3054
        %v3127 = vpack.c.b16 %v3061, %v3055
        %v3128 = vpack.c.b16 %v3062, %v3056
        %v3129 = vpack.c.b16 %v3069, %v3063
        %v3130 = vpack.c.b16 %v3070, %v3064
        %v3131 = vpack.c.b16 %v3071, %v3065
        %v3132 = vpack.c.b16 %v3072, %v3066
        %v3133 = vpack.c.b16 %v3073, %v3067
        %v3134 = vpack.c.b16 %v3074, %v3068
        %v3135 = vpack.c.b16 %v3081, %v3075
        %v3136 = vpack.c.b16 %v3082, %v3076
        %v3137 = vpack.c.b16 %v3083, %v3077
        %v3138 = vpack.c.b16 %v3084, %v3078
        %v3139 = vpack.c.b16 %v3085, %v3079
        %v3140 = vpack.c.b16 %v3086, %v3080
        %v3141 = vpack.c.b16 %v3093, %v3087
        %v3142 = vpack.c.b16 %v3094, %v3088
        %v3143 = vpack.c.b16 %v3095, %v3089
        %v3144 = vpack.c.b16 %v3096, %v3090
        %v3145 = vpack.c.b16 %v3097, %v3091
        %v3146 = vpack.c.b16 %v3098, %v3092
        %3195 = vmatprep.subr.bf16.mxu0 %v3100
        %3196 = vmatpush1.bf16.msra.mxu0 %v3099
        %3197 = vmatprep.subr.bf16.mxu0 %v3106
        %3198 = vmatpush1.bf16.msra.mxu0 %v3105
        %3199 = vmatprep.subr.bf16.mxu0 %v3112
        %3200 = vmatpush1.bf16.msra.mxu0 %v3111
        %3201 = vmatprep.subr.bf16.mxu0 %v3118
        %3202 = vmatpush1.bf16.msra.mxu0 %v3117
        %3203 = vmatprep.subr.bf16.mxu0 %v3124
        %3204 = vmatpush1.bf16.msra.mxu0 %v3123
        %3205 = vmatprep.subr.bf16.mxu0 %v3130
        %3206 = vmatpush1.bf16.msra.mxu0 %v3129
        %3207 = vmatprep.subr.bf16.mxu0 %v3136
        %3208 = vmatpush1.bf16.msra.mxu0 %v3135
        %3209 = vmatprep.subr.bf16.mxu0 %v3142
        %3210 = vmatpush1.bf16.msra.mxu0 %v3141
        %3211 = vmatprep.subr.bf16.mxu0 0
        %3212 = vmatpush1.bf16.msra.mxu0 0
        %3213 = vmatprep.subr.bf16.mxu0 0
        %3214 = vmatpush1.bf16.msra.mxu0 0
        %3215 = vmatprep.subr.bf16.mxu0 0
        %3216 = vmatpush1.bf16.msra.mxu0 0
        %3217 = vmatprep.subr.bf16.mxu0 0
        %3218 = vmatpush1.bf16.msra.mxu0 0
        %3219 = vmatprep.subr.bf16.mxu0 0
        %3220 = vmatpush1.bf16.msra.mxu0 0
        %3221 = vmatprep.subr.bf16.mxu0 0
        %3222 = vmatpush1.bf16.msra.mxu0 0
        %3223 = vmatprep.subr.bf16.mxu0 0
        %3224 = vmatpush1.bf16.msra.mxu0 0
        %3225 = vmatprep.subr.bf16.mxu0 0
        %3226 = vmatpush1.bf16.msra.mxu0 0
        %3227 = vmatprep.mubr.bf16.mxu0 0
        %3228 = vmatmul.mubr.bf16.gmra.mrb[0].mxu0 %v2659
        %v3229 = vpop.f32.mrb[0].mxu0
        %v3230 = vadd.f32 %v2928, %v3229
        %v3231 = vpop.f32.mrb[0].mxu0
        %v3232 = vadd.f32 %v2932, %v3231
        %v3233 = vpop.f32.mrb[0].mxu0
        %v3234 = vadd.f32 %v2928, %v3233
        %v3235 = vpop.f32.mrb[0].mxu0
        %v3236 = vadd.f32 %v2932, %v3235
        %3237 = vmatprep.mubr.bf16.mxu0 0
        %3238 = vmatmul.mubr.bf16.gmra.mrb[0].mxu0 %v2660
        %v3239 = vpop.f32.mrb[0].mxu0
        %v3240 = vadd.f32 %v2928, %v3239
        %v3241 = vpop.f32.mrb[0].mxu0
        %v3242 = vadd.f32 %v2932, %v3241
        %v3243 = vpop.f32.mrb[0].mxu0
        %v3244 = vadd.f32 %v2928, %v3243
        %v3245 = vpop.f32.mrb[0].mxu0
        %v3246 = vadd.f32 %v2932, %v3245
        %3247 = vmatprep.mubr.bf16.mxu0 0
        %3248 = vmatmul.mubr.bf16.gmra.mrb[0].mxu0 %v2661
        %v3249 = vpop.f32.mrb[0].mxu0
        %v3250 = vadd.f32 %v2928, %v3249
        %v3251 = vpop.f32.mrb[0].mxu0
        %v3252 = vadd.f32 %v2932, %v3251
        %v3253 = vpop.f32.mrb[0].mxu0
        %v3254 = vadd.f32 %v2928, %v3253
        %v3255 = vpop.f32.mrb[0].mxu0
        %v3256 = vadd.f32 %v2932, %v3255
        %3257 = vmatprep.mubr.bf16.mxu0 0
        %3258 = vmatmul.mubr.bf16.gmra.mrb[0].mxu0 %v2662
        %v3259 = vpop.f32.mrb[0].mxu0
        %v3260 = vadd.f32 %v2928, %v3259
        %v3261 = vpop.f32.mrb[0].mxu0
        %v3262 = vadd.f32 %v2932, %v3261
        %v3263 = vpop.f32.mrb[0].mxu0
        %v3264 = vadd.f32 %v2928, %v3263
        %v3265 = vpop.f32.mrb[0].mxu0
        %v3266 = vadd.f32 %v2932, %v3265
        %3267 = vmatprep.mubr.bf16.mxu0 0
        %3268 = vmatmul.mubr.bf16.gmra.mrb[0].mxu0 %v2663
        %v3269 = vpop.f32.mrb[0].mxu0
        %v3270 = vadd.f32 %v2928, %v3269
        %v3271 = vpop.f32.mrb[0].mxu0
        %v3272 = vadd.f32 %v2932, %v3271
        %v3273 = vpop.f32.mrb[0].mxu0
        %v3274 = vadd.f32 %v2928, %v3273
        %v3275 = vpop.f32.mrb[0].mxu0
        %v3276 = vadd.f32 %v2932, %v3275
        %3277 = vmatprep.mubr.bf16.mxu0 0
        %3278 = vmatmul.mubr.bf16.gmra.mrb[0].mxu0 %v2664
        %v3279 = vpop.f32.mrb[0].mxu0
        %v3280 = vadd.f32 %v2928, %v3279
        %v3281 = vpop.f32.mrb[0].mxu0
        %v3282 = vadd.f32 %v2932, %v3281
        %v3283 = vpop.f32.mrb[0].mxu0
        %v3284 = vadd.f32 %v2928, %v3283
        %v3285 = vpop.f32.mrb[0].mxu0
        %v3286 = vadd.f32 %v2932, %v3285
        %3287 = vmatprep.mubr.bf16.mxu0 0
        %3288 = vmatmul.mubr.bf16.gmra.mrb[0].mxu0 %v2665
        %v3289 = vpop.f32.mrb[0].mxu0
        %v3290 = vadd.f32 %v2928, %v3289
        %v3291 = vpop.f32.mrb[0].mxu0
        %v3292 = vadd.f32 %v2932, %v3291
        %v3293 = vpop.f32.mrb[0].mxu0
        %v3294 = vadd.f32 %v2928, %v3293
        %v3295 = vpop.f32.mrb[0].mxu0
        %v3296 = vadd.f32 %v2932, %v3295
        %3297 = vmatprep.mubr.bf16.mxu0 0
        %3298 = vmatmul.mubr.bf16.gmra.mrb[0].mxu0 %v2666
        %v3299 = vpop.f32.mrb[0].mxu0
        %v3300 = vadd.f32 %v2928, %v3299
        %v3301 = vpop.f32.mrb[0].mxu0
        %v3302 = vadd.f32 %v2932, %v3301
        %v3303 = vpop.f32.mrb[0].mxu0
        %v3304 = vadd.f32 %v2928, %v3303
        %v3305 = vpop.f32.mrb[0].mxu0
        %v3306 = vadd.f32 %v2932, %v3305
        %3307 = vdwg.mxu0
        %3308 = vmatprep.subr.bf16.mxu0 %v3102
        %3309 = vmatpush1.bf16.msra.mxu0 %v3101
        %3310 = vmatprep.subr.bf16.mxu0 %v3108
        %3311 = vmatpush1.bf16.msra.mxu0 %v3107
        %3312 = vmatprep.subr.bf16.mxu0 %v3114
        %3313 = vmatpush1.bf16.msra.mxu0 %v3113
        %3314 = vmatprep.subr.bf16.mxu0 %v3120
        %3315 = vmatpush1.bf16.msra.mxu0 %v3119
        %3316 = vmatprep.subr.bf16.mxu0 %v3126
        %3317 = vmatpush1.bf16.msra.mxu0 %v3125
        %3318 = vmatprep.subr.bf16.mxu0 %v3132
        %3319 = vmatpush1.bf16.msra.mxu0 %v3131
        %3320 = vmatprep.subr.bf16.mxu0 %v3138
        %3321 = vmatpush1.bf16.msra.mxu0 %v3137
        %3322 = vmatprep.subr.bf16.mxu0 %v3144
        %3323 = vmatpush1.bf16.msra.mxu0 %v3143
        %3324 = vmatprep.subr.bf16.mxu0 0
        %3325 = vmatpush1.bf16.msra.mxu0 0
        %3326 = vmatprep.subr.bf16.mxu0 0
        %3327 = vmatpush1.bf16.msra.mxu0 0
        %3328 = vmatprep.subr.bf16.mxu0 0
        %3329 = vmatpush1.bf16.msra.mxu0 0
        %3330 = vmatprep.subr.bf16.mxu0 0
        %3331 = vmatpush1.bf16.msra.mxu0 0
        %3332 = vmatprep.subr.bf16.mxu0 0
        %3333 = vmatpush1.bf16.msra.mxu0 0
        %3334 = vmatprep.subr.bf16.mxu0 0
        %3335 = vmatpush1.bf16.msra.mxu0 0
        %3336 = vmatprep.subr.bf16.mxu0 0
        %3337 = vmatpush1.bf16.msra.mxu0 0
        %3338 = vmatprep.subr.bf16.mxu0 0
        %3339 = vmatpush1.bf16.msra.mxu0 0
        %3340 = vmatprep.mubr.bf16.mxu0 0
        %3341 = vmatmul.mubr.bf16.gmra.mrb[0].mxu0 %v2659
        %v3342 = vpop.f32.mrb[0].mxu0
        %v3343 = vadd.f32 %v2936, %v3342
        %v3344 = vpop.f32.mrb[0].mxu0
        %v3345 = vadd.f32 %v2940, %v3344
        %v3346 = vpop.f32.mrb[0].mxu0
        %v3347 = vadd.f32 %v2936, %v3346
        %v3348 = vpop.f32.mrb[0].mxu0
        %v3349 = vadd.f32 %v2940, %v3348
        %3350 = vmatprep.mubr.bf16.mxu0 0
        %3351 = vmatmul.mubr.bf16.gmra.mrb[0].mxu0 %v2660
        %v3352 = vpop.f32.mrb[0].mxu0
        %v3353 = vadd.f32 %v2936, %v3352
        %v3354 = vpop.f32.mrb[0].mxu0
        %v3355 = vadd.f32 %v2940, %v3354
        %v3356 = vpop.f32.mrb[0].mxu0
        %v3357 = vadd.f32 %v2936, %v3356
        %v3358 = vpop.f32.mrb[0].mxu0
        %v3359 = vadd.f32 %v2940, %v3358
        %3360 = vmatprep.mubr.bf16.mxu0 0
        %3361 = vmatmul.mubr.bf16.gmra.mrb[0].mxu0 %v2661
        %v3362 = vpop.f32.mrb[0].mxu0
        %v3363 = vadd.f32 %v2936, %v3362
        %v3364 = vpop.f32.mrb[0].mxu0
        %v3365 = vadd.f32 %v2940, %v3364
        %v3366 = vpop.f32.mrb[0].mxu0
        %v3367 = vadd.f32 %v2936, %v3366
        %v3368 = vpop.f32.mrb[0].mxu0
        %v3369 = vadd.f32 %v2940, %v3368
        %3370 = vmatprep.mubr.bf16.mxu0 0
        %3371 = vmatmul.mubr.bf16.gmra.mrb[0].mxu0 %v2662
        %v3372 = vpop.f32.mrb[0].mxu0
        %v3373 = vadd.f32 %v2936, %v3372
        %v3374 = vpop.f32.mrb[0].mxu0
        %v3375 = vadd.f32 %v2940, %v3374
        %v3376 = vpop.f32.mrb[0].mxu0
        %v3377 = vadd.f32 %v2936, %v3376
        %v3378 = vpop.f32.mrb[0].mxu0
        %v3379 = vadd.f32 %v2940, %v3378
        %3380 = vmatprep.mubr.bf16.mxu0 0
        %3381 = vmatmul.mubr.bf16.gmra.mrb[0].mxu0 %v2663
        %v3382 = vpop.f32.mrb[0].mxu0
        %v3383 = vadd.f32 %v2936, %v3382
        %v3384 = vpop.f32.mrb[0].mxu0
        %v3385 = vadd.f32 %v2940, %v3384
        %v3386 = vpop.f32.mrb[0].mxu0
        %v3387 = vadd.f32 %v2936, %v3386
        %v3388 = vpop.f32.mrb[0].mxu0
        %v3389 = vadd.f32 %v2940, %v3388
        %3390 = vmatprep.mubr.bf16.mxu0 0
        %3391 = vmatmul.mubr.bf16.gmra.mrb[0].mxu0 %v2664
        %v3392 = vpop.f32.mrb[0].mxu0
        %v3393 = vadd.f32 %v2936, %v3392
        %v3394 = vpop.f32.mrb[0].mxu0
        %v3395 = vadd.f32 %v2940, %v3394
        %v3396 = vpop.f32.mrb[0].mxu0
        %v3397 = vadd.f32 %v2936, %v3396
        %v3398 = vpop.f32.mrb[0].mxu0
        %v3399 = vadd.f32 %v2940, %v3398
        %3400 = vmatprep.mubr.bf16.mxu0 0
        %3401 = vmatmul.mubr.bf16.gmra.mrb[0].mxu0 %v2665
        %v3402 = vpop.f32.mrb[0].mxu0
        %v3403 = vadd.f32 %v2936, %v3402
        %v3404 = vpop.f32.mrb[0].mxu0
        %v3405 = vadd.f32 %v2940, %v3404
        %v3406 = vpop.f32.mrb[0].mxu0
        %v3407 = vadd.f32 %v2936, %v3406
        %v3408 = vpop.f32.mrb[0].mxu0
        %v3409 = vadd.f32 %v2940, %v3408
        %3410 = vmatprep.mubr.bf16.mxu0 0
        %3411 = vmatmul.mubr.bf16.gmra.mrb[0].mxu0 %v2666
        %v3412 = vpop.f32.mrb[0].mxu0
        %v3413 = vadd.f32 %v2936, %v3412
        %v3414 = vpop.f32.mrb[0].mxu0
        %v3415 = vadd.f32 %v2940, %v3414
        %v3416 = vpop.f32.mrb[0].mxu0
        %v3417 = vadd.f32 %v2936, %v3416
        %v3418 = vpop.f32.mrb[0].mxu0
        %v3419 = vadd.f32 %v2940, %v3418
        %3420 = vdwg.mxu0
        %3421 = vmatprep.subr.bf16.mxu0 %v3104
        %3422 = vmatpush1.bf16.msra.mxu0 %v3103
        %3423 = vmatprep.subr.bf16.mxu0 %v3110
        %3424 = vmatpush1.bf16.msra.mxu0 %v3109
        %3425 = vmatprep.subr.bf16.mxu0 %v3116
        %3426 = vmatpush1.bf16.msra.mxu0 %v3115
        %3427 = vmatprep.subr.bf16.mxu0 %v3122
        %3428 = vmatpush1.bf16.msra.mxu0 %v3121
        %3429 = vmatprep.subr.bf16.mxu0 %v3128
        %3430 = vmatpush1.bf16.msra.mxu0 %v3127
        %3431 = vmatprep.subr.bf16.mxu0 %v3134
        %3432 = vmatpush1.bf16.msra.mxu0 %v3133
        %3433 = vmatprep.subr.bf16.mxu0 %v3140
        %3434 = vmatpush1.bf16.msra.mxu0 %v3139
        %3435 = vmatprep.subr.bf16.mxu0 %v3146
        %3436 = vmatpush1.bf16.msra.mxu0 %v3145
        %3437 = vmatprep.subr.bf16.mxu0 0
        %3438 = vmatpush1.bf16.msra.mxu0 0
        %3439 = vmatprep.subr.bf16.mxu0 0
        %3440 = vmatpush1.bf16.msra.mxu0 0
        %3441 = vmatprep.subr.bf16.mxu0 0
        %3442 = vmatpush1.bf16.msra.mxu0 0
        %3443 = vmatprep.subr.bf16.mxu0 0
        %3444 = vmatpush1.bf16.msra.mxu0 0
        %3445 = vmatprep.subr.bf16.mxu0 0
        %3446 = vmatpush1.bf16.msra.mxu0 0
        %3447 = vmatprep.subr.bf16.mxu0 0
        %3448 = vmatpush1.bf16.msra.mxu0 0
        %3449 = vmatprep.subr.bf16.mxu0 0
        %3450 = vmatpush1.bf16.msra.mxu0 0
        %3451 = vmatprep.subr.bf16.mxu0 0
        %3452 = vmatpush1.bf16.msra.mxu0 0
        %3453 = vmatprep.mubr.bf16.mxu0 0
        %3454 = vmatmul.mubr.bf16.gmra.mrb[0].mxu0 %v2659
        %v3455 = vpop.f32.mrb[0].mxu0
        %v3456 = vadd.f32 %v2944, %v3455
        %v3457 = vpop.f32.mrb[0].mxu0
        %v3458 = vadd.f32 %v2948, %v3457
        %v3459 = vpop.f32.mrb[0].mxu0
        %v3460 = vadd.f32 %v2944, %v3459
        %v3461 = vpop.f32.mrb[0].mxu0
        %v3462 = vadd.f32 %v2948, %v3461
        %3463 = vmatprep.mubr.bf16.mxu0 0
        %3464 = vmatmul.mubr.bf16.gmra.mrb[0].mxu0 %v2660
        %v3465 = vpop.f32.mrb[0].mxu0
        %v3466 = vadd.f32 %v2944, %v3465
        %v3467 = vpop.f32.mrb[0].mxu0
        %v3468 = vadd.f32 %v2948, %v3467
        %v3469 = vpop.f32.mrb[0].mxu0
        %v3470 = vadd.f32 %v2944, %v3469
        %v3471 = vpop.f32.mrb[0].mxu0
        %v3472 = vadd.f32 %v2948, %v3471
        %3473 = vmatprep.mubr.bf16.mxu0 0
        %3474 = vmatmul.mubr.bf16.gmra.mrb[0].mxu0 %v2661
        %v3475 = vpop.f32.mrb[0].mxu0
        %v3476 = vadd.f32 %v2944, %v3475
        %v3477 = vpop.f32.mrb[0].mxu0
        %v3478 = vadd.f32 %v2948, %v3477
        %v3479 = vpop.f32.mrb[0].mxu0
        %v3480 = vadd.f32 %v2944, %v3479
        %v3481 = vpop.f32.mrb[0].mxu0
        %v3482 = vadd.f32 %v2948, %v3481
        %3483 = vmatprep.mubr.bf16.mxu0 0
        %3484 = vmatmul.mubr.bf16.gmra.mrb[0].mxu0 %v2662
        %v3485 = vpop.f32.mrb[0].mxu0
        %v3486 = vadd.f32 %v2944, %v3485
        %v3487 = vpop.f32.mrb[0].mxu0
        %v3488 = vadd.f32 %v2948, %v3487
        %v3489 = vpop.f32.mrb[0].mxu0
        %v3490 = vadd.f32 %v2944, %v3489
        %v3491 = vpop.f32.mrb[0].mxu0
        %v3492 = vadd.f32 %v2948, %v3491
        %3493 = vmatprep.mubr.bf16.mxu0 0
        %3494 = vmatmul.mubr.bf16.gmra.mrb[0].mxu0 %v2663
        %v3495 = vpop.f32.mrb[0].mxu0
        %v3496 = vadd.f32 %v2944, %v3495
        %v3497 = vpop.f32.mrb[0].mxu0
        %v3498 = vadd.f32 %v2948, %v3497
        %v3499 = vpop.f32.mrb[0].mxu0
        %v3500 = vadd.f32 %v2944, %v3499
        %v3501 = vpop.f32.mrb[0].mxu0
        %v3502 = vadd.f32 %v2948, %v3501
        %3503 = vmatprep.mubr.bf16.mxu0 0
        %3504 = vmatmul.mubr.bf16.gmra.mrb[0].mxu0 %v2664
        %v3505 = vpop.f32.mrb[0].mxu0
        %v3506 = vadd.f32 %v2944, %v3505
        %v3507 = vpop.f32.mrb[0].mxu0
        %v3508 = vadd.f32 %v2948, %v3507
        %v3509 = vpop.f32.mrb[0].mxu0
        %v3510 = vadd.f32 %v2944, %v3509
        %v3511 = vpop.f32.mrb[0].mxu0
        %v3512 = vadd.f32 %v2948, %v3511
        %3513 = vmatprep.mubr.bf16.mxu0 0
        %3514 = vmatmul.mubr.bf16.gmra.mrb[0].mxu0 %v2665
        %v3515 = vpop.f32.mrb[0].mxu0
        %v3516 = vadd.f32 %v2944, %v3515
        %v3517 = vpop.f32.mrb[0].mxu0
        %v3518 = vadd.f32 %v2948, %v3517
        %v3519 = vpop.f32.mrb[0].mxu0
        %v3520 = vadd.f32 %v2944, %v3519
        %v3521 = vpop.f32.mrb[0].mxu0
        %v3522 = vadd.f32 %v2948, %v3521
        %3523 = vmatprep.mubr.bf16.mxu0 0
        %3524 = vmatmul.mubr.bf16.gmra.mrb[0].mxu0 %v2666
        %v3525 = vpop.f32.mrb[0].mxu0
        %v3526 = vadd.f32 %v2944, %v3525
        %v3527 = vpop.f32.mrb[0].mxu0
        %v3528 = vadd.f32 %v2948, %v3527
        %v3529 = vpop.f32.mrb[0].mxu0
        %v3530 = vadd.f32 %v2944, %v3529
        %v3531 = vpop.f32.mrb[0].mxu0
        %v3532 = vadd.f32 %v2948, %v3531
        %3533 = vdwg.mxu0
        %3534 = vst [vmem:[%s513] sm:$0xff] %v3230
        %3535 = vst [vmem:[%s513 + $0x8] sm:$0xff] %v3232
        %3536 = vst [vmem:[%s513 + $0x10] sm:$0xff] %v3343
        %3537 = vst [vmem:[%s513 + $0x18] sm:$0xff] %v3345
        %3538 = vst [vmem:[%s513 + $0x20] sm:$0xff] %v3456
        %3539 = vst [vmem:[%s513 + $0x28] sm:$0xff] %v3458
        %3540 = vst [vmem:[%s513 + $0x30] sm:$0xff] %v3234
        %3541 = vst [vmem:[%s513 + $0x38] sm:$0xff] %v3236
        %3542 = vst [vmem:[%s513 + $0x40] sm:$0xff] %v3347
        %3543 = vst [vmem:[%s513 + $0x48] sm:$0xff] %v3349
        %3544 = vst [vmem:[%s513 + $0x50] sm:$0xff] %v3460
        %3545 = vst [vmem:[%s513 + $0x58] sm:$0xff] %v3462
        %3546 = vst [vmem:[%s513 + $0x60] sm:$0xff] %v3240
        %3547 = vst [vmem:[%s513 + $0x68] sm:$0xff] %v3242
        %3548 = vst [vmem:[%s513 + $0x70] sm:$0xff] %v3353
        %3549 = vst [vmem:[%s513 + $0x78] sm:$0xff] %v3355
        %3550 = vst [vmem:[%s513 + $0x80] sm:$0xff] %v3466
        %3551 = vst [vmem:[%s513 + $0x88] sm:$0xff] %v3468
        %3552 = vst [vmem:[%s513 + $0x90] sm:$0xff] %v3244
        %3553 = vst [vmem:[%s513 + $0x98] sm:$0xff] %v3246
        %3554 = vst [vmem:[%s513 + $0xa0] sm:$0xff] %v3357
        %3555 = vst [vmem:[%s513 + $0xa8] sm:$0xff] %v3359
        %3556 = vst [vmem:[%s513 + $0xb0] sm:$0xff] %v3470
        %3557 = vst [vmem:[%s513 + $0xb8] sm:$0xff] %v3472
        %3558 = vst [vmem:[%s513 + $0xc0] sm:$0xff] %v3250
        %3559 = vst [vmem:[%s513 + $0xc8] sm:$0xff] %v3252
        %3560 = vst [vmem:[%s513 + $0xd0] sm:$0xff] %v3363
        %3561 = vst [vmem:[%s513 + $0xd8] sm:$0xff] %v3365
        %3562 = vst [vmem:[%s513 + $0xe0] sm:$0xff] %v3476
        %3563 = vst [vmem:[%s513 + $0xe8] sm:$0xff] %v3478
        %3564 = vst [vmem:[%s513 + $0xf0] sm:$0xff] %v3254
        %3565 = vst [vmem:[%s513 + $0xf8] sm:$0xff] %v3256
        %3566 = vst [vmem:[%s513 + $0x100] sm:$0xff] %v3367
        %3567 = vst [vmem:[%s513 + $0x108] sm:$0xff] %v3369
        %3568 = vst [vmem:[%s513 + $0x110] sm:$0xff] %v3480
        %3569 = vst [vmem:[%s513 + $0x118] sm:$0xff] %v3482
        %3570 = vst [vmem:[%s513 + $0x120] sm:$0xff] %v3260
        %3571 = vst [vmem:[%s513 + $0x128] sm:$0xff] %v3262
        %3572 = vst [vmem:[%s513 + $0x130] sm:$0xff] %v3373
        %3573 = vst [vmem:[%s513 + $0x138] sm:$0xff] %v3375
        %3574 = vst [vmem:[%s513 + $0x140] sm:$0xff] %v3486
        %3575 = vst [vmem:[%s513 + $0x148] sm:$0xff] %v3488
        %3576 = vst [vmem:[%s513 + $0x150] sm:$0xff] %v3264
        %3577 = vst [vmem:[%s513 + $0x158] sm:$0xff] %v3266
        %3578 = vst [vmem:[%s513 + $0x160] sm:$0xff] %v3377
        %3579 = vst [vmem:[%s513 + $0x168] sm:$0xff] %v3379
        %3580 = vst [vmem:[%s513 + $0x170] sm:$0xff] %v3490
        %3581 = vst [vmem:[%s513 + $0x178] sm:$0xff] %v3492
        %3582 = vst [vmem:[%s513 + $0x180] sm:$0xff] %v3270
        %3583 = vst [vmem:[%s513 + $0x188] sm:$0xff] %v3272
        %3584 = vst [vmem:[%s513 + $0x190] sm:$0xff] %v3383
        %3585 = vst [vmem:[%s513 + $0x198] sm:$0xff] %v3385
        %3586 = vst [vmem:[%s513 + $0x1a0] sm:$0xff] %v3496
        %3587 = vst [vmem:[%s513 + $0x1a8] sm:$0xff] %v3498
        %3588 = vst [vmem:[%s513 + $0x1b0] sm:$0xff] %v3274
        %3589 = vst [vmem:[%s513 + $0x1b8] sm:$0xff] %v3276
        %3590 = vst [vmem:[%s513 + $0x1c0] sm:$0xff] %v3387
        %3591 = vst [vmem:[%s513 + $0x1c8] sm:$0xff] %v3389
        %3592 = vst [vmem:[%s513 + $0x1d0] sm:$0xff] %v3500
        %3593 = vst [vmem:[%s513 + $0x1d8] sm:$0xff] %v3502
        %3594 = vst [vmem:[%s513 + $0x1e0] sm:$0xff] %v3280
        %3595 = vst [vmem:[%s513 + $0x1e8] sm:$0xff] %v3282
        %3596 = vst [vmem:[%s513 + $0x1f0] sm:$0xff] %v3393
        %3597 = vst [vmem:[%s513 + $0x1f8] sm:$0xff] %v3395
        %3598 = vst [vmem:[%s513 + $0x200] sm:$0xff] %v3506
        %3599 = vst [vmem:[%s513 + $0x208] sm:$0xff] %v3508
        %3600 = vst [vmem:[%s513 + $0x210] sm:$0xff] %v3284
        %3601 = vst [vmem:[%s513 + $0x218] sm:$0xff] %v3286
        %3602 = vst [vmem:[%s513 + $0x220] sm:$0xff] %v3397
        %3603 = vst [vmem:[%s513 + $0x228] sm:$0xff] %v3399
        %3604 = vst [vmem:[%s513 + $0x230] sm:$0xff] %v3510
        %3605 = vst [vmem:[%s513 + $0x238] sm:$0xff] %v3512
        %3606 = vst [vmem:[%s513 + $0x240] sm:$0xff] %v3290
        %3607 = vst [vmem:[%s513 + $0x248] sm:$0xff] %v3292
        %3608 = vst [vmem:[%s513 + $0x250] sm:$0xff] %v3403
        %3609 = vst [vmem:[%s513 + $0x258] sm:$0xff] %v3405
        %3610 = vst [vmem:[%s513 + $0x260] sm:$0xff] %v3516
        %3611 = vst [vmem:[%s513 + $0x268] sm:$0xff] %v3518
        %3612 = vst [vmem:[%s513 + $0x270] sm:$0xff] %v3294
        %3613 = vst [vmem:[%s513 + $0x278] sm:$0xff] %v3296
        %3614 = vst [vmem:[%s513 + $0x280] sm:$0xff] %v3407
        %3615 = vst [vmem:[%s513 + $0x288] sm:$0xff] %v3409
        %3616 = vst [vmem:[%s513 + $0x290] sm:$0xff] %v3520
        %3617 = vst [vmem:[%s513 + $0x298] sm:$0xff] %v3522
        %3618 = vst [vmem:[%s513 + $0x2a0] sm:$0xff] %v3300
        %3619 = vst [vmem:[%s513 + $0x2a8] sm:$0xff] %v3302
        %3620 = vst [vmem:[%s513 + $0x2b0] sm:$0xff] %v3413
        %3621 = vst [vmem:[%s513 + $0x2b8] sm:$0xff] %v3415
        %3622 = vst [vmem:[%s513 + $0x2c0] sm:$0xff] %v3526
        %3623 = vst [vmem:[%s513 + $0x2c8] sm:$0xff] %v3528
        %3624 = vst [vmem:[%s513 + $0x2d0] sm:$0xff] %v3304
        %3625 = vst [vmem:[%s513 + $0x2d8] sm:$0xff] %v3306
        %3626 = vst [vmem:[%s513 + $0x2e0] sm:$0xff] %v3417
        %3627 = vst [vmem:[%s513 + $0x2e8] sm:$0xff] %v3419
        %3628 = vst [vmem:[%s513 + $0x2f0] sm:$0xff] %v3530
        %3629 = vst [vmem:[%s513 + $0x2f8] sm:$0xff] %v3532
        %s3630 = sand.u32 %s265, 1
        %s3631 = scalar_lea.sflag [#allocation4], %s3630
        %s3632 = sand.u32 %s265, 1
        %s3633 = smul.addr %s3632, 128
        %s3634 = scalar_lea.vmem [#allocation13], %s3633
        %s3635 = sand.u32 %s291, 1
        %s3636 = scalar_lea.sflag [#allocation15], %s3635
        %s3637 = sand.u32 %s291, 1
        %s3638 = smul.addr %s3637, 768
        %s3639 = scalar_lea.vmem [#allocation14], %s3638
        // Predicated region
        $region85: #{tpu_custom_call.1} parent=59 // pred_check
          %p3640 = pneg %p275
        $region86: #{tpu_custom_call.1} parent=59 // pred_check_branch
          %3642 = sbr.rel (%p3640) target = $region88
        $region87: #{tpu_custom_call.1} parent=59 // pred_region
          %s3643 = smul.u32 16, %s37
          %s3645 = ssub.s32 2048, 2048
          %3646 = vsyncadd %s3631, %s3645
          %s3647 = smul.addr %s3643, 128
          %s3648 = scalar_lea.hbm %s10, %s3647
          %s3649 = sshll.u32 %s3634, 4
          %s3650 = int_to_ptr.vmem [resolvable:$true] %s3649
          %3655 = dma.vmem_to_hbm [thread:$0]  %s3650, 2048, %s3648, %s3631, 128, 128, 8
        $region88: #{tpu_custom_call.1} parent=59 // pred_fallthru
          _
        // Predicated region
        $region89: #{tpu_custom_call.1} parent=59 // pred_check
          %p3656 = pneg %p301
        $region90: #{tpu_custom_call.1} parent=59 // pred_check_branch
          %3658 = sbr.rel (%p3656) target = $region92
        $region91: #{tpu_custom_call.1} parent=59 // pred_region
          %s3659 = smul.u32 16, %s37
          %s3661 = ssub.s32 12288, 12288
          %3662 = vsyncadd %s3636, %s3661
          %s3663 = smul.addr %s3659, 6
          %s3664 = smul.addr %s3663, 128
          %s3665 = scalar_lea.hbm %s11, %s3664
          %s3666 = sshll.u32 %s3639, 4
          %s3667 = int_to_ptr.vmem [resolvable:$true] %s3666
          %3672 = dma.vmem_to_hbm [thread:$0]  %s3667, 12288, %s3665, %s3636, 768, 768, 48
        $region92: #{tpu_custom_call.1} parent=59 // pred_fallthru
          _
      $region60: #{tpu_custom_call.1} parent=5 // pred_fallthru
        _
      %p3673 = scmp.le.s32.totalorder 2, %s32
      // Predicated region
      $region93: #{tpu_custom_call.1} parent=5 // pred_check
        %p3674 = pneg %p3673
      $region94: #{tpu_custom_call.1} parent=5 // pred_check_branch
        %3676 = sbr.rel (%p3674) target = $region96
      $region95: #{tpu_custom_call.1} parent=5 // pred_region
        %s3677 = ssub.s32 %s32, 2
        // Predicated region
        $region97: #{tpu_custom_call.1} parent=95 // pred_check
          %p3678 = pneg %p281
        $region98: #{tpu_custom_call.1} parent=95 // pred_check_branch
          %3680 = sbr.rel (%p3678) target = $region100
        $region99: #{tpu_custom_call.1} parent=95 // pred_region
          %s3681 = sand.u32 %s266, 1
          %s3682 = scalar_lea.sflag [#allocation4], %s3681
          %s3683 = sand.u32 %s266, 1
          %s3684 = smul.addr %s3683, 128
          %s3685 = scalar_lea.vmem [#allocation13], %s3684
          %3686 = dma.done %s3682, 2048
        $region100: #{tpu_custom_call.1} parent=95 // pred_fallthru
          _
        // Predicated region
        $region101: #{tpu_custom_call.1} parent=95 // pred_check
          %p3687 = pneg %p307
        $region102: #{tpu_custom_call.1} parent=95 // pred_check_branch
          %3689 = sbr.rel (%p3687) target = $region104
        $region103: #{tpu_custom_call.1} parent=95 // pred_region
          %s3690 = sand.u32 %s292, 1
          %s3691 = scalar_lea.sflag [#allocation15], %s3690
          %s3692 = sand.u32 %s292, 1
          %s3693 = smul.addr %s3692, 768
          %s3694 = scalar_lea.vmem [#allocation14], %s3693
          %3695 = dma.done %s3691, 12288
        $region104: #{tpu_custom_call.1} parent=95 // pred_fallthru
          _
      $region96: #{tpu_custom_call.1} parent=5 // pred_fallthru
        _
    $region6: #{tpu_custom_call.1} parent=1 // loop_footer
      %s36 = sadd.s32 1, %s32
    $region7: #{tpu_custom_call.1} parent=1 // loop_footer_branch
      %31 = sbr.rel target = $region3
    $region8: #{tpu_custom_call.1} parent=1 // loop_exit
      _
    %3696 = vsyncpa [#allocation3], 1
    %s3697 = scalar_lea.sflag [#allocation3], 1
    %3698 = vsyncpa %s3697, 1
    %3699 = vsyncpa [#allocation6], 1
    %s3700 = scalar_lea.sflag [#allocation6], 1
    %3701 = vsyncpa %s3700, 1
    %3702 = vsyncpa [#allocation9], 1
    %3703 = vsyncpa [#allocation12], 1
    %3704 = vsyncpa [#allocation4], 1
    %s3705 = scalar_lea.sflag [#allocation4], 1
    %3706 = vsyncpa %s3705, 1
    %3707 = vsyncpa [#allocation15], 1
    %s3708 = scalar_lea.sflag [#allocation15], 1
    %3709 = vsyncpa %s3708, 1

</llo_original>
